<compile_context>
chip_gen: v7x
topology: tpu7x:2x2x1
jax: 0.10.0
libtpu: 0.0.40
codegen_flags: <defaults>
</compile_context>

<pallas_src>
from functools import partial

import jax
import jax.numpy as jnp
from jax import lax
from jax.experimental import pallas as pl
from jax.experimental.pallas import tpu as pltpu


# --------------------------------------------------------------------------
# Kernel: one LSTM layer per grid step, activations resident in VMEM scratch
# --------------------------------------------------------------------------
def _lstm_stack_kernel(x_ref, h0_ref, c0_ref, w_ih_ref, w_hh_ref, b_ref,
                       out_ref, hT_ref, xp_ref, seq_ref,
                       *, hidden, seq_len, batch, in_size):
    """Grid: (num_layers,), "arbitrary" (layers are sequential).

    Block views:
      x_ref    (B, T, Din)    layer-0 input, batch-first (resident, index 0)
      h0_ref   (1, B, H)      this layer's initial hidden state
      c0_ref   (1, B, H)      this layer's initial cell state
      w_ih_ref (1, Dmax, 4H)  this layer's input->gate weights (zero-row pad)
      w_hh_ref (1, H, 4H)     this layer's hidden->gate weights
      b_ref    (1, 1, 4H)     this layer's bias (b_ih + b_hh)
      out_ref  (B, T, H)      final output, batch-first (written at last layer)
      hT_ref   (1, B, H)      this layer's final hidden state
      xp_ref   (T, B, 4H)     scratch: hoisted input projection (time-major)
      seq_ref  (T, B, H)      scratch: this layer's hidden sequence (time-major)

    i/f/o gate columns of W_ih / W_hh / b are pre-scaled by 0.5 host-side, so
    a single tanh over the whole (B, 4H) gate tensor yields sigmoid via
    0.5 * (1 + tanh) for i/f/o and a plain tanh for g.
    """
    H, T, B, Din = hidden, seq_len, batch, in_size
    layer = pl.program_id(0)
    last_layer = pl.num_programs(0) - 1

    w_hh = w_hh_ref[0]                       # (H, 4H)
    bias = b_ref[0]                          # (1, 4H)

    # ---- Hoisted input projection: one MXU matmul per batch row per layer,
    # ---- bias folded in once (not T times).  All reads of seq_ref complete
    # ---- before the time loop below overwrites it.
    @pl.when(layer == 0)
    def _():
        w_ih = w_ih_ref[0][:Din, :]          # real rows of layer-0 W_ih
        for b in range(B):                   # static, small B
            xp_ref[:, b, :] = jnp.dot(
                x_ref[b], w_ih, preferred_element_type=jnp.float32) + bias

    @pl.when(layer > 0)
    def _():
        w_ih = w_ih_ref[0][:H, :]            # (H, 4H)
        for b in range(B):
            xp_ref[:, b, :] = jnp.dot(
                seq_ref[:, b, :], w_ih,
                preferred_element_type=jnp.float32) + bias

    # ---- Time recurrence (serial critical path). ----
    def step(t, carry):
        h, c = carry
        gates = xp_ref[t] + jnp.dot(h, w_hh,
                                    preferred_element_type=jnp.float32)  # (B,4H)
        tg = jnp.tanh(gates)                 # single EUP pass over the gates
        i_g = 0.5 * (1.0 + tg[:, 0 * H:1 * H])
        f_g = 0.5 * (1.0 + tg[:, 1 * H:2 * H])
        g_g = tg[:, 2 * H:3 * H]
        o_g = 0.5 * (1.0 + tg[:, 3 * H:4 * H])
        c = f_g * c + i_g * g_g
        h = o_g * jnp.tanh(c)
        seq_ref[t] = h                       # leading-axis, tile-aligned store
        return h, c

    h, _c = lax.fori_loop(0, T, step, (h0_ref[0], c0_ref[0]), unroll=True)

    hT_ref[0] = h

    # ---- Last layer: emit the batch-first output from the time-major VMEM
    # ---- sequence (one small static copy; no host-side transpose/reshape).
    @pl.when(layer == last_layer)
    def _():
        for b in range(B):
            out_ref[b] = seq_ref[:, b, :]


# --------------------------------------------------------------------------
# Host wrapper
# --------------------------------------------------------------------------
def lstm_forward(kparams, input_seq, state_key, *, hidden, layers,
                 gates_prescaled=False):
    """Equivalent of `LSTM.forward(input_seq, modle_num=1)`.

    kparams MUST come from `prepare_kernel_params` (stacked weights with the
    0.5 sigmoid prescale folded into the i/f/o columns); pass
    gates_prescaled=True to acknowledge that contract.

    input_seq: (B, T, input_size) float32 (batch_first, like PyTorch)
    returns:   output (B, T, hidden), h_n (layers, B, hidden)
    """
    if not gates_prescaled:
        raise ValueError("lstm_forward requires params produced by "
                         "prepare_kernel_params (pass gates_prescaled=True).")

    B, T, Din = input_seq.shape
    H, L = hidden, layers
    w_ih = kparams["w_ih"]                   # (L, Dmax, 4H)
    w_hh = kparams["w_hh"]                   # (L, H, 4H)
    bias = kparams["b"]                      # (L, 1, 4H)
    Dmax = w_ih.shape[1]

    # PyTorch draws h_0 / c_0 from torch.randn each call; done deterministically.
    kh, kc = jax.random.split(state_key)
    h0 = jax.random.normal(kh, (L, B, H), jnp.float32)
    c0 = jax.random.normal(kc, (L, B, H), jnp.float32)

    kernel = partial(_lstm_stack_kernel,
                     hidden=H, seq_len=T, batch=B, in_size=Din)

    out, h_final = pl.pallas_call(
        kernel,
        grid=(L,),
        out_shape=(jax.ShapeDtypeStruct((B, T, H), jnp.float32),
                   jax.ShapeDtypeStruct((L, B, H), jnp.float32)),
        in_specs=[
            pl.BlockSpec((B, T, Din), lambda l: (0, 0, 0)),       # x (resident)
            pl.BlockSpec((1, B, H), lambda l: (l, 0, 0)),         # h0[l]
            pl.BlockSpec((1, B, H), lambda l: (l, 0, 0)),         # c0[l]
            pl.BlockSpec((1, Dmax, 4 * H), lambda l: (l, 0, 0)),  # W_ih[l]
            pl.BlockSpec((1, H, 4 * H), lambda l: (l, 0, 0)),     # W_hh[l]
            pl.BlockSpec((1, 1, 4 * H), lambda l: (l, 0, 0)),     # b[l]
        ],
        out_specs=(
            pl.BlockSpec((B, T, H), lambda l: (0, 0, 0)),         # output
            pl.BlockSpec((1, B, H), lambda l: (l, 0, 0)),         # h_n[l]
        ),
        scratch_shapes=[
            pltpu.VMEM((T, B, 4 * H), jnp.float32),   # hoisted projection
            pltpu.VMEM((T, B, H), jnp.float32),       # inter-layer activations
        ],
        compiler_params=pltpu.CompilerParams(
            dimension_semantics=("arbitrary",),       # layers are sequential
            vmem_limit_bytes=32 * 1024 * 1024),
    )(input_seq, h0, c0, w_ih, w_hh, bias)

    return out, h_final


# --------------------------------------------------------------------------
# Parameters
# --------------------------------------------------------------------------
def init_params(key, input_size, hidden, layers):
    """PyTorch-equivalent nn.LSTM params, pre-transposed for x @ W layout."""
    params = {"lstm": []}
    scale = float(hidden) ** -0.5
    for l in range(layers):
        d_in = input_size if l == 0 else hidden
        key, k1, k2, k3, k4 = jax.random.split(key, 5)
        w_ih = jax.random.uniform(k1, (4 * hidden, d_in), jnp.float32, -scale, scale)
        w_hh = jax.random.uniform(k2, (4 * hidden, hidden), jnp.float32, -scale, scale)
        b_ih = jax.random.uniform(k3, (4 * hidden,), jnp.float32, -scale, scale)
        b_hh = jax.random.uniform(k4, (4 * hidden,), jnp.float32, -scale, scale)
        params["lstm"].append({
            "w_ih": w_ih.T,                  # (d_in, 4H), gate order [i, f, g, o]
            "w_hh": w_hh.T,                  # (H, 4H)
            "b": (b_ih + b_hh)[None, :],     # (1, 4H)
        })
    return params


def prepare_kernel_params(params, hidden):
    """Stack per-layer params for the layer-grid kernel.

    Folds the 0.5 sigmoid prescale into the i/f/o gate columns (g stays at 1)
    and zero-row-pads layer-0 W_ih to Dmax = max(input_size, hidden) so all
    layers share one (L, Dmax, 4H) stacked array (the kernel statically
    slices the real rows).
    """
    H = hidden
    lstm = params["lstm"]
    col_scale = jnp.concatenate([
        jnp.full((2 * H,), 0.5, jnp.float32),   # i, f  (sigmoid via tanh)
        jnp.ones((H,), jnp.float32),            # g     (plain tanh)
        jnp.full((H,), 0.5, jnp.float32),       # o
    ])[None, :]
    d_max = max(p["w_ih"].shape[0] for p in lstm)
    w_ih_l, w_hh_l, b_l = [], [], []
    for p in lstm:
        wi = p["w_ih"] * col_scale
        pad = d_max - wi.shape[0]
        if pad:
            wi = jnp.concatenate(
                [wi, jnp.zeros((pad, 4 * H), jnp.float32)], axis=0)
        w_ih_l.append(wi)
        w_hh_l.append(p["w_hh"] * col_scale)
        b_l.append(p["b"] * col_scale)
    return {"w_ih": jnp.stack(w_ih_l),        # (L, Dmax, 4H)
            "w_hh": jnp.stack(w_hh_l),        # (L, H, 4H)
            "b": jnp.stack(b_l)}              # (L, 1, 4H)


# --------------------------------------------------------------------------
# Pure-JAX reference (standard LSTM equations, unscaled per-layer params)
# --------------------------------------------------------------------------
def _reference(params, input_seq, hidden, layers, state_key):
    B, T, _ = input_seq.shape
    H = hidden
    kh, kc = jax.random.split(state_key)
    h0 = jax.random.normal(kh, (layers, B, H), jnp.float32)
    c0 = jax.random.normal(kc, (layers, B, H), jnp.float32)
    x = jnp.transpose(input_seq, (1, 0, 2))
    h_fin = []
    for l in range(layers):
        p = params["lstm"][l]
        h, c = h0[l], c0[l]
        outs = []
        for t in range(T):
            gates = x[t] @ p["w_ih"] + h @ p["w_hh"] + p["b"]
            i = jax.nn.sigmoid(gates[:, 0:H])
            f = jax.nn.sigmoid(gates[:, H:2 * H])
            g = jnp.tanh(gates[:, 2 * H:3 * H])
            o = jax.nn.sigmoid(gates[:, 3 * H:4 * H])
            c = f * c + i * g
            h = o * jnp.tanh(c)
            outs.append(h)
        x = jnp.stack(outs, axis=0)
        h_fin.append(h)
    return jnp.transpose(x, (1, 0, 2)), jnp.stack(h_fin, axis=0)


# --------------------------------------------------------------------------
if __name__ == "__main__":
    # HIDDEN is a multiple of 128 so the four gate blocks and the per-step
    # h store are lane-tile aligned (perf review: lane-dense gates/stores).
    # The kernel works for any H; small, non-128-multiple H pays relayouts.
    B, T, INPUT, HIDDEN, LAYERS = 2, 8, 16, 128, 2

    root = jax.random.PRNGKey(0)
    k_param, k_data, k_state = jax.random.split(root, 3)

    params = init_params(k_param, INPUT, HIDDEN, LAYERS)
    kernel_params = prepare_kernel_params(params, HIDDEN)
    input_seq = jax.random.normal(k_data, (B, T, INPUT), jnp.float32)

    fwd = jax.jit(partial(lstm_forward, hidden=HIDDEN, layers=LAYERS,
                          gates_prescaled=True))
    output, h_n = fwd(kernel_params, input_seq, k_state)
    output, h_n = jax.block_until_ready((output, h_n))

    ref_out, ref_h = _reference(params, input_seq, HIDDEN, LAYERS, k_state)

    assert output.shape == (B, T, HIDDEN)
    assert h_n.shape == (LAYERS, B, HIDDEN)
    assert jnp.max(jnp.abs(output - ref_out)) < 1e-3, "output mismatch"
    assert jnp.max(jnp.abs(h_n - ref_h)) < 1e-3, "h_n mismatch"

    print("KERNEL_OK")
</pallas_src>

<mosaic_0001>
module attributes {stable_mosaic.version = 11 : i64} {
  func.func @_lstm_stack_kernel(%arg0: i32, %arg1: memref<2x8x16xf32, #tpu.memory_space<vmem>>, %arg2: memref<1x2x128xf32, #tpu.memory_space<vmem>>, %arg3: memref<1x2x128xf32, #tpu.memory_space<vmem>>, %arg4: memref<1x128x512xf32, #tpu.memory_space<vmem>>, %arg5: memref<1x128x512xf32, #tpu.memory_space<vmem>>, %arg6: memref<1x1x512xf32, #tpu.memory_space<vmem>>, %arg7: memref<2x8x128xf32, #tpu.memory_space<vmem>>, %arg8: memref<1x2x128xf32, #tpu.memory_space<vmem>>, %arg9: memref<8x2x512xf32, #tpu.memory_space<vmem>>, %arg10: memref<8x2x128xf32, #tpu.memory_space<vmem>>) attributes {dimension_semantics = [#tpu.dimension_semantics<arbitrary>], iteration_bounds = array<i64: 2>, scalar_prefetch = 0 : i64, scratch_operands = 2 : i64, tpu.core_type = #tpu.core_type<tc>, window_params = [{pipeline_mode = #tpu.pipeline_mode<synchronous>, transform_indices = @transform_0, window_bounds = array<i64: 2, 8, 16>}, {transform_indices = @transform_1, window_bounds = array<i64: 1, 2, 128>}, {transform_indices = @transform_2, window_bounds = array<i64: 1, 2, 128>}, {transform_indices = @transform_3, window_bounds = array<i64: 1, 128, 512>}, {transform_indices = @transform_4, window_bounds = array<i64: 1, 128, 512>}, {transform_indices = @transform_5, window_bounds = array<i64: 1, 1, 512>}, {pipeline_mode = #tpu.pipeline_mode<synchronous>, transform_indices = @transform_6, window_bounds = array<i64: 2, 8, 128>}, {transform_indices = @transform_7, window_bounds = array<i64: 1, 2, 128>}]} {
    %c0 = arith.constant 0 : index
    %c0_0 = arith.constant 0 : index
    %c0_1 = arith.constant 0 : index
    %0 = vector.load %arg5[%c0, %c0_0, %c0_1] : memref<1x128x512xf32, #tpu.memory_space<vmem>>, vector<1x128x512xf32>
    %1 = vector.shape_cast %0 : vector<1x128x512xf32> to vector<128x512xf32>
    %c0_2 = arith.constant 0 : index
    %c0_3 = arith.constant 0 : index
    %c0_4 = arith.constant 0 : index
    %2 = vector.load %arg6[%c0_2, %c0_3, %c0_4] : memref<1x1x512xf32, #tpu.memory_space<vmem>>, vector<1x1x512xf32>
    %3 = vector.shape_cast %2 : vector<1x1x512xf32> to vector<1x512xf32>
    %c0_i32 = arith.constant 0 : i32
    %4 = arith.cmpi eq, %arg0, %c0_i32 : i32
    %5 = arith.extui %4 : i1 to i32
    %c0_i32_5 = arith.constant 0 : i32
    %6 = arith.cmpi ne, %5, %c0_i32_5 : i32
    scf.if %6 {
      %c0_107 = arith.constant 0 : index
      %c0_108 = arith.constant 0 : index
      %c0_109 = arith.constant 0 : index
      %268 = vector.load %arg4[%c0_107, %c0_108, %c0_109] : memref<1x128x512xf32, #tpu.memory_space<vmem>>, vector<1x128x512xf32>
      %269 = vector.shape_cast %268 : vector<1x128x512xf32> to vector<128x512xf32>
      %270 = vector.extract_strided_slice %269 {offsets = [0, 0], sizes = [16, 512], strides = [1, 1]} : vector<128x512xf32> to vector<16x512xf32>
      %c0_110 = arith.constant 0 : index
      %c0_111 = arith.constant 0 : index
      %c0_112 = arith.constant 0 : index
      %271 = vector.load %arg1[%c0_110, %c0_111, %c0_112] : memref<2x8x16xf32, #tpu.memory_space<vmem>>, vector<1x8x16xf32>
      %272 = vector.shape_cast %271 : vector<1x8x16xf32> to vector<8x16xf32>
      %cst_113 = arith.constant dense<0.000000e+00> : vector<8x512xf32>
      %273 = tpu.matmul %272, %270, %cst_113 {dimension_numbers = #tpu.dot_dimension_numbers<[1], [0], [0], [1], [0, 0, 1, 1], [], []>} : vector<8x16xf32>, vector<16x512xf32>, vector<8x512xf32> -> vector<8x512xf32>
      %274 = vector.broadcast %3 : vector<1x512xf32> to vector<8x512xf32>
      %275 = arith.addf %273, %274 : vector<8x512xf32>
      %c0_114 = arith.constant 0 : index
      %c0_115 = arith.constant 0 : index
      %c0_116 = arith.constant 0 : index
      %276 = vector.load %arg9[%c0_114, %c0_115, %c0_116] : memref<8x2x512xf32, #tpu.memory_space<vmem>>, vector<8x1x512xf32>
      %277 = vector.shape_cast %276 : vector<8x1x512xf32> to vector<8x512xf32>
      %278 = vector.shape_cast %275 : vector<8x512xf32> to vector<8x1x512xf32>
      tpu.vector_store %arg9[%c0_114, %c0_115, %c0_116], %278 {strides = array<i32>} : memref<8x2x512xf32, #tpu.memory_space<vmem>>, vector<8x1x512xf32>,
      %c1 = arith.constant 1 : index
      %c0_117 = arith.constant 0 : index
      %c0_118 = arith.constant 0 : index
      %279 = vector.load %arg1[%c1, %c0_117, %c0_118] : memref<2x8x16xf32, #tpu.memory_space<vmem>>, vector<1x8x16xf32>
      %280 = vector.shape_cast %279 : vector<1x8x16xf32> to vector<8x16xf32>
      %cst_119 = arith.constant dense<0.000000e+00> : vector<8x512xf32>
      %281 = tpu.matmul %280, %270, %cst_119 {dimension_numbers = #tpu.dot_dimension_numbers<[1], [0], [0], [1], [0, 0, 1, 1], [], []>} : vector<8x16xf32>, vector<16x512xf32>, vector<8x512xf32> -> vector<8x512xf32>
      %282 = vector.broadcast %3 : vector<1x512xf32> to vector<8x512xf32>
      %283 = arith.addf %281, %282 : vector<8x512xf32>
      %c0_120 = arith.constant 0 : index
      %c1_121 = arith.constant 1 : index
      %c0_122 = arith.constant 0 : index
      %284 = vector.load %arg9[%c0_120, %c1_121, %c0_122] : memref<8x2x512xf32, #tpu.memory_space<vmem>>, vector<8x1x512xf32>
      %285 = vector.shape_cast %284 : vector<8x1x512xf32> to vector<8x512xf32>
      %286 = vector.shape_cast %283 : vector<8x512xf32> to vector<8x1x512xf32>
      tpu.vector_store %arg9[%c0_120, %c1_121, %c0_122], %286 {strides = array<i32>} : memref<8x2x512xf32, #tpu.memory_space<vmem>>, vector<8x1x512xf32>,
    } else {
    }
    %c0_i32_6 = arith.constant 0 : i32
    %7 = arith.cmpi sgt, %arg0, %c0_i32_6 : i32
    %8 = arith.extui %7 : i1 to i32
    %c0_i32_7 = arith.constant 0 : i32
    %9 = arith.cmpi ne, %8, %c0_i32_7 : i32
    scf.if %9 {
      %c0_107 = arith.constant 0 : index
      %c0_108 = arith.constant 0 : index
      %c0_109 = arith.constant 0 : index
      %268 = vector.load %arg4[%c0_107, %c0_108, %c0_109] : memref<1x128x512xf32, #tpu.memory_space<vmem>>, vector<1x128x512xf32>
      %269 = vector.shape_cast %268 : vector<1x128x512xf32> to vector<128x512xf32>
      %c0_110 = arith.constant 0 : index
      %c0_111 = arith.constant 0 : index
      %c0_112 = arith.constant 0 : index
      %270 = vector.load %arg10[%c0_110, %c0_111, %c0_112] : memref<8x2x128xf32, #tpu.memory_space<vmem>>, vector<8x1x128xf32>
      %271 = vector.shape_cast %270 : vector<8x1x128xf32> to vector<8x128xf32>
      %cst_113 = arith.constant dense<0.000000e+00> : vector<8x512xf32>
      %272 = tpu.matmul %271, %269, %cst_113 {dimension_numbers = #tpu.dot_dimension_numbers<[1], [0], [0], [1], [0, 0, 1, 1], [], []>} : vector<8x128xf32>, vector<128x512xf32>, vector<8x512xf32> -> vector<8x512xf32>
      %273 = vector.broadcast %3 : vector<1x512xf32> to vector<8x512xf32>
      %274 = arith.addf %272, %273 : vector<8x512xf32>
      %c0_114 = arith.constant 0 : index
      %c0_115 = arith.constant 0 : index
      %c0_116 = arith.constant 0 : index
      %275 = vector.load %arg9[%c0_114, %c0_115, %c0_116] : memref<8x2x512xf32, #tpu.memory_space<vmem>>, vector<8x1x512xf32>
      %276 = vector.shape_cast %275 : vector<8x1x512xf32> to vector<8x512xf32>
      %277 = vector.shape_cast %274 : vector<8x512xf32> to vector<8x1x512xf32>
      tpu.vector_store %arg9[%c0_114, %c0_115, %c0_116], %277 {strides = array<i32>} : memref<8x2x512xf32, #tpu.memory_space<vmem>>, vector<8x1x512xf32>,
      %c0_117 = arith.constant 0 : index
      %c1 = arith.constant 1 : index
      %c0_118 = arith.constant 0 : index
      %278 = vector.load %arg10[%c0_117, %c1, %c0_118] : memref<8x2x128xf32, #tpu.memory_space<vmem>>, vector<8x1x128xf32>
      %279 = vector.shape_cast %278 : vector<8x1x128xf32> to vector<8x128xf32>
      %cst_119 = arith.constant dense<0.000000e+00> : vector<8x512xf32>
      %280 = tpu.matmul %279, %269, %cst_119 {dimension_numbers = #tpu.dot_dimension_numbers<[1], [0], [0], [1], [0, 0, 1, 1], [], []>} : vector<8x128xf32>, vector<128x512xf32>, vector<8x512xf32> -> vector<8x512xf32>
      %281 = vector.broadcast %3 : vector<1x512xf32> to vector<8x512xf32>
      %282 = arith.addf %280, %281 : vector<8x512xf32>
      %c0_120 = arith.constant 0 : index
      %c1_121 = arith.constant 1 : index
      %c0_122 = arith.constant 0 : index
      %283 = vector.load %arg9[%c0_120, %c1_121, %c0_122] : memref<8x2x512xf32, #tpu.memory_space<vmem>>, vector<8x1x512xf32>
      %284 = vector.shape_cast %283 : vector<8x1x512xf32> to vector<8x512xf32>
      %285 = vector.shape_cast %282 : vector<8x512xf32> to vector<8x1x512xf32>
      tpu.vector_store %arg9[%c0_120, %c1_121, %c0_122], %285 {strides = array<i32>} : memref<8x2x512xf32, #tpu.memory_space<vmem>>, vector<8x1x512xf32>,
    } else {
    }
    %c0_8 = arith.constant 0 : index
    %c0_9 = arith.constant 0 : index
    %c0_10 = arith.constant 0 : index
    %10 = vector.load %arg2[%c0_8, %c0_9, %c0_10] : memref<1x2x128xf32, #tpu.memory_space<vmem>>, vector<1x2x128xf32>
    %11 = vector.shape_cast %10 : vector<1x2x128xf32> to vector<2x128xf32>
    %c0_11 = arith.constant 0 : index
    %c0_12 = arith.constant 0 : index
    %c0_13 = arith.constant 0 : index
    %12 = vector.load %arg3[%c0_11, %c0_12, %c0_13] : memref<1x2x128xf32, #tpu.memory_space<vmem>>, vector<1x2x128xf32>
    %13 = vector.shape_cast %12 : vector<1x2x128xf32> to vector<2x128xf32>
    %c0_i32_14 = arith.constant 0 : i32
    %14 = arith.index_cast %c0_i32_14 : i32 to index
    %c0_15 = arith.constant 0 : index
    %c0_16 = arith.constant 0 : index
    %15 = vector.load %arg9[%14, %c0_15, %c0_16] : memref<8x2x512xf32, #tpu.memory_space<vmem>>, vector<1x2x512xf32>
    %16 = vector.shape_cast %15 : vector<1x2x512xf32> to vector<2x512xf32>
    %cst = arith.constant dense<0.000000e+00> : vector<2x512xf32>
    %17 = tpu.matmul %11, %1, %cst {dimension_numbers = #tpu.dot_dimension_numbers<[1], [0], [0], [1], [0, 0, 1, 1], [], []>} : vector<2x128xf32>, vector<128x512xf32>, vector<2x512xf32> -> vector<2x512xf32>
    %18 = arith.addf %16, %17 : vector<2x512xf32>
    %19 = math.tanh %18 : vector<2x512xf32>
    %20 = vector.extract_strided_slice %19 {offsets = [0, 0], sizes = [2, 128], strides = [1, 1]} : vector<2x512xf32> to vector<2x128xf32>
    %cst_17 = arith.constant 1.000000e+00 : f32
    %21 = vector.broadcast %cst_17 : f32 to vector<2x128xf32>
    %22 = arith.addf %21, %20 : vector<2x128xf32>
    %cst_18 = arith.constant 5.000000e-01 : f32
    %23 = vector.broadcast %cst_18 : f32 to vector<2x128xf32>
    %24 = arith.mulf %23, %22 : vector<2x128xf32>
    %25 = vector.extract_strided_slice %19 {offsets = [0, 128], sizes = [2, 128], strides = [1, 1]} : vector<2x512xf32> to vector<2x128xf32>
    %cst_19 = arith.constant 1.000000e+00 : f32
    %26 = vector.broadcast %cst_19 : f32 to vector<2x128xf32>
    %27 = arith.addf %26, %25 : vector<2x128xf32>
    %cst_20 = arith.constant 5.000000e-01 : f32
    %28 = vector.broadcast %cst_20 : f32 to vector<2x128xf32>
    %29 = arith.mulf %28, %27 : vector<2x128xf32>
    %30 = vector.extract_strided_slice %19 {offsets = [0, 256], sizes = [2, 128], strides = [1, 1]} : vector<2x512xf32> to vector<2x128xf32>
    %31 = vector.extract_strided_slice %19 {offsets = [0, 384], sizes = [2, 128], strides = [1, 1]} : vector<2x512xf32> to vector<2x128xf32>
    %cst_21 = arith.constant 1.000000e+00 : f32
    %32 = vector.broadcast %cst_21 : f32 to vector<2x128xf32>
    %33 = arith.addf %32, %31 : vector<2x128xf32>
    %cst_22 = arith.constant 5.000000e-01 : f32
    %34 = vector.broadcast %cst_22 : f32 to vector<2x128xf32>
    %35 = arith.mulf %34, %33 : vector<2x128xf32>
    %36 = arith.mulf %29, %13 : vector<2x128xf32>
    %37 = arith.mulf %24, %30 : vector<2x128xf32>
    %38 = arith.addf %36, %37 : vector<2x128xf32>
    %39 = math.tanh %38 : vector<2x128xf32>
    %40 = arith.mulf %35, %39 : vector<2x128xf32>
    %41 = arith.index_cast %c0_i32_14 : i32 to index
    %c0_23 = arith.constant 0 : index
    %c0_24 = arith.constant 0 : index
    %42 = vector.load %arg10[%41, %c0_23, %c0_24] : memref<8x2x128xf32, #tpu.memory_space<vmem>>, vector<1x2x128xf32>
    %43 = vector.shape_cast %42 : vector<1x2x128xf32> to vector<2x128xf32>
    %44 = vector.shape_cast %40 : vector<2x128xf32> to vector<1x2x128xf32>
    tpu.vector_store %arg10[%41, %c0_23, %c0_24], %44 {strides = array<i32>} : memref<8x2x128xf32, #tpu.memory_space<vmem>>, vector<1x2x128xf32>,
    %c1_i32 = arith.constant 1 : i32
    %45 = arith.index_cast %c1_i32 : i32 to index
    %c0_25 = arith.constant 0 : index
    %c0_26 = arith.constant 0 : index
    %46 = vector.load %arg9[%45, %c0_25, %c0_26] : memref<8x2x512xf32, #tpu.memory_space<vmem>>, vector<1x2x512xf32>
    %47 = vector.shape_cast %46 : vector<1x2x512xf32> to vector<2x512xf32>
    %cst_27 = arith.constant dense<0.000000e+00> : vector<2x512xf32>
    %48 = tpu.matmul %40, %1, %cst_27 {dimension_numbers = #tpu.dot_dimension_numbers<[1], [0], [0], [1], [0, 0, 1, 1], [], []>} : vector<2x128xf32>, vector<128x512xf32>, vector<2x512xf32> -> vector<2x512xf32>
    %49 = arith.addf %47, %48 : vector<2x512xf32>
    %50 = math.tanh %49 : vector<2x512xf32>
    %51 = vector.extract_strided_slice %50 {offsets = [0, 0], sizes = [2, 128], strides = [1, 1]} : vector<2x512xf32> to vector<2x128xf32>
    %cst_28 = arith.constant 1.000000e+00 : f32
    %52 = vector.broadcast %cst_28 : f32 to vector<2x128xf32>
    %53 = arith.addf %52, %51 : vector<2x128xf32>
    %cst_29 = arith.constant 5.000000e-01 : f32
    %54 = vector.broadcast %cst_29 : f32 to vector<2x128xf32>
    %55 = arith.mulf %54, %53 : vector<2x128xf32>
    %56 = vector.extract_strided_slice %50 {offsets = [0, 128], sizes = [2, 128], strides = [1, 1]} : vector<2x512xf32> to vector<2x128xf32>
    %cst_30 = arith.constant 1.000000e+00 : f32
    %57 = vector.broadcast %cst_30 : f32 to vector<2x128xf32>
    %58 = arith.addf %57, %56 : vector<2x128xf32>
    %cst_31 = arith.constant 5.000000e-01 : f32
    %59 = vector.broadcast %cst_31 : f32 to vector<2x128xf32>
    %60 = arith.mulf %59, %58 : vector<2x128xf32>
    %61 = vector.extract_strided_slice %50 {offsets = [0, 256], sizes = [2, 128], strides = [1, 1]} : vector<2x512xf32> to vector<2x128xf32>
    %62 = vector.extract_strided_slice %50 {offsets = [0, 384], sizes = [2, 128], strides = [1, 1]} : vector<2x512xf32> to vector<2x128xf32>
    %cst_32 = arith.constant 1.000000e+00 : f32
    %63 = vector.broadcast %cst_32 : f32 to vector<2x128xf32>
    %64 = arith.addf %63, %62 : vector<2x128xf32>
    %cst_33 = arith.constant 5.000000e-01 : f32
    %65 = vector.broadcast %cst_33 : f32 to vector<2x128xf32>
    %66 = arith.mulf %65, %64 : vector<2x128xf32>
    %67 = arith.mulf %60, %38 : vector<2x128xf32>
    %68 = arith.mulf %55, %61 : vector<2x128xf32>
    %69 = arith.addf %67, %68 : vector<2x128xf32>
    %70 = math.tanh %69 : vector<2x128xf32>
    %71 = arith.mulf %66, %70 : vector<2x128xf32>
    %72 = arith.index_cast %c1_i32 : i32 to index
    %c0_34 = arith.constant 0 : index
    %c0_35 = arith.constant 0 : index
    %73 = vector.load %arg10[%72, %c0_34, %c0_35] : memref<8x2x128xf32, #tpu.memory_space<vmem>>, vector<1x2x128xf32>
    %74 = vector.shape_cast %73 : vector<1x2x128xf32> to vector<2x128xf32>
    %75 = vector.shape_cast %71 : vector<2x128xf32> to vector<1x2x128xf32>
    tpu.vector_store %arg10[%72, %c0_34, %c0_35], %75 {strides = array<i32>} : memref<8x2x128xf32, #tpu.memory_space<vmem>>, vector<1x2x128xf32>,
    %c2_i32 = arith.constant 2 : i32
    %76 = arith.index_cast %c2_i32 : i32 to index
    %c0_36 = arith.constant 0 : index
    %c0_37 = arith.constant 0 : index
    %77 = vector.load %arg9[%76, %c0_36, %c0_37] : memref<8x2x512xf32, #tpu.memory_space<vmem>>, vector<1x2x512xf32>
    %78 = vector.shape_cast %77 : vector<1x2x512xf32> to vector<2x512xf32>
    %cst_38 = arith.constant dense<0.000000e+00> : vector<2x512xf32>
    %79 = tpu.matmul %71, %1, %cst_38 {dimension_numbers = #tpu.dot_dimension_numbers<[1], [0], [0], [1], [0, 0, 1, 1], [], []>} : vector<2x128xf32>, vector<128x512xf32>, vector<2x512xf32> -> vector<2x512xf32>
    %80 = arith.addf %78, %79 : vector<2x512xf32>
    %81 = math.tanh %80 : vector<2x512xf32>
    %82 = vector.extract_strided_slice %81 {offsets = [0, 0], sizes = [2, 128], strides = [1, 1]} : vector<2x512xf32> to vector<2x128xf32>
    %cst_39 = arith.constant 1.000000e+00 : f32
    %83 = vector.broadcast %cst_39 : f32 to vector<2x128xf32>
    %84 = arith.addf %83, %82 : vector<2x128xf32>
    %cst_40 = arith.constant 5.000000e-01 : f32
    %85 = vector.broadcast %cst_40 : f32 to vector<2x128xf32>
    %86 = arith.mulf %85, %84 : vector<2x128xf32>
    %87 = vector.extract_strided_slice %81 {offsets = [0, 128], sizes = [2, 128], strides = [1, 1]} : vector<2x512xf32> to vector<2x128xf32>
    %cst_41 = arith.constant 1.000000e+00 : f32
    %88 = vector.broadcast %cst_41 : f32 to vector<2x128xf32>
    %89 = arith.addf %88, %87 : vector<2x128xf32>
    %cst_42 = arith.constant 5.000000e-01 : f32
    %90 = vector.broadcast %cst_42 : f32 to vector<2x128xf32>
    %91 = arith.mulf %90, %89 : vector<2x128xf32>
    %92 = vector.extract_strided_slice %81 {offsets = [0, 256], sizes = [2, 128], strides = [1, 1]} : vector<2x512xf32> to vector<2x128xf32>
    %93 = vector.extract_strided_slice %81 {offsets = [0, 384], sizes = [2, 128], strides = [1, 1]} : vector<2x512xf32> to vector<2x128xf32>
    %cst_43 = arith.constant 1.000000e+00 : f32
    %94 = vector.broadcast %cst_43 : f32 to vector<2x128xf32>
    %95 = arith.addf %94, %93 : vector<2x128xf32>
    %cst_44 = arith.constant 5.000000e-01 : f32
    %96 = vector.broadcast %cst_44 : f32 to vector<2x128xf32>
    %97 = arith.mulf %96, %95 : vector<2x128xf32>
    %98 = arith.mulf %91, %69 : vector<2x128xf32>
    %99 = arith.mulf %86, %92 : vector<2x128xf32>
    %100 = arith.addf %98, %99 : vector<2x128xf32>
    %101 = math.tanh %100 : vector<2x128xf32>
    %102 = arith.mulf %97, %101 : vector<2x128xf32>
    %103 = arith.index_cast %c2_i32 : i32 to index
    %c0_45 = arith.constant 0 : index
    %c0_46 = arith.constant 0 : index
    %104 = vector.load %arg10[%103, %c0_45, %c0_46] : memref<8x2x128xf32, #tpu.memory_space<vmem>>, vector<1x2x128xf32>
    %105 = vector.shape_cast %104 : vector<1x2x128xf32> to vector<2x128xf32>
    %106 = vector.shape_cast %102 : vector<2x128xf32> to vector<1x2x128xf32>
    tpu.vector_store %arg10[%103, %c0_45, %c0_46], %106 {strides = array<i32>} : memref<8x2x128xf32, #tpu.memory_space<vmem>>, vector<1x2x128xf32>,
    %c3_i32 = arith.constant 3 : i32
    %107 = arith.index_cast %c3_i32 : i32 to index
    %c0_47 = arith.constant 0 : index
    %c0_48 = arith.constant 0 : index
    %108 = vector.load %arg9[%107, %c0_47, %c0_48] : memref<8x2x512xf32, #tpu.memory_space<vmem>>, vector<1x2x512xf32>
    %109 = vector.shape_cast %108 : vector<1x2x512xf32> to vector<2x512xf32>
    %cst_49 = arith.constant dense<0.000000e+00> : vector<2x512xf32>
    %110 = tpu.matmul %102, %1, %cst_49 {dimension_numbers = #tpu.dot_dimension_numbers<[1], [0], [0], [1], [0, 0, 1, 1], [], []>} : vector<2x128xf32>, vector<128x512xf32>, vector<2x512xf32> -> vector<2x512xf32>
    %111 = arith.addf %109, %110 : vector<2x512xf32>
    %112 = math.tanh %111 : vector<2x512xf32>
    %113 = vector.extract_strided_slice %112 {offsets = [0, 0], sizes = [2, 128], strides = [1, 1]} : vector<2x512xf32> to vector<2x128xf32>
    %cst_50 = arith.constant 1.000000e+00 : f32
    %114 = vector.broadcast %cst_50 : f32 to vector<2x128xf32>
    %115 = arith.addf %114, %113 : vector<2x128xf32>
    %cst_51 = arith.constant 5.000000e-01 : f32
    %116 = vector.broadcast %cst_51 : f32 to vector<2x128xf32>
    %117 = arith.mulf %116, %115 : vector<2x128xf32>
    %118 = vector.extract_strided_slice %112 {offsets = [0, 128], sizes = [2, 128], strides = [1, 1]} : vector<2x512xf32> to vector<2x128xf32>
    %cst_52 = arith.constant 1.000000e+00 : f32
    %119 = vector.broadcast %cst_52 : f32 to vector<2x128xf32>
    %120 = arith.addf %119, %118 : vector<2x128xf32>
    %cst_53 = arith.constant 5.000000e-01 : f32
    %121 = vector.broadcast %cst_53 : f32 to vector<2x128xf32>
    %122 = arith.mulf %121, %120 : vector<2x128xf32>
    %123 = vector.extract_strided_slice %112 {offsets = [0, 256], sizes = [2, 128], strides = [1, 1]} : vector<2x512xf32> to vector<2x128xf32>
    %124 = vector.extract_strided_slice %112 {offsets = [0, 384], sizes = [2, 128], strides = [1, 1]} : vector<2x512xf32> to vector<2x128xf32>
    %cst_54 = arith.constant 1.000000e+00 : f32
    %125 = vector.broadcast %cst_54 : f32 to vector<2x128xf32>
    %126 = arith.addf %125, %124 : vector<2x128xf32>
    %cst_55 = arith.constant 5.000000e-01 : f32
    %127 = vector.broadcast %cst_55 : f32 to vector<2x128xf32>
    %128 = arith.mulf %127, %126 : vector<2x128xf32>
    %129 = arith.mulf %122, %100 : vector<2x128xf32>
    %130 = arith.mulf %117, %123 : vector<2x128xf32>
    %131 = arith.addf %129, %130 : vector<2x128xf32>
    %132 = math.tanh %131 : vector<2x128xf32>
    %133 = arith.mulf %128, %132 : vector<2x128xf32>
    %134 = arith.index_cast %c3_i32 : i32 to index
    %c0_56 = arith.constant 0 : index
    %c0_57 = arith.constant 0 : index
    %135 = vector.load %arg10[%134, %c0_56, %c0_57] : memref<8x2x128xf32, #tpu.memory_space<vmem>>, vector<1x2x128xf32>
    %136 = vector.shape_cast %135 : vector<1x2x128xf32> to vector<2x128xf32>
    %137 = vector.shape_cast %133 : vector<2x128xf32> to vector<1x2x128xf32>
    tpu.vector_store %arg10[%134, %c0_56, %c0_57], %137 {strides = array<i32>} : memref<8x2x128xf32, #tpu.memory_space<vmem>>, vector<1x2x128xf32>,
    %c4_i32 = arith.constant 4 : i32
    %138 = arith.index_cast %c4_i32 : i32 to index
    %c0_58 = arith.constant 0 : index
    %c0_59 = arith.constant 0 : index
    %139 = vector.load %arg9[%138, %c0_58, %c0_59] : memref<8x2x512xf32, #tpu.memory_space<vmem>>, vector<1x2x512xf32>
    %140 = vector.shape_cast %139 : vector<1x2x512xf32> to vector<2x512xf32>
    %cst_60 = arith.constant dense<0.000000e+00> : vector<2x512xf32>
    %141 = tpu.matmul %133, %1, %cst_60 {dimension_numbers = #tpu.dot_dimension_numbers<[1], [0], [0], [1], [0, 0, 1, 1], [], []>} : vector<2x128xf32>, vector<128x512xf32>, vector<2x512xf32> -> vector<2x512xf32>
    %142 = arith.addf %140, %141 : vector<2x512xf32>
    %143 = math.tanh %142 : vector<2x512xf32>
    %144 = vector.extract_strided_slice %143 {offsets = [0, 0], sizes = [2, 128], strides = [1, 1]} : vector<2x512xf32> to vector<2x128xf32>
    %cst_61 = arith.constant 1.000000e+00 : f32
    %145 = vector.broadcast %cst_61 : f32 to vector<2x128xf32>
    %146 = arith.addf %145, %144 : vector<2x128xf32>
    %cst_62 = arith.constant 5.000000e-01 : f32
    %147 = vector.broadcast %cst_62 : f32 to vector<2x128xf32>
    %148 = arith.mulf %147, %146 : vector<2x128xf32>
    %149 = vector.extract_strided_slice %143 {offsets = [0, 128], sizes = [2, 128], strides = [1, 1]} : vector<2x512xf32> to vector<2x128xf32>
    %cst_63 = arith.constant 1.000000e+00 : f32
    %150 = vector.broadcast %cst_63 : f32 to vector<2x128xf32>
    %151 = arith.addf %150, %149 : vector<2x128xf32>
    %cst_64 = arith.constant 5.000000e-01 : f32
    %152 = vector.broadcast %cst_64 : f32 to vector<2x128xf32>
    %153 = arith.mulf %152, %151 : vector<2x128xf32>
    %154 = vector.extract_strided_slice %143 {offsets = [0, 256], sizes = [2, 128], strides = [1, 1]} : vector<2x512xf32> to vector<2x128xf32>
    %155 = vector.extract_strided_slice %143 {offsets = [0, 384], sizes = [2, 128], strides = [1, 1]} : vector<2x512xf32> to vector<2x128xf32>
    %cst_65 = arith.constant 1.000000e+00 : f32
    %156 = vector.broadcast %cst_65 : f32 to vector<2x128xf32>
    %157 = arith.addf %156, %155 : vector<2x128xf32>
    %cst_66 = arith.constant 5.000000e-01 : f32
    %158 = vector.broadcast %cst_66 : f32 to vector<2x128xf32>
    %159 = arith.mulf %158, %157 : vector<2x128xf32>
    %160 = arith.mulf %153, %131 : vector<2x128xf32>
    %161 = arith.mulf %148, %154 : vector<2x128xf32>
    %162 = arith.addf %160, %161 : vector<2x128xf32>
    %163 = math.tanh %162 : vector<2x128xf32>
    %164 = arith.mulf %159, %163 : vector<2x128xf32>
    %165 = arith.index_cast %c4_i32 : i32 to index
    %c0_67 = arith.constant 0 : index
    %c0_68 = arith.constant 0 : index
    %166 = vector.load %arg10[%165, %c0_67, %c0_68] : memref<8x2x128xf32, #tpu.memory_space<vmem>>, vector<1x2x128xf32>
    %167 = vector.shape_cast %166 : vector<1x2x128xf32> to vector<2x128xf32>
    %168 = vector.shape_cast %164 : vector<2x128xf32> to vector<1x2x128xf32>
    tpu.vector_store %arg10[%165, %c0_67, %c0_68], %168 {strides = array<i32>} : memref<8x2x128xf32, #tpu.memory_space<vmem>>, vector<1x2x128xf32>,
    %c5_i32 = arith.constant 5 : i32
    %169 = arith.index_cast %c5_i32 : i32 to index
    %c0_69 = arith.constant 0 : index
    %c0_70 = arith.constant 0 : index
    %170 = vector.load %arg9[%169, %c0_69, %c0_70] : memref<8x2x512xf32, #tpu.memory_space<vmem>>, vector<1x2x512xf32>
    %171 = vector.shape_cast %170 : vector<1x2x512xf32> to vector<2x512xf32>
    %cst_71 = arith.constant dense<0.000000e+00> : vector<2x512xf32>
    %172 = tpu.matmul %164, %1, %cst_71 {dimension_numbers = #tpu.dot_dimension_numbers<[1], [0], [0], [1], [0, 0, 1, 1], [], []>} : vector<2x128xf32>, vector<128x512xf32>, vector<2x512xf32> -> vector<2x512xf32>
    %173 = arith.addf %171, %172 : vector<2x512xf32>
    %174 = math.tanh %173 : vector<2x512xf32>
    %175 = vector.extract_strided_slice %174 {offsets = [0, 0], sizes = [2, 128], strides = [1, 1]} : vector<2x512xf32> to vector<2x128xf32>
    %cst_72 = arith.constant 1.000000e+00 : f32
    %176 = vector.broadcast %cst_72 : f32 to vector<2x128xf32>
    %177 = arith.addf %176, %175 : vector<2x128xf32>
    %cst_73 = arith.constant 5.000000e-01 : f32
    %178 = vector.broadcast %cst_73 : f32 to vector<2x128xf32>
    %179 = arith.mulf %178, %177 : vector<2x128xf32>
    %180 = vector.extract_strided_slice %174 {offsets = [0, 128], sizes = [2, 128], strides = [1, 1]} : vector<2x512xf32> to vector<2x128xf32>
    %cst_74 = arith.constant 1.000000e+00 : f32
    %181 = vector.broadcast %cst_74 : f32 to vector<2x128xf32>
    %182 = arith.addf %181, %180 : vector<2x128xf32>
    %cst_75 = arith.constant 5.000000e-01 : f32
    %183 = vector.broadcast %cst_75 : f32 to vector<2x128xf32>
    %184 = arith.mulf %183, %182 : vector<2x128xf32>
    %185 = vector.extract_strided_slice %174 {offsets = [0, 256], sizes = [2, 128], strides = [1, 1]} : vector<2x512xf32> to vector<2x128xf32>
    %186 = vector.extract_strided_slice %174 {offsets = [0, 384], sizes = [2, 128], strides = [1, 1]} : vector<2x512xf32> to vector<2x128xf32>
    %cst_76 = arith.constant 1.000000e+00 : f32
    %187 = vector.broadcast %cst_76 : f32 to vector<2x128xf32>
    %188 = arith.addf %187, %186 : vector<2x128xf32>
    %cst_77 = arith.constant 5.000000e-01 : f32
    %189 = vector.broadcast %cst_77 : f32 to vector<2x128xf32>
    %190 = arith.mulf %189, %188 : vector<2x128xf32>
    %191 = arith.mulf %184, %162 : vector<2x128xf32>
    %192 = arith.mulf %179, %185 : vector<2x128xf32>
    %193 = arith.addf %191, %192 : vector<2x128xf32>
    %194 = math.tanh %193 : vector<2x128xf32>
    %195 = arith.mulf %190, %194 : vector<2x128xf32>
    %196 = arith.index_cast %c5_i32 : i32 to index
    %c0_78 = arith.constant 0 : index
    %c0_79 = arith.constant 0 : index
    %197 = vector.load %arg10[%196, %c0_78, %c0_79] : memref<8x2x128xf32, #tpu.memory_space<vmem>>, vector<1x2x128xf32>
    %198 = vector.shape_cast %197 : vector<1x2x128xf32> to vector<2x128xf32>
    %199 = vector.shape_cast %195 : vector<2x128xf32> to vector<1x2x128xf32>
    tpu.vector_store %arg10[%196, %c0_78, %c0_79], %199 {strides = array<i32>} : memref<8x2x128xf32, #tpu.memory_space<vmem>>, vector<1x2x128xf32>,
    %c6_i32 = arith.constant 6 : i32
    %200 = arith.index_cast %c6_i32 : i32 to index
    %c0_80 = arith.constant 0 : index
    %c0_81 = arith.constant 0 : index
    %201 = vector.load %arg9[%200, %c0_80, %c0_81] : memref<8x2x512xf32, #tpu.memory_space<vmem>>, vector<1x2x512xf32>
    %202 = vector.shape_cast %201 : vector<1x2x512xf32> to vector<2x512xf32>
    %cst_82 = arith.constant dense<0.000000e+00> : vector<2x512xf32>
    %203 = tpu.matmul %195, %1, %cst_82 {dimension_numbers = #tpu.dot_dimension_numbers<[1], [0], [0], [1], [0, 0, 1, 1], [], []>} : vector<2x128xf32>, vector<128x512xf32>, vector<2x512xf32> -> vector<2x512xf32>
    %204 = arith.addf %202, %203 : vector<2x512xf32>
    %205 = math.tanh %204 : vector<2x512xf32>
    %206 = vector.extract_strided_slice %205 {offsets = [0, 0], sizes = [2, 128], strides = [1, 1]} : vector<2x512xf32> to vector<2x128xf32>
    %cst_83 = arith.constant 1.000000e+00 : f32
    %207 = vector.broadcast %cst_83 : f32 to vector<2x128xf32>
    %208 = arith.addf %207, %206 : vector<2x128xf32>
    %cst_84 = arith.constant 5.000000e-01 : f32
    %209 = vector.broadcast %cst_84 : f32 to vector<2x128xf32>
    %210 = arith.mulf %209, %208 : vector<2x128xf32>
    %211 = vector.extract_strided_slice %205 {offsets = [0, 128], sizes = [2, 128], strides = [1, 1]} : vector<2x512xf32> to vector<2x128xf32>
    %cst_85 = arith.constant 1.000000e+00 : f32
    %212 = vector.broadcast %cst_85 : f32 to vector<2x128xf32>
    %213 = arith.addf %212, %211 : vector<2x128xf32>
    %cst_86 = arith.constant 5.000000e-01 : f32
    %214 = vector.broadcast %cst_86 : f32 to vector<2x128xf32>
    %215 = arith.mulf %214, %213 : vector<2x128xf32>
    %216 = vector.extract_strided_slice %205 {offsets = [0, 256], sizes = [2, 128], strides = [1, 1]} : vector<2x512xf32> to vector<2x128xf32>
    %217 = vector.extract_strided_slice %205 {offsets = [0, 384], sizes = [2, 128], strides = [1, 1]} : vector<2x512xf32> to vector<2x128xf32>
    %cst_87 = arith.constant 1.000000e+00 : f32
    %218 = vector.broadcast %cst_87 : f32 to vector<2x128xf32>
    %219 = arith.addf %218, %217 : vector<2x128xf32>
    %cst_88 = arith.constant 5.000000e-01 : f32
    %220 = vector.broadcast %cst_88 : f32 to vector<2x128xf32>
    %221 = arith.mulf %220, %219 : vector<2x128xf32>
    %222 = arith.mulf %215, %193 : vector<2x128xf32>
    %223 = arith.mulf %210, %216 : vector<2x128xf32>
    %224 = arith.addf %222, %223 : vector<2x128xf32>
    %225 = math.tanh %224 : vector<2x128xf32>
    %226 = arith.mulf %221, %225 : vector<2x128xf32>
    %227 = arith.index_cast %c6_i32 : i32 to index
    %c0_89 = arith.constant 0 : index
    %c0_90 = arith.constant 0 : index
    %228 = vector.load %arg10[%227, %c0_89, %c0_90] : memref<8x2x128xf32, #tpu.memory_space<vmem>>, vector<1x2x128xf32>
    %229 = vector.shape_cast %228 : vector<1x2x128xf32> to vector<2x128xf32>
    %230 = vector.shape_cast %226 : vector<2x128xf32> to vector<1x2x128xf32>
    tpu.vector_store %arg10[%227, %c0_89, %c0_90], %230 {strides = array<i32>} : memref<8x2x128xf32, #tpu.memory_space<vmem>>, vector<1x2x128xf32>,
    %c7_i32 = arith.constant 7 : i32
    %231 = arith.index_cast %c7_i32 : i32 to index
    %c0_91 = arith.constant 0 : index
    %c0_92 = arith.constant 0 : index
    %232 = vector.load %arg9[%231, %c0_91, %c0_92] : memref<8x2x512xf32, #tpu.memory_space<vmem>>, vector<1x2x512xf32>
    %233 = vector.shape_cast %232 : vector<1x2x512xf32> to vector<2x512xf32>
    %cst_93 = arith.constant dense<0.000000e+00> : vector<2x512xf32>
    %234 = tpu.matmul %226, %1, %cst_93 {dimension_numbers = #tpu.dot_dimension_numbers<[1], [0], [0], [1], [0, 0, 1, 1], [], []>} : vector<2x128xf32>, vector<128x512xf32>, vector<2x512xf32> -> vector<2x512xf32>
    %235 = arith.addf %233, %234 : vector<2x512xf32>
    %236 = math.tanh %235 : vector<2x512xf32>
    %237 = vector.extract_strided_slice %236 {offsets = [0, 0], sizes = [2, 128], strides = [1, 1]} : vector<2x512xf32> to vector<2x128xf32>
    %cst_94 = arith.constant 1.000000e+00 : f32
    %238 = vector.broadcast %cst_94 : f32 to vector<2x128xf32>
    %239 = arith.addf %238, %237 : vector<2x128xf32>
    %cst_95 = arith.constant 5.000000e-01 : f32
    %240 = vector.broadcast %cst_95 : f32 to vector<2x128xf32>
    %241 = arith.mulf %240, %239 : vector<2x128xf32>
    %242 = vector.extract_strided_slice %236 {offsets = [0, 128], sizes = [2, 128], strides = [1, 1]} : vector<2x512xf32> to vector<2x128xf32>
    %cst_96 = arith.constant 1.000000e+00 : f32
    %243 = vector.broadcast %cst_96 : f32 to vector<2x128xf32>
    %244 = arith.addf %243, %242 : vector<2x128xf32>
    %cst_97 = arith.constant 5.000000e-01 : f32
    %245 = vector.broadcast %cst_97 : f32 to vector<2x128xf32>
    %246 = arith.mulf %245, %244 : vector<2x128xf32>
    %247 = vector.extract_strided_slice %236 {offsets = [0, 256], sizes = [2, 128], strides = [1, 1]} : vector<2x512xf32> to vector<2x128xf32>
    %248 = vector.extract_strided_slice %236 {offsets = [0, 384], sizes = [2, 128], strides = [1, 1]} : vector<2x512xf32> to vector<2x128xf32>
    %cst_98 = arith.constant 1.000000e+00 : f32
    %249 = vector.broadcast %cst_98 : f32 to vector<2x128xf32>
    %250 = arith.addf %249, %248 : vector<2x128xf32>
    %cst_99 = arith.constant 5.000000e-01 : f32
    %251 = vector.broadcast %cst_99 : f32 to vector<2x128xf32>
    %252 = arith.mulf %251, %250 : vector<2x128xf32>
    %253 = arith.mulf %246, %224 : vector<2x128xf32>
    %254 = arith.mulf %241, %247 : vector<2x128xf32>
    %255 = arith.addf %253, %254 : vector<2x128xf32>
    %256 = math.tanh %255 : vector<2x128xf32>
    %257 = arith.mulf %252, %256 : vector<2x128xf32>
    %258 = arith.index_cast %c7_i32 : i32 to index
    %c0_100 = arith.constant 0 : index
    %c0_101 = arith.constant 0 : index
    %259 = vector.load %arg10[%258, %c0_100, %c0_101] : memref<8x2x128xf32, #tpu.memory_space<vmem>>, vector<1x2x128xf32>
    %260 = vector.shape_cast %259 : vector<1x2x128xf32> to vector<2x128xf32>
    %261 = vector.shape_cast %257 : vector<2x128xf32> to vector<1x2x128xf32>
    tpu.vector_store %arg10[%258, %c0_100, %c0_101], %261 {strides = array<i32>} : memref<8x2x128xf32, #tpu.memory_space<vmem>>, vector<1x2x128xf32>,
    %c8_i32 = arith.constant 8 : i32
    %c0_102 = arith.constant 0 : index
    %c0_103 = arith.constant 0 : index
    %c0_104 = arith.constant 0 : index
    %262 = vector.load %arg8[%c0_102, %c0_103, %c0_104] : memref<1x2x128xf32, #tpu.memory_space<vmem>>, vector<1x2x128xf32>
    %263 = vector.shape_cast %262 : vector<1x2x128xf32> to vector<2x128xf32>
    %264 = vector.shape_cast %257 : vector<2x128xf32> to vector<1x2x128xf32>
    tpu.vector_store %arg8[%c0_102, %c0_103, %c0_104], %264 {strides = array<i32>} : memref<1x2x128xf32, #tpu.memory_space<vmem>>, vector<1x2x128xf32>,
    %c1_i32_105 = arith.constant 1 : i32
    %265 = arith.cmpi eq, %arg0, %c1_i32_105 : i32
    %266 = arith.extui %265 : i1 to i32
    %c0_i32_106 = arith.constant 0 : i32
    %267 = arith.cmpi ne, %266, %c0_i32_106 : i32
    scf.if %267 {
      %c0_107 = arith.constant 0 : index
      %c0_108 = arith.constant 0 : index
      %c0_109 = arith.constant 0 : index
      %268 = vector.load %arg10[%c0_107, %c0_108, %c0_109] : memref<8x2x128xf32, #tpu.memory_space<vmem>>, vector<8x1x128xf32>
      %269 = vector.shape_cast %268 : vector<8x1x128xf32> to vector<8x128xf32>
      %c0_110 = arith.constant 0 : index
      %c0_111 = arith.constant 0 : index
      %c0_112 = arith.constant 0 : index
      %270 = vector.load %arg7[%c0_110, %c0_111, %c0_112] : memref<2x8x128xf32, #tpu.memory_space<vmem>>, vector<1x8x128xf32>
      %271 = vector.shape_cast %270 : vector<1x8x128xf32> to vector<8x128xf32>
      %272 = vector.shape_cast %269 : vector<8x128xf32> to vector<1x8x128xf32>
      tpu.vector_store %arg7[%c0_110, %c0_111, %c0_112], %272 {strides = array<i32>} : memref<2x8x128xf32, #tpu.memory_space<vmem>>, vector<1x8x128xf32>,
      %c0_113 = arith.constant 0 : index
      %c1 = arith.constant 1 : index
      %c0_114 = arith.constant 0 : index
      %273 = vector.load %arg10[%c0_113, %c1, %c0_114] : memref<8x2x128xf32, #tpu.memory_space<vmem>>, vector<8x1x128xf32>
      %274 = vector.shape_cast %273 : vector<8x1x128xf32> to vector<8x128xf32>
      %c1_115 = arith.constant 1 : index
      %c0_116 = arith.constant 0 : index
      %c0_117 = arith.constant 0 : index
      %275 = vector.load %arg7[%c1_115, %c0_116, %c0_117] : memref<2x8x128xf32, #tpu.memory_space<vmem>>, vector<1x8x128xf32>
      %276 = vector.shape_cast %275 : vector<1x8x128xf32> to vector<8x128xf32>
      %277 = vector.shape_cast %274 : vector<8x128xf32> to vector<1x8x128xf32>
      tpu.vector_store %arg7[%c1_115, %c0_116, %c0_117], %277 {strides = array<i32>} : memref<2x8x128xf32, #tpu.memory_space<vmem>>, vector<1x8x128xf32>,
    } else {
    }
    return
  }
  func.func @transform_0(%arg0: i32) -> (i32, i32, i32) {
    %c0_i32 = arith.constant 0 : i32
    %c0_i32_0 = arith.constant 0 : i32
    %c0_i32_1 = arith.constant 0 : i32
    %c0_i32_2 = arith.constant 0 : i32
    return %c0_i32, %c0_i32_0, %c0_i32_1 : i32, i32, i32
  }
  func.func @transform_1(%arg0: i32) -> (i32, i32, i32) {
    %c0_i32 = arith.constant 0 : i32
    %c0_i32_0 = arith.constant 0 : i32
    %c0_i32_1 = arith.constant 0 : i32
    return %arg0, %c0_i32, %c0_i32_0 : i32, i32, i32
  }
  func.func @transform_2(%arg0: i32) -> (i32, i32, i32) {
    %c0_i32 = arith.constant 0 : i32
    %c0_i32_0 = arith.constant 0 : i32
    %c0_i32_1 = arith.constant 0 : i32
    return %arg0, %c0_i32, %c0_i32_0 : i32, i32, i32
  }
  func.func @transform_3(%arg0: i32) -> (i32, i32, i32) {
    %c0_i32 = arith.constant 0 : i32
    %c0_i32_0 = arith.constant 0 : i32
    %c0_i32_1 = arith.constant 0 : i32
    return %arg0, %c0_i32, %c0_i32_0 : i32, i32, i32
  }
  func.func @transform_4(%arg0: i32) -> (i32, i32, i32) {
    %c0_i32 = arith.constant 0 : i32
    %c0_i32_0 = arith.constant 0 : i32
    %c0_i32_1 = arith.constant 0 : i32
    return %arg0, %c0_i32, %c0_i32_0 : i32, i32, i32
  }
  func.func @transform_5(%arg0: i32) -> (i32, i32, i32) {
    %c0_i32 = arith.constant 0 : i32
    %c0_i32_0 = arith.constant 0 : i32
    %c0_i32_1 = arith.constant 0 : i32
    return %arg0, %c0_i32, %c0_i32_0 : i32, i32, i32
  }
  func.func @transform_6(%arg0: i32) -> (i32, i32, i32) {
    %c0_i32 = arith.constant 0 : i32
    %c0_i32_0 = arith.constant 0 : i32
    %c0_i32_1 = arith.constant 0 : i32
    %c0_i32_2 = arith.constant 0 : i32
    return %c0_i32, %c0_i32_0, %c0_i32_1 : i32, i32, i32
  }
  func.func @transform_7(%arg0: i32) -> (i32, i32, i32) {
    %c0_i32 = arith.constant 0 : i32
    %c0_i32_0 = arith.constant 0 : i32
    %c0_i32_1 = arith.constant 0 : i32
    return %arg0, %c0_i32, %c0_i32_0 : i32, i32, i32
  }
}

</mosaic_0001>

<llo_original>
// kernel: lstm_forward.3
$region0: #{lstm_forward.3}
  #allocation0 [shape = 'u32[]', space=smem, size = 0x4, offset = 0x4, fixed_abs, tag = 'smem constant byte address 0x4 - core index']
  #allocation1 [shape = 'u32[144,128]{1,0:T(1,128)}', space=vmem, size = 0x12000, scoped, tag = 'internal scratch']
  #allocation2 [shape = 'f32[8,2,512]{2,1,0:T(2,128)}', space=vmem, size = 0x8000, scoped, tag = 'scratch operand']
  #allocation3 [shape = 'f32[8,2,128]{2,1,0:T(2,128)}', space=vmem, size = 0x2000, scoped, tag = 'scratch operand']
  %s0 = inlined_call_operand.vmem [shape: f32[2,8,16], index: 0, kind: input, shape index: {}]
  %s1 = inlined_call_operand.vmem [shape: f32[2,2,128], index: 1, kind: input, shape index: {}]
  %s2 = inlined_call_operand.vmem [shape: f32[2,2,128], index: 2, kind: input, shape index: {}]
  %s3 = inlined_call_operand.hbm [shape: f32[2,128,512], index: 3, kind: input, shape index: {}]
  %s4 = inlined_call_operand.hbm [shape: f32[2,128,512], index: 4, kind: input, shape index: {}]
  %s5 = inlined_call_operand.vmem [shape: f32[2,1,512], index: 5, kind: input, shape index: {}]
  %s6 = inlined_call_operand.hbm [shape: f32[2,8,128], index: 6, kind: output, shape index: {0}]
  %s7 = inlined_call_operand.hbm [shape: f32[2,2,128], index: 7, kind: output, shape index: {1}]
  %8 = xla_tuple %s6, %s7
  %s9 = sld [smem:[#allocation0]]
  $region85: #{lstm_forward.3} parent=0
    _
  %s11 = ssub.s32 1, %s9
  %s12 = scalar_select 0, %s11, %s9
  $region1: #{lstm_forward.3} parent=0
    #allocation4 [shape = 'u8[524288]{0}', space=vmem, size = 0x80000, scoped, tag = 'input window, operand 3']
    #allocation5 [shape = 's32[2]{0}', space=sflag, size = 0x8, scoped, tag = 'scoped memory for lstm_forward.3']
    #allocation6 [shape = 's32[2]{0}', space=sflag, size = 0x8, scoped, tag = 'scoped memory for lstm_forward.3']
    #allocation7 [shape = 'u8[524288]{0}', space=vmem, size = 0x80000, scoped, tag = 'input window, operand 4']
    #allocation8 [shape = 's32[2]{0}', space=sflag, size = 0x8, scoped, tag = 'scoped memory for lstm_forward.3']
    #allocation9 [shape = 'u8[8192]{0}', space=vmem, size = 0x2000, scoped, tag = 'output window, operand 0, single buffered']
    #allocation10 [shape = 'u8[2048]{0}', space=vmem, size = 0x800, scoped, tag = 'output window, operand 1']
    #allocation11 [shape = 's32[2]{0}', space=sflag, size = 0x8, scoped, tag = 'scoped memory for lstm_forward.3']
    %13 = vsyncpa [#allocation5], 0
    %s14 = scalar_lea.sflag [#allocation5], 1
    %15 = vsyncpa %s14, 0
    %16 = vsyncpa [#allocation8], 0
    %s17 = scalar_lea.sflag [#allocation8], 1
    %18 = vsyncpa %s17, 0
    %19 = vsyncpa [#allocation6], 0
    %20 = vsyncpa [#allocation11], 0
    %s21 = scalar_lea.sflag [#allocation11], 1
    %22 = vsyncpa %s21, 0
    loop: start=0, step=1, limit=4
    $region2: #{lstm_forward.3} parent=1 // loop_pre_header
      _
    $region3: #{lstm_forward.3} parent=1 // loop_header
      %s24 = sphi 0, %s28
      %p25 = scmp.ge.s32.totalorder %s24, 4
      %s32 = sphi 0, %s32
      %s34 = sphi 0, %s32
      %s35 = sphi 0, %s34
      %s49 = sphi 0, %s35
      %s55 = sphi 0, %s57
      %s58 = sphi 0, %s55
      %s59 = sphi 0, %s58
      %s75 = sphi 0, %s59
      %s81 = sphi 0, %s83
      %s84 = sphi 0, %s81
      %s85 = sphi 0, %s84
      %s101 = sphi 0, %s85
      %s107 = sphi 0, %s109
      %s110 = sphi 0, %s107
      %s111 = sphi 0, %s110
      %s127 = sphi 0, %s111
      %s133 = sphi 0, %s135
      %s136 = sphi 0, %s133
      %s137 = sphi 0, %s136
      %s153 = sphi 0, %s137
      %s159 = sphi 0, %s161
      %s162 = sphi 0, %s159
      %s163 = sphi 0, %s162
      %s179 = sphi 0, %s163
      %s183 = sphi 0, %s183
      %s185 = sphi 0, %s183
      %s186 = sphi 0, %s185
      %s200 = sphi 0, %s186
      %s206 = sphi 0, %s208
      %s209 = sphi 0, %s206
      %s210 = sphi 0, %s209
      %s226 = sphi 0, %s210
    $region4: #{lstm_forward.3} parent=1 // loop_header_branch
      %27 = sbr.rel (%p25) target = $region8
    $region5: #{lstm_forward.3} parent=1 // loop_body
      %s29 = ssub.s32 %s24, 1
      %s30 = ssub.s32 %s24, 2
      %s31 = sadd.s32 %s24, 1
      %s33 = sadd.s32 %s32, 1
      %p36 = scmp.eq.s32.totalorder %s24, 1
      %p37 = scmp.ne.s32.totalorder %s32, %s34
      %p38 = scmp.eq.s32.totalorder %s24, 0
      %p39 = por %p37, %p38
      %p40 = scmp.ne.s32.totalorder %s32, %s34
      %p41 = scmp.eq.s32.totalorder %s29, 1
      %p42 = por %p40, %p41
      %p43 = scmp.ne.s32.totalorder %s34, %s35
      %p44 = scmp.eq.s32.totalorder %s29, 0
      %p45 = por %p43, %p44
      %p46 = scmp.ne.s32.totalorder %s34, %s35
      %p47 = scmp.eq.s32.totalorder %s30, 1
      %p48 = por %p46, %p47
      %p50 = scmp.ne.s32.totalorder %s35, %s49
      %p51 = scmp.eq.s32.totalorder %s30, 0
      %p52 = por %p50, %p51
      %s53 = ssub.s32 %s24, %s31
      %p54 = scmp.eq.s32.totalorder %s53, 0
      %s56 = sadd.s32 %s55, 1
      %s57 = scalar_select %p54, %s55, %s56
      %p60 = pneg %p54
      %p61 = scmp.eq.s32.totalorder %s24, 1
      %p62 = por %p60, %p61
      %p63 = scmp.ne.s32.totalorder %s55, %s58
      %p64 = scmp.eq.s32.totalorder %s24, 0
      %p65 = por %p63, %p64
      %p66 = scmp.ne.s32.totalorder %s55, %s58
      %p67 = scmp.eq.s32.totalorder %s29, 1
      %p68 = por %p66, %p67
      %p69 = scmp.ne.s32.totalorder %s58, %s59
      %p70 = scmp.eq.s32.totalorder %s29, 0
      %p71 = por %p69, %p70
      %p72 = scmp.ne.s32.totalorder %s58, %s59
      %p73 = scmp.eq.s32.totalorder %s30, 1
      %p74 = por %p72, %p73
      %p76 = scmp.ne.s32.totalorder %s59, %s75
      %p77 = scmp.eq.s32.totalorder %s30, 0
      %p78 = por %p76, %p77
      %s79 = ssub.s32 %s24, %s31
      %p80 = scmp.eq.s32.totalorder %s79, 0
      %s82 = sadd.s32 %s81, 1
      %s83 = scalar_select %p80, %s81, %s82
      %p86 = pneg %p80
      %p87 = scmp.eq.s32.totalorder %s24, 1
      %p88 = por %p86, %p87
      %p89 = scmp.ne.s32.totalorder %s81, %s84
      %p90 = scmp.eq.s32.totalorder %s24, 0
      %p91 = por %p89, %p90
      %p92 = scmp.ne.s32.totalorder %s81, %s84
      %p93 = scmp.eq.s32.totalorder %s29, 1
      %p94 = por %p92, %p93
      %p95 = scmp.ne.s32.totalorder %s84, %s85
      %p96 = scmp.eq.s32.totalorder %s29, 0
      %p97 = por %p95, %p96
      %p98 = scmp.ne.s32.totalorder %s84, %s85
      %p99 = scmp.eq.s32.totalorder %s30, 1
      %p100 = por %p98, %p99
      %p102 = scmp.ne.s32.totalorder %s85, %s101
      %p103 = scmp.eq.s32.totalorder %s30, 0
      %p104 = por %p102, %p103
      %s105 = ssub.s32 %s24, %s31
      %p106 = scmp.eq.s32.totalorder %s105, 0
      %s108 = sadd.s32 %s107, 1
      %s109 = scalar_select %p106, %s107, %s108
      %p112 = pneg %p106
      %p113 = scmp.eq.s32.totalorder %s24, 1
      %p114 = por %p112, %p113
      %p115 = scmp.ne.s32.totalorder %s107, %s110
      %p116 = scmp.eq.s32.totalorder %s24, 0
      %p117 = por %p115, %p116
      %p118 = scmp.ne.s32.totalorder %s107, %s110
      %p119 = scmp.eq.s32.totalorder %s29, 1
      %p120 = por %p118, %p119
      %p121 = scmp.ne.s32.totalorder %s110, %s111
      %p122 = scmp.eq.s32.totalorder %s29, 0
      %p123 = por %p121, %p122
      %p124 = scmp.ne.s32.totalorder %s110, %s111
      %p125 = scmp.eq.s32.totalorder %s30, 1
      %p126 = por %p124, %p125
      %p128 = scmp.ne.s32.totalorder %s111, %s127
      %p129 = scmp.eq.s32.totalorder %s30, 0
      %p130 = por %p128, %p129
      %s131 = ssub.s32 %s24, %s31
      %p132 = scmp.eq.s32.totalorder %s131, 0
      %s134 = sadd.s32 %s133, 1
      %s135 = scalar_select %p132, %s133, %s134
      %p138 = pneg %p132
      %p139 = scmp.eq.s32.totalorder %s24, 1
      %p140 = por %p138, %p139
      %p141 = scmp.ne.s32.totalorder %s133, %s136
      %p142 = scmp.eq.s32.totalorder %s24, 0
      %p143 = por %p141, %p142
      %p144 = scmp.ne.s32.totalorder %s133, %s136
      %p145 = scmp.eq.s32.totalorder %s29, 1
      %p146 = por %p144, %p145
      %p147 = scmp.ne.s32.totalorder %s136, %s137
      %p148 = scmp.eq.s32.totalorder %s29, 0
      %p149 = por %p147, %p148
      %p150 = scmp.ne.s32.totalorder %s136, %s137
      %p151 = scmp.eq.s32.totalorder %s30, 1
      %p152 = por %p150, %p151
      %p154 = scmp.ne.s32.totalorder %s137, %s153
      %p155 = scmp.eq.s32.totalorder %s30, 0
      %p156 = por %p154, %p155
      %s157 = ssub.s32 %s24, %s31
      %p158 = scmp.eq.s32.totalorder %s157, 0
      %s160 = sadd.s32 %s159, 1
      %s161 = scalar_select %p158, %s159, %s160
      %p164 = pneg %p158
      %p165 = scmp.eq.s32.totalorder %s24, 1
      %p166 = por %p164, %p165
      %p167 = scmp.ne.s32.totalorder %s159, %s162
      %p168 = scmp.eq.s32.totalorder %s24, 0
      %p169 = por %p167, %p168
      %p170 = scmp.ne.s32.totalorder %s159, %s162
      %p171 = scmp.eq.s32.totalorder %s29, 1
      %p172 = por %p170, %p171
      %p173 = scmp.ne.s32.totalorder %s162, %s163
      %p174 = scmp.eq.s32.totalorder %s29, 0
      %p175 = por %p173, %p174
      %p176 = scmp.ne.s32.totalorder %s162, %s163
      %p177 = scmp.eq.s32.totalorder %s30, 1
      %p178 = por %p176, %p177
      %p180 = scmp.ne.s32.totalorder %s163, %s179
      %p181 = scmp.eq.s32.totalorder %s30, 0
      %p182 = por %p180, %p181
      %s184 = sadd.s32 %s183, 1
      %p187 = scmp.eq.s32.totalorder %s24, 1
      %p188 = scmp.ne.s32.totalorder %s183, %s185
      %p189 = scmp.eq.s32.totalorder %s24, 0
      %p190 = por %p188, %p189
      %p191 = scmp.ne.s32.totalorder %s183, %s185
      %p192 = scmp.eq.s32.totalorder %s29, 1
      %p193 = por %p191, %p192
      %p194 = scmp.ne.s32.totalorder %s185, %s186
      %p195 = scmp.eq.s32.totalorder %s29, 0
      %p196 = por %p194, %p195
      %p197 = scmp.ne.s32.totalorder %s185, %s186
      %p198 = scmp.eq.s32.totalorder %s30, 1
      %p199 = por %p197, %p198
      %p201 = scmp.ne.s32.totalorder %s186, %s200
      %p202 = scmp.eq.s32.totalorder %s30, 0
      %p203 = por %p201, %p202
      %s204 = ssub.s32 %s24, %s31
      %p205 = scmp.eq.s32.totalorder %s204, 0
      %s207 = sadd.s32 %s206, 1
      %s208 = scalar_select %p205, %s206, %s207
      %p211 = pneg %p205
      %p212 = scmp.eq.s32.totalorder %s24, 1
      %p213 = por %p211, %p212
      %p214 = scmp.ne.s32.totalorder %s206, %s209
      %p215 = scmp.eq.s32.totalorder %s24, 0
      %p216 = por %p214, %p215
      %p217 = scmp.ne.s32.totalorder %s206, %s209
      %p218 = scmp.eq.s32.totalorder %s29, 1
      %p219 = por %p217, %p218
      %p220 = scmp.ne.s32.totalorder %s209, %s210
      %p221 = scmp.eq.s32.totalorder %s29, 0
      %p222 = por %p220, %p221
      %p223 = scmp.ne.s32.totalorder %s209, %s210
      %p224 = scmp.eq.s32.totalorder %s30, 1
      %p225 = por %p223, %p224
      %p227 = scmp.ne.s32.totalorder %s210, %s226
      %p228 = scmp.eq.s32.totalorder %s30, 0
      %p229 = por %p227, %p228
      %p230 = scmp.le.s32.totalorder 1, %s24
      %p231 = scmp.lt.s32.totalorder %s24, 3
      %p232 = pnand %p230, %p231
      %p233 = pneg %p232
      // Predicated region
      $region9: #{lstm_forward.3} parent=5 // pred_check
        _
      $region10: #{lstm_forward.3} parent=5 // pred_check_branch
        %235 = sbr.rel (%p232) target = $region12
      $region11: #{lstm_forward.3} parent=5 // pred_region
        %s236 = ssub.s32 %s24, 1
        // Predicated region
        $region13: #{lstm_forward.3} parent=11 // pred_check
          %p237 = pneg %p45
        $region14: #{lstm_forward.3} parent=11 // pred_check_branch
          %239 = sbr.rel (%p237) target = $region16
        $region15: #{lstm_forward.3} parent=11 // pred_region
          _
        $region16: #{lstm_forward.3} parent=11 // pred_fallthru
          _
      $region12: #{lstm_forward.3} parent=5 // pred_fallthru
        _
      %p240 = scmp.lt.s32.totalorder %s24, 2
      // Predicated region
      $region17: #{lstm_forward.3} parent=5 // pred_check
        %p241 = pneg %p240
      $region18: #{lstm_forward.3} parent=5 // pred_check_branch
        %243 = sbr.rel (%p241) target = $region20
      $region19: #{lstm_forward.3} parent=5 // pred_region
        // Predicated region
        $region21: #{lstm_forward.3} parent=19 // pred_check
          %p244 = pneg %p65
        $region22: #{lstm_forward.3} parent=19 // pred_check_branch
          %246 = sbr.rel (%p244) target = $region24
        $region23: #{lstm_forward.3} parent=19 // pred_region
          %p247 = scmp.lt.s32.totalorder %s24, 1
          %s248 = scalar_select %p247, %s24, 1
          %s249 = smul.addr %s248, 2
          %s250 = scalar_lea.vmem %s1, %s249
        $region24: #{lstm_forward.3} parent=19 // pred_fallthru
          _
        // Predicated region
        $region25: #{lstm_forward.3} parent=19 // pred_check
          %p251 = pneg %p91
        $region26: #{lstm_forward.3} parent=19 // pred_check_branch
          %253 = sbr.rel (%p251) target = $region28
        $region27: #{lstm_forward.3} parent=19 // pred_region
          %p254 = scmp.lt.s32.totalorder %s24, 1
          %s255 = scalar_select %p254, %s24, 1
          %s256 = smul.addr %s255, 2
          %s257 = scalar_lea.vmem %s2, %s256
        $region28: #{lstm_forward.3} parent=19 // pred_fallthru
          _
        // Predicated region
        $region29: #{lstm_forward.3} parent=19 // pred_check
          %p258 = pneg %p117
        $region30: #{lstm_forward.3} parent=19 // pred_check_branch
          %260 = sbr.rel (%p258) target = $region32
        $region31: #{lstm_forward.3} parent=19 // pred_region
          %s261 = sand.u32 %s107, 1
          %s262 = scalar_lea.sflag [#allocation5], %s261
          %s263 = sand.u32 %s107, 1
          %s264 = smul.addr %s263, 512
          %s265 = scalar_lea.vmem [#allocation4], %s264
          %s267 = ssub.s32 8192, 8192
          %268 = vsyncadd %s262, %s267
          %s269 = smul.addr %s24, 64
          %s270 = smul.addr %s269, 128
          %s271 = scalar_lea.hbm %s3, %s270
          %s272 = sshll.u32 %s265, 4
          %s273 = int_to_ptr.vmem [resolvable:$true] %s272
          %278 = dma.hbm_to_vmem [thread:$0]  %s271, 8192, %s273, %s262, 512, 512, 32
        $region32: #{lstm_forward.3} parent=19 // pred_fallthru
          _
        // Predicated region
        $region33: #{lstm_forward.3} parent=19 // pred_check
          %p279 = pneg %p143
        $region34: #{lstm_forward.3} parent=19 // pred_check_branch
          %281 = sbr.rel (%p279) target = $region36
        $region35: #{lstm_forward.3} parent=19 // pred_region
          %s282 = sand.u32 %s133, 1
          %s283 = scalar_lea.sflag [#allocation8], %s282
          %s284 = sand.u32 %s133, 1
          %s285 = smul.addr %s284, 512
          %s286 = scalar_lea.vmem [#allocation7], %s285
          %s288 = ssub.s32 8192, 8192
          %289 = vsyncadd %s283, %s288
          %s290 = smul.addr %s24, 64
          %s291 = smul.addr %s290, 128
          %s292 = scalar_lea.hbm %s4, %s291
          %s293 = sshll.u32 %s286, 4
          %s294 = int_to_ptr.vmem [resolvable:$true] %s293
          %299 = dma.hbm_to_vmem [thread:$0]  %s292, 8192, %s294, %s283, 512, 512, 32
        $region36: #{lstm_forward.3} parent=19 // pred_fallthru
          _
        // Predicated region
        $region37: #{lstm_forward.3} parent=19 // pred_check
          %p300 = pneg %p169
        $region38: #{lstm_forward.3} parent=19 // pred_check_branch
          %302 = sbr.rel (%p300) target = $region40
        $region39: #{lstm_forward.3} parent=19 // pred_region
          %p303 = scmp.lt.s32.totalorder %s24, 1
          %s304 = scalar_select %p303, %s24, 1
          %s305 = smul.addr %s304, 4
          %s306 = scalar_lea.vmem %s5, %s305
        $region40: #{lstm_forward.3} parent=19 // pred_fallthru
          _
      $region20: #{lstm_forward.3} parent=5 // pred_fallthru
        _
      %p307 = scmp.le.s32.totalorder 1, %s24
      %p308 = scmp.lt.s32.totalorder %s24, 3
      %p309 = pnand %p307, %p308
      %p310 = pneg %p309
      // Predicated region
      $region41: #{lstm_forward.3} parent=5 // pred_check
        _
      $region42: #{lstm_forward.3} parent=5 // pred_check_branch
        %312 = sbr.rel (%p309) target = $region44
      $region43: #{lstm_forward.3} parent=5 // pred_region
        %s313 = ssub.s32 %s24, 1
        %s314 = sand.u32 %s110, 1
        %s315 = scalar_lea.sflag [#allocation5], %s314
        %s316 = sand.u32 %s110, 1
        %s317 = smul.addr %s316, 512
        %s318 = scalar_lea.vmem [#allocation4], %s317
        // Predicated region
        $region45: #{lstm_forward.3} parent=43 // pred_check
          %p319 = pneg %p123
        $region46: #{lstm_forward.3} parent=43 // pred_check_branch
          %321 = sbr.rel (%p319) target = $region48
        $region47: #{lstm_forward.3} parent=43 // pred_region
          %322 = dma.done %s315, 8192
        $region48: #{lstm_forward.3} parent=43 // pred_fallthru
          _
        %s323 = sand.u32 %s136, 1
        %s324 = scalar_lea.sflag [#allocation8], %s323
        %s325 = sand.u32 %s136, 1
        %s326 = smul.addr %s325, 512
        %s327 = scalar_lea.vmem [#allocation7], %s326
        // Predicated region
        $region49: #{lstm_forward.3} parent=43 // pred_check
          %p328 = pneg %p149
        $region50: #{lstm_forward.3} parent=43 // pred_check_branch
          %330 = sbr.rel (%p328) target = $region52
        $region51: #{lstm_forward.3} parent=43 // pred_region
          %331 = dma.done %s324, 8192
        $region52: #{lstm_forward.3} parent=43 // pred_fallthru
          _
        %p332 = pneg %p45
        %p333 = pneg %p42
        %p334 = scmp.lt.s32.totalorder %s29, 1
        %s335 = scalar_select %p334, %s29, 1
        %s336 = smul.addr %s335, 2
        %s337 = scalar_lea.vmem %s1, %s336
        %p338 = pneg %p71
        %p339 = pneg %p68
        %p340 = scmp.lt.s32.totalorder %s29, 1
        %s341 = scalar_select %p340, %s29, 1
        %s342 = smul.addr %s341, 2
        %s343 = scalar_lea.vmem %s2, %s342
        %p344 = pneg %p97
        %p345 = pneg %p94
        %s346 = sand.u32 %s110, 1
        %s347 = scalar_lea.sflag [#allocation5], %s346
        %s348 = sand.u32 %s110, 1
        %s349 = smul.addr %s348, 512
        %s350 = scalar_lea.vmem [#allocation4], %s349
        %p351 = pneg %p123
        %p352 = pneg %p120
        %s353 = sand.u32 %s136, 1
        %s354 = scalar_lea.sflag [#allocation8], %s353
        %s355 = sand.u32 %s136, 1
        %s356 = smul.addr %s355, 512
        %s357 = scalar_lea.vmem [#allocation7], %s356
        %p358 = pneg %p149
        %p359 = pneg %p146
        %p360 = scmp.lt.s32.totalorder %s29, 1
        %s361 = scalar_select %p360, %s29, 1
        %s362 = smul.addr %s361, 4
        %s363 = scalar_lea.vmem %s5, %s362
        %p364 = pneg %p175
        %p365 = pneg %p172
        %p366 = pneg %p196
        %p367 = pneg %p193
        %p368 = pneg %p222
        %p369 = pneg %p219
        %s370 = sand.u32 %s209, 1
        %s371 = scalar_lea.sflag [#allocation11], %s370
        %s372 = sand.u32 %s209, 1
        %s373 = smul.addr %s372, 2
        %s374 = scalar_lea.vmem [#allocation10], %s373
        %p375 = scmp.lt.s32.totalorder %s29, 1
        %s376 = scalar_select %p375, %s29, 1
        %s377 = smul.addr %s376, 2
        %s378 = scalar_lea.vmem %s1, %s377
        %p379 = scmp.lt.s32.totalorder %s29, 1
        %s380 = scalar_select %p379, %s29, 1
        %s381 = smul.addr %s380, 2
        %s382 = scalar_lea.vmem %s2, %s381
        %p383 = scmp.lt.s32.totalorder %s29, 1
        %s384 = scalar_select %p383, %s29, 1
        %s385 = smul.addr %s384, 4
        %s386 = scalar_lea.vmem %s5, %s385
        %v387 = vld [vmem:[%s327] sm:$0xff]
        %v388 = vld [vmem:[%s327 + $0x8] sm:$0xff]
        %v389 = vld [vmem:[%s327 + $0x10] sm:$0xff]
        %v390 = vld [vmem:[%s327 + $0x18] sm:$0xff]
        %v391 = vld [vmem:[%s327 + $0x20] sm:$0xff]
        %v392 = vld [vmem:[%s327 + $0x28] sm:$0xff]
        %v393 = vld [vmem:[%s327 + $0x30] sm:$0xff]
        %v394 = vld [vmem:[%s327 + $0x38] sm:$0xff]
        %v395 = vld [vmem:[%s327 + $0x40] sm:$0xff]
        %v396 = vld [vmem:[%s327 + $0x48] sm:$0xff]
        %v397 = vld [vmem:[%s327 + $0x50] sm:$0xff]
        %v398 = vld [vmem:[%s327 + $0x58] sm:$0xff]
        %v399 = vld [vmem:[%s327 + $0x60] sm:$0xff]
        %v400 = vld [vmem:[%s327 + $0x68] sm:$0xff]
        %v401 = vld [vmem:[%s327 + $0x70] sm:$0xff]
        %v402 = vld [vmem:[%s327 + $0x78] sm:$0xff]
        %v403 = vld [vmem:[%s327 + $0x80] sm:$0xff]
        %v404 = vld [vmem:[%s327 + $0x88] sm:$0xff]
        %v405 = vld [vmem:[%s327 + $0x90] sm:$0xff]
        %v406 = vld [vmem:[%s327 + $0x98] sm:$0xff]
        %v407 = vld [vmem:[%s327 + $0xa0] sm:$0xff]
        %v408 = vld [vmem:[%s327 + $0xa8] sm:$0xff]
        %v409 = vld [vmem:[%s327 + $0xb0] sm:$0xff]
        %v410 = vld [vmem:[%s327 + $0xb8] sm:$0xff]
        %v411 = vld [vmem:[%s327 + $0xc0] sm:$0xff]
        %v412 = vld [vmem:[%s327 + $0xc8] sm:$0xff]
        %v413 = vld [vmem:[%s327 + $0xd0] sm:$0xff]
        %v414 = vld [vmem:[%s327 + $0xd8] sm:$0xff]
        %v415 = vld [vmem:[%s327 + $0xe0] sm:$0xff]
        %v416 = vld [vmem:[%s327 + $0xe8] sm:$0xff]
        %v417 = vld [vmem:[%s327 + $0xf0] sm:$0xff]
        %v418 = vld [vmem:[%s327 + $0xf8] sm:$0xff]
        %v419 = vld [vmem:[%s327 + $0x100] sm:$0xff]
        %v420 = vld [vmem:[%s327 + $0x108] sm:$0xff]
        %v421 = vld [vmem:[%s327 + $0x110] sm:$0xff]
        %v422 = vld [vmem:[%s327 + $0x118] sm:$0xff]
        %v423 = vld [vmem:[%s327 + $0x120] sm:$0xff]
        %v424 = vld [vmem:[%s327 + $0x128] sm:$0xff]
        %v425 = vld [vmem:[%s327 + $0x130] sm:$0xff]
        %v426 = vld [vmem:[%s327 + $0x138] sm:$0xff]
        %v427 = vld [vmem:[%s327 + $0x140] sm:$0xff]
        %v428 = vld [vmem:[%s327 + $0x148] sm:$0xff]
        %v429 = vld [vmem:[%s327 + $0x150] sm:$0xff]
        %v430 = vld [vmem:[%s327 + $0x158] sm:$0xff]
        %v431 = vld [vmem:[%s327 + $0x160] sm:$0xff]
        %v432 = vld [vmem:[%s327 + $0x168] sm:$0xff]
        %v433 = vld [vmem:[%s327 + $0x170] sm:$0xff]
        %v434 = vld [vmem:[%s327 + $0x178] sm:$0xff]
        %v435 = vld [vmem:[%s327 + $0x180] sm:$0xff]
        %v436 = vld [vmem:[%s327 + $0x188] sm:$0xff]
        %v437 = vld [vmem:[%s327 + $0x190] sm:$0xff]
        %v438 = vld [vmem:[%s327 + $0x198] sm:$0xff]
        %v439 = vld [vmem:[%s327 + $0x1a0] sm:$0xff]
        %v440 = vld [vmem:[%s327 + $0x1a8] sm:$0xff]
        %v441 = vld [vmem:[%s327 + $0x1b0] sm:$0xff]
        %v442 = vld [vmem:[%s327 + $0x1b8] sm:$0xff]
        %v443 = vld [vmem:[%s327 + $0x1c0] sm:$0xff]
        %v444 = vld [vmem:[%s327 + $0x1c8] sm:$0xff]
        %v445 = vld [vmem:[%s327 + $0x1d0] sm:$0xff]
        %v446 = vld [vmem:[%s327 + $0x1d8] sm:$0xff]
        %v447 = vld [vmem:[%s327 + $0x1e0] sm:$0xff]
        %v448 = vld [vmem:[%s327 + $0x1e8] sm:$0xff]
        %v449 = vld [vmem:[%s327 + $0x1f0] sm:$0xff]
        %v450 = vld [vmem:[%s327 + $0x1f8] sm:$0xff]
        %v451 = vld [vmem:[%s386] sm:$0xf]
        %p452 = scmp.eq.s32.totalorder %s29, 0
        // Predicated region
        $region53: #{lstm_forward.3} parent=43 // pred_check
          %p453 = pneg %p452
        $region54: #{lstm_forward.3} parent=43 // pred_check_branch
          %455 = sbr.rel (%p453) target = $region56
        $region55: #{lstm_forward.3} parent=43 // pred_region
          %v456 = vld [vmem:[%s318] sm:$0xff]
          %v457 = vld [vmem:[%s318 + $0x8] sm:$0xff]
          %v458 = vld [vmem:[%s318 + $0x10] sm:$0xff]
          %v459 = vld [vmem:[%s318 + $0x18] sm:$0xff]
          %v460 = vld [vmem:[%s318 + $0x20] sm:$0xff]
          %v461 = vld [vmem:[%s318 + $0x28] sm:$0xff]
          %v462 = vld [vmem:[%s318 + $0x30] sm:$0xff]
          %v463 = vld [vmem:[%s318 + $0x38] sm:$0xff]
          %v464 = vld [vmem:[%s0] sm:$0xff]
          %v466 = vlaneseq
          %v467 = vshrl.u32 %v466, 7
          %v468 = vsub.s32 0, %v467
          %v469 = vrot.slane %v451, %v468
          %v470 = vlaneseq
          %v471 = vshrl.u32 %v470, 7
          %v472 = vsub.s32 1, %v471
          %v473 = vrot.slane %v451, %v472
          %v474 = vlaneseq
          %v475 = vshrl.u32 %v474, 7
          %v476 = vsub.s32 2, %v475
          %v477 = vrot.slane %v451, %v476
          %v478 = vlaneseq
          %v479 = vshrl.u32 %v478, 7
          %v480 = vsub.s32 3, %v479
          %v481 = vrot.slane %v451, %v480
          %vm486 = vcmask 130048
          %v488 = vsel %vm486, %v464, 0
          %490 = vmatprep.subr.mxu0 %v457
          %491 = vmatpush1.msra.mxu0 %v456
          %492 = vmatprep.subr.mxu0 %v461
          %493 = vmatpush1.msra.mxu0 %v460
          %494 = vmatprep.subr.mxu0 0.0
          %495 = vmatpush1.msra.mxu0 0.0
          %496 = vmatprep.subr.mxu0 0.0
          %497 = vmatpush1.msra.mxu0 0.0
          %498 = vmatprep.subr.mxu0 0.0
          %499 = vmatpush1.msra.mxu0 0.0
          %500 = vmatprep.subr.mxu0 0.0
          %501 = vmatpush1.msra.mxu0 0.0
          %502 = vmatprep.subr.mxu0 0.0
          %503 = vmatpush1.msra.mxu0 0.0
          %504 = vmatprep.subr.mxu0 0.0
          %505 = vmatpush1.msra.mxu0 0.0
          %506 = vmatprep.subr.mxu0 0.0
          %507 = vmatpush1.msra.mxu0 0.0
          %508 = vmatprep.subr.mxu0 0.0
          %509 = vmatpush1.msra.mxu0 0.0
          %510 = vmatprep.subr.mxu0 0.0
          %511 = vmatpush1.msra.mxu0 0.0
          %512 = vmatprep.subr.mxu0 0.0
          %513 = vmatpush1.msra.mxu0 0.0
          %514 = vmatprep.subr.mxu0 0.0
          %515 = vmatpush1.msra.mxu0 0.0
          %516 = vmatprep.subr.mxu0 0.0
          %517 = vmatpush1.msra.mxu0 0.0
          %518 = vmatprep.subr.mxu0 0.0
          %519 = vmatpush1.msra.mxu0 0.0
          %520 = vmatprep.subr.mxu0 0.0
          %521 = vmatpush1.msra.mxu0 0.0
          %522 = vmatprep.subr.mxu0 0.0
          %523 = vmatpush1.msra.mxu0 0.0
          %524 = vmatprep.subr.mxu0 0.0
          %525 = vmatpush1.msra.mxu0 0.0
          %526 = vmatprep.subr.mxu0 0.0
          %527 = vmatpush1.msra.mxu0 0.0
          %528 = vmatprep.subr.mxu0 0.0
          %529 = vmatpush1.msra.mxu0 0.0
          %530 = vmatprep.subr.mxu0 0.0
          %531 = vmatpush1.msra.mxu0 0.0
          %532 = vmatprep.subr.mxu0 0.0
          %533 = vmatpush1.msra.mxu0 0.0
          %534 = vmatprep.subr.mxu0 0.0
          %535 = vmatpush1.msra.mxu0 0.0
          %536 = vmatprep.subr.mxu0 0.0
          %537 = vmatpush1.msra.mxu0 0.0
          %538 = vmatprep.subr.mxu0 0.0
          %539 = vmatpush1.msra.mxu0 0.0
          %540 = vmatprep.subr.mxu0 0.0
          %541 = vmatpush1.msra.mxu0 0.0
          %542 = vmatprep.subr.mxu0 0.0
          %543 = vmatpush1.msra.mxu0 0.0
          %544 = vmatprep.subr.mxu0 0.0
          %545 = vmatpush1.msra.mxu0 0.0
          %546 = vmatprep.subr.mxu0 0.0
          %547 = vmatpush1.msra.mxu0 0.0
          %548 = vmatprep.subr.mxu0 0.0
          %549 = vmatpush1.msra.mxu0 0.0
          %550 = vmatprep.subr.mxu0 0.0
          %551 = vmatpush1.msra.mxu0 0.0
          %552 = vmatprep.subr.mxu0 0.0
          %553 = vmatpush1.msra.mxu0 0.0
          %554 = vmatprep.mubr.f32.mxu0 0.0
          %555 = vmatmul.mubr.f32.gmra.mrb[0].mxu0 %v488
          %v556 = vpop.f32.mrb[0].mxu0
          %v557 = vadd.f32 %v469, %v556
          %v558 = vpop.f32.mrb[0].mxu0
          %v559 = vadd.f32 %v473, %v558
          %560 = vdwg.mxu0
          %561 = vmatprep.subr.mxu0 %v459
          %562 = vmatpush1.msra.mxu0 %v458
          %563 = vmatprep.subr.mxu0 %v463
          %564 = vmatpush1.msra.mxu0 %v462
          %565 = vmatprep.subr.mxu0 0.0
          %566 = vmatpush1.msra.mxu0 0.0
          %567 = vmatprep.subr.mxu0 0.0
          %568 = vmatpush1.msra.mxu0 0.0
          %569 = vmatprep.subr.mxu0 0.0
          %570 = vmatpush1.msra.mxu0 0.0
          %571 = vmatprep.subr.mxu0 0.0
          %572 = vmatpush1.msra.mxu0 0.0
          %573 = vmatprep.subr.mxu0 0.0
          %574 = vmatpush1.msra.mxu0 0.0
          %575 = vmatprep.subr.mxu0 0.0
          %576 = vmatpush1.msra.mxu0 0.0
          %577 = vmatprep.subr.mxu0 0.0
          %578 = vmatpush1.msra.mxu0 0.0
          %579 = vmatprep.subr.mxu0 0.0
          %580 = vmatpush1.msra.mxu0 0.0
          %581 = vmatprep.subr.mxu0 0.0
          %582 = vmatpush1.msra.mxu0 0.0
          %583 = vmatprep.subr.mxu0 0.0
          %584 = vmatpush1.msra.mxu0 0.0
          %585 = vmatprep.subr.mxu0 0.0
          %586 = vmatpush1.msra.mxu0 0.0
          %587 = vmatprep.subr.mxu0 0.0
          %588 = vmatpush1.msra.mxu0 0.0
          %589 = vmatprep.subr.mxu0 0.0
          %590 = vmatpush1.msra.mxu0 0.0
          %591 = vmatprep.subr.mxu0 0.0
          %592 = vmatpush1.msra.mxu0 0.0
          %593 = vmatprep.subr.mxu0 0.0
          %594 = vmatpush1.msra.mxu0 0.0
          %595 = vmatprep.subr.mxu0 0.0
          %596 = vmatpush1.msra.mxu0 0.0
          %597 = vmatprep.subr.mxu0 0.0
          %598 = vmatpush1.msra.mxu0 0.0
          %599 = vmatprep.subr.mxu0 0.0
          %600 = vmatpush1.msra.mxu0 0.0
          %601 = vmatprep.subr.mxu0 0.0
          %602 = vmatpush1.msra.mxu0 0.0
          %603 = vmatprep.subr.mxu0 0.0
          %604 = vmatpush1.msra.mxu0 0.0
          %605 = vmatprep.subr.mxu0 0.0
          %606 = vmatpush1.msra.mxu0 0.0
          %607 = vmatprep.subr.mxu0 0.0
          %608 = vmatpush1.msra.mxu0 0.0
          %609 = vmatprep.subr.mxu0 0.0
          %610 = vmatpush1.msra.mxu0 0.0
          %611 = vmatprep.subr.mxu0 0.0
          %612 = vmatpush1.msra.mxu0 0.0
          %613 = vmatprep.subr.mxu0 0.0
          %614 = vmatpush1.msra.mxu0 0.0
          %615 = vmatprep.subr.mxu0 0.0
          %616 = vmatpush1.msra.mxu0 0.0
          %617 = vmatprep.subr.mxu0 0.0
          %618 = vmatpush1.msra.mxu0 0.0
          %619 = vmatprep.subr.mxu0 0.0
          %620 = vmatpush1.msra.mxu0 0.0
          %621 = vmatprep.subr.mxu0 0.0
          %622 = vmatpush1.msra.mxu0 0.0
          %623 = vmatprep.subr.mxu0 0.0
          %624 = vmatpush1.msra.mxu0 0.0
          %625 = vmatprep.mubr.f32.mxu0 0.0
          %626 = vmatmul.mubr.f32.gmra.mrb[0].mxu0 %v488
          %v627 = vpop.f32.mrb[0].mxu0
          %v628 = vadd.f32 %v477, %v627
          %v629 = vpop.f32.mrb[0].mxu0
          %v630 = vadd.f32 %v481, %v629
          %631 = vdwg.mxu0
          %v636 = vcombine.low %v557, %v559
          %v637 = vcombine.high %v557, %v559
          %v638 = vcombine.low %v628, %v630
          %v639 = vcombine.high %v628, %v630
          %v641 = vunpack.c.l.s4 1966171168
          %v642 = vunpack.c.0.s8 %v641
          %v643 = vlaneseq
          %v644 = vshrl.u32 %v643, 7
          %v645 = vsub.s32 %v642, %v644
          %v646 = vrot.slane %v636, %v645
          %v648 = vunpack.c.l.s4 1966171168
          %v649 = vunpack.c.0.s8 %v648
          %v650 = vlaneseq
          %v651 = vshrl.u32 %v650, 7
          %v652 = vsub.s32 %v649, %v651
          %v653 = vrot.slane %v637, %v652
          %v655 = vunpack.c.l.s4 1966171168
          %v656 = vunpack.c.0.s8 %v655
          %v657 = vlaneseq
          %v658 = vshrl.u32 %v657, 7
          %v659 = vsub.s32 %v656, %v658
          %v660 = vrot.slane %v638, %v659
          %v662 = vunpack.c.l.s4 1966171168
          %v663 = vunpack.c.0.s8 %v662
          %v664 = vlaneseq
          %v665 = vshrl.u32 %v664, 7
          %v666 = vsub.s32 %v663, %v665
          %v667 = vrot.slane %v639, %v666
          %v668 = vcombine.low %v646, %v660
          %v669 = vcombine.high %v646, %v660
          %v670 = vcombine.low %v653, %v667
          %v671 = vcombine.high %v653, %v667
          %v673 = vunpack.c.l.s4 1966171168
          %v674 = vunpack.c.0.s8 %v673
          %v675 = vlaneseq
          %v676 = vshrl.u32 %v675, 7
          %v677 = vsub.s32 %v674, %v676
          %v678 = vrot.slane %v668, %v677
          %v680 = vunpack.c.l.s4 1966171168
          %v681 = vunpack.c.0.s8 %v680
          %v682 = vlaneseq
          %v683 = vshrl.u32 %v682, 7
          %v684 = vsub.s32 %v681, %v683
          %v685 = vrot.slane %v670, %v684
          %v687 = vunpack.c.l.s4 1966171168
          %v688 = vunpack.c.0.s8 %v687
          %v689 = vlaneseq
          %v690 = vshrl.u32 %v689, 7
          %v691 = vsub.s32 %v688, %v690
          %v692 = vrot.slane %v669, %v691
          %v694 = vunpack.c.l.s4 1966171168
          %v695 = vunpack.c.0.s8 %v694
          %v696 = vlaneseq
          %v697 = vshrl.u32 %v696, 7
          %v698 = vsub.s32 %v695, %v697
          %v699 = vrot.slane %v671, %v698
          %v700 = vcombine.high %v678, %v678
          %v701 = vcombine.high %v685, %v685
          %v702 = vcombine.high %v692, %v692
          %v703 = vcombine.high %v699, %v699
          %v712 = vlaneseq
          %vm713 = vcmp.ge.s32.totalorder %v712, 0
          %vm714 = vcmp.lt.s32.totalorder %v712, 512
          %vm715 = vmand %vm713, %vm714
          %716 = vst.msk [vmem:[#allocation2] ss:$2 sm:$0xf] %vm715, %v678
          %s717 = scalar_lea.vmem [#allocation2], 8
          %718 = vst.msk [vmem:[%s717] ss:$2 sm:$0xf] %vm715, %v692
          %s719 = scalar_lea.vmem [#allocation2], 16
          %720 = vst.msk [vmem:[%s719] ss:$2 sm:$0xf] %vm715, %v700
          %s721 = scalar_lea.vmem [#allocation2], 24
          %722 = vst.msk [vmem:[%s721] ss:$2 sm:$0xf] %vm715, %v702
          %s723 = scalar_lea.vmem [#allocation2], 32
          %724 = vst.msk [vmem:[%s723] ss:$2 sm:$0xf] %vm715, %v685
          %s725 = scalar_lea.vmem [#allocation2], 40
          %726 = vst.msk [vmem:[%s725] ss:$2 sm:$0xf] %vm715, %v699
          %s727 = scalar_lea.vmem [#allocation2], 48
          %728 = vst.msk [vmem:[%s727] ss:$2 sm:$0xf] %vm715, %v701
          %s729 = scalar_lea.vmem [#allocation2], 56
          %730 = vst.msk [vmem:[%s729] ss:$2 sm:$0xf] %vm715, %v703
          %s731 = scalar_lea.vmem %s0, 8
          %v732 = vld [vmem:[%s731] sm:$0xff]
          %v734 = vsel %vm486, %v732, 0
          %736 = vmatprep.subr.mxu0 %v457
          %737 = vmatpush1.msra.mxu0 %v456
          %738 = vmatprep.subr.mxu0 %v461
          %739 = vmatpush1.msra.mxu0 %v460
          %740 = vmatprep.subr.mxu0 0.0
          %741 = vmatpush1.msra.mxu0 0.0
          %742 = vmatprep.subr.mxu0 0.0
          %743 = vmatpush1.msra.mxu0 0.0
          %744 = vmatprep.subr.mxu0 0.0
          %745 = vmatpush1.msra.mxu0 0.0
          %746 = vmatprep.subr.mxu0 0.0
          %747 = vmatpush1.msra.mxu0 0.0
          %748 = vmatprep.subr.mxu0 0.0
          %749 = vmatpush1.msra.mxu0 0.0
          %750 = vmatprep.subr.mxu0 0.0
          %751 = vmatpush1.msra.mxu0 0.0
          %752 = vmatprep.subr.mxu0 0.0
          %753 = vmatpush1.msra.mxu0 0.0
          %754 = vmatprep.subr.mxu0 0.0
          %755 = vmatpush1.msra.mxu0 0.0
          %756 = vmatprep.subr.mxu0 0.0
          %757 = vmatpush1.msra.mxu0 0.0
          %758 = vmatprep.subr.mxu0 0.0
          %759 = vmatpush1.msra.mxu0 0.0
          %760 = vmatprep.subr.mxu0 0.0
          %761 = vmatpush1.msra.mxu0 0.0
          %762 = vmatprep.subr.mxu0 0.0
          %763 = vmatpush1.msra.mxu0 0.0
          %764 = vmatprep.subr.mxu0 0.0
          %765 = vmatpush1.msra.mxu0 0.0
          %766 = vmatprep.subr.mxu0 0.0
          %767 = vmatpush1.msra.mxu0 0.0
          %768 = vmatprep.subr.mxu0 0.0
          %769 = vmatpush1.msra.mxu0 0.0
          %770 = vmatprep.subr.mxu0 0.0
          %771 = vmatpush1.msra.mxu0 0.0
          %772 = vmatprep.subr.mxu0 0.0
          %773 = vmatpush1.msra.mxu0 0.0
          %774 = vmatprep.subr.mxu0 0.0
          %775 = vmatpush1.msra.mxu0 0.0
          %776 = vmatprep.subr.mxu0 0.0
          %777 = vmatpush1.msra.mxu0 0.0
          %778 = vmatprep.subr.mxu0 0.0
          %779 = vmatpush1.msra.mxu0 0.0
          %780 = vmatprep.subr.mxu0 0.0
          %781 = vmatpush1.msra.mxu0 0.0
          %782 = vmatprep.subr.mxu0 0.0
          %783 = vmatpush1.msra.mxu0 0.0
          %784 = vmatprep.subr.mxu0 0.0
          %785 = vmatpush1.msra.mxu0 0.0
          %786 = vmatprep.subr.mxu0 0.0
          %787 = vmatpush1.msra.mxu0 0.0
          %788 = vmatprep.subr.mxu0 0.0
          %789 = vmatpush1.msra.mxu0 0.0
          %790 = vmatprep.subr.mxu0 0.0
          %791 = vmatpush1.msra.mxu0 0.0
          %792 = vmatprep.subr.mxu0 0.0
          %793 = vmatpush1.msra.mxu0 0.0
          %794 = vmatprep.subr.mxu0 0.0
          %795 = vmatpush1.msra.mxu0 0.0
          %796 = vmatprep.subr.mxu0 0.0
          %797 = vmatpush1.msra.mxu0 0.0
          %798 = vmatprep.subr.mxu0 0.0
          %799 = vmatpush1.msra.mxu0 0.0
          %800 = vmatprep.mubr.f32.mxu0 0.0
          %801 = vmatmul.mubr.f32.gmra.mrb[0].mxu0 %v734
          %v802 = vpop.f32.mrb[0].mxu0
          %v803 = vadd.f32 %v469, %v802
          %v804 = vpop.f32.mrb[0].mxu0
          %v805 = vadd.f32 %v473, %v804
          %806 = vdwg.mxu0
          %807 = vmatprep.subr.mxu0 %v459
          %808 = vmatpush1.msra.mxu0 %v458
          %809 = vmatprep.subr.mxu0 %v463
          %810 = vmatpush1.msra.mxu0 %v462
          %811 = vmatprep.subr.mxu0 0.0
          %812 = vmatpush1.msra.mxu0 0.0
          %813 = vmatprep.subr.mxu0 0.0
          %814 = vmatpush1.msra.mxu0 0.0
          %815 = vmatprep.subr.mxu0 0.0
          %816 = vmatpush1.msra.mxu0 0.0
          %817 = vmatprep.subr.mxu0 0.0
          %818 = vmatpush1.msra.mxu0 0.0
          %819 = vmatprep.subr.mxu0 0.0
          %820 = vmatpush1.msra.mxu0 0.0
          %821 = vmatprep.subr.mxu0 0.0
          %822 = vmatpush1.msra.mxu0 0.0
          %823 = vmatprep.subr.mxu0 0.0
          %824 = vmatpush1.msra.mxu0 0.0
          %825 = vmatprep.subr.mxu0 0.0
          %826 = vmatpush1.msra.mxu0 0.0
          %827 = vmatprep.subr.mxu0 0.0
          %828 = vmatpush1.msra.mxu0 0.0
          %829 = vmatprep.subr.mxu0 0.0
          %830 = vmatpush1.msra.mxu0 0.0
          %831 = vmatprep.subr.mxu0 0.0
          %832 = vmatpush1.msra.mxu0 0.0
          %833 = vmatprep.subr.mxu0 0.0
          %834 = vmatpush1.msra.mxu0 0.0
          %835 = vmatprep.subr.mxu0 0.0
          %836 = vmatpush1.msra.mxu0 0.0
          %837 = vmatprep.subr.mxu0 0.0
          %838 = vmatpush1.msra.mxu0 0.0
          %839 = vmatprep.subr.mxu0 0.0
          %840 = vmatpush1.msra.mxu0 0.0
          %841 = vmatprep.subr.mxu0 0.0
          %842 = vmatpush1.msra.mxu0 0.0
          %843 = vmatprep.subr.mxu0 0.0
          %844 = vmatpush1.msra.mxu0 0.0
          %845 = vmatprep.subr.mxu0 0.0
          %846 = vmatpush1.msra.mxu0 0.0
          %847 = vmatprep.subr.mxu0 0.0
          %848 = vmatpush1.msra.mxu0 0.0
          %849 = vmatprep.subr.mxu0 0.0
          %850 = vmatpush1.msra.mxu0 0.0
          %851 = vmatprep.subr.mxu0 0.0
          %852 = vmatpush1.msra.mxu0 0.0
          %853 = vmatprep.subr.mxu0 0.0
          %854 = vmatpush1.msra.mxu0 0.0
          %855 = vmatprep.subr.mxu0 0.0
          %856 = vmatpush1.msra.mxu0 0.0
          %857 = vmatprep.subr.mxu0 0.0
          %858 = vmatpush1.msra.mxu0 0.0
          %859 = vmatprep.subr.mxu0 0.0
          %860 = vmatpush1.msra.mxu0 0.0
          %861 = vmatprep.subr.mxu0 0.0
          %862 = vmatpush1.msra.mxu0 0.0
          %863 = vmatprep.subr.mxu0 0.0
          %864 = vmatpush1.msra.mxu0 0.0
          %865 = vmatprep.subr.mxu0 0.0
          %866 = vmatpush1.msra.mxu0 0.0
          %867 = vmatprep.subr.mxu0 0.0
          %868 = vmatpush1.msra.mxu0 0.0
          %869 = vmatprep.subr.mxu0 0.0
          %870 = vmatpush1.msra.mxu0 0.0
          %871 = vmatprep.mubr.f32.mxu0 0.0
          %872 = vmatmul.mubr.f32.gmra.mrb[0].mxu0 %v734
          %v873 = vpop.f32.mrb[0].mxu0
          %v874 = vadd.f32 %v477, %v873
          %v875 = vpop.f32.mrb[0].mxu0
          %v876 = vadd.f32 %v481, %v875
          %877 = vdwg.mxu0
          %v882 = vcombine.low %v803, %v805
          %v883 = vcombine.high %v803, %v805
          %v884 = vcombine.low %v874, %v876
          %v885 = vcombine.high %v874, %v876
          %v887 = vunpack.c.l.s4 1966171168
          %v888 = vunpack.c.0.s8 %v887
          %v889 = vlaneseq
          %v890 = vshrl.u32 %v889, 7
          %v891 = vsub.s32 %v888, %v890
          %v892 = vrot.slane %v882, %v891
          %v894 = vunpack.c.l.s4 1966171168
          %v895 = vunpack.c.0.s8 %v894
          %v896 = vlaneseq
          %v897 = vshrl.u32 %v896, 7
          %v898 = vsub.s32 %v895, %v897
          %v899 = vrot.slane %v883, %v898
          %v901 = vunpack.c.l.s4 1966171168
          %v902 = vunpack.c.0.s8 %v901
          %v903 = vlaneseq
          %v904 = vshrl.u32 %v903, 7
          %v905 = vsub.s32 %v902, %v904
          %v906 = vrot.slane %v884, %v905
          %v908 = vunpack.c.l.s4 1966171168
          %v909 = vunpack.c.0.s8 %v908
          %v910 = vlaneseq
          %v911 = vshrl.u32 %v910, 7
          %v912 = vsub.s32 %v909, %v911
          %v913 = vrot.slane %v885, %v912
          %v914 = vcombine.low %v892, %v906
          %v915 = vcombine.high %v892, %v906
          %v916 = vcombine.low %v899, %v913
          %v917 = vcombine.high %v899, %v913
          %v919 = vunpack.c.l.s4 1966171168
          %v920 = vunpack.c.0.s8 %v919
          %v921 = vlaneseq
          %v922 = vshrl.u32 %v921, 7
          %v923 = vsub.s32 %v920, %v922
          %v924 = vrot.slane %v914, %v923
          %v926 = vunpack.c.l.s4 1966171168
          %v927 = vunpack.c.0.s8 %v926
          %v928 = vlaneseq
          %v929 = vshrl.u32 %v928, 7
          %v930 = vsub.s32 %v927, %v929
          %v931 = vrot.slane %v916, %v930
          %v933 = vunpack.c.l.s4 1966171168
          %v934 = vunpack.c.0.s8 %v933
          %v935 = vlaneseq
          %v936 = vshrl.u32 %v935, 7
          %v937 = vsub.s32 %v934, %v936
          %v938 = vrot.slane %v915, %v937
          %v940 = vunpack.c.l.s4 1966171168
          %v941 = vunpack.c.0.s8 %v940
          %v942 = vlaneseq
          %v943 = vshrl.u32 %v942, 7
          %v944 = vsub.s32 %v941, %v943
          %v945 = vrot.slane %v917, %v944
          %v946 = vcombine.high %v924, %v924
          %v947 = vcombine.high %v931, %v931
          %v948 = vcombine.high %v938, %v938
          %v949 = vcombine.high %v945, %v945
          %s958 = scalar_lea.vmem [#allocation2], 1
          %959 = vst.msk [vmem:[%s958] ss:$2 sm:$0xf] %vm715, %v924
          %s960 = scalar_lea.vmem [#allocation2], 9
          %961 = vst.msk [vmem:[%s960] ss:$2 sm:$0xf] %vm715, %v938
          %s962 = scalar_lea.vmem [#allocation2], 17
          %963 = vst.msk [vmem:[%s962] ss:$2 sm:$0xf] %vm715, %v946
          %s964 = scalar_lea.vmem [#allocation2], 25
          %965 = vst.msk [vmem:[%s964] ss:$2 sm:$0xf] %vm715, %v948
          %s966 = scalar_lea.vmem [#allocation2], 33
          %967 = vst.msk [vmem:[%s966] ss:$2 sm:$0xf] %vm715, %v931
          %s968 = scalar_lea.vmem [#allocation2], 41
          %969 = vst.msk [vmem:[%s968] ss:$2 sm:$0xf] %vm715, %v945
          %s970 = scalar_lea.vmem [#allocation2], 49
          %971 = vst.msk [vmem:[%s970] ss:$2 sm:$0xf] %vm715, %v947
          %s972 = scalar_lea.vmem [#allocation2], 57
          %973 = vst.msk [vmem:[%s972] ss:$2 sm:$0xf] %vm715, %v949
        $region56: #{lstm_forward.3} parent=43 // pred_fallthru
          _
        %p974 = scmp.gt.s32.totalorder %s29, 0
        // Predicated region
        $region57: #{lstm_forward.3} parent=43 // pred_check
          %p975 = pneg %p974
        $region58: #{lstm_forward.3} parent=43 // pred_check_branch
          %977 = sbr.rel (%p975) target = $region60
        $region59: #{lstm_forward.3} parent=43 // pred_region
          %v978 = vld [vmem:[%s318] sm:$0xff]
          %v979 = vld [vmem:[%s318 + $0x8] sm:$0xff]
          %v980 = vld [vmem:[%s318 + $0x10] sm:$0xff]
          %v981 = vld [vmem:[%s318 + $0x18] sm:$0xff]
          %v982 = vld [vmem:[%s318 + $0x20] sm:$0xff]
          %v983 = vld [vmem:[%s318 + $0x28] sm:$0xff]
          %v984 = vld [vmem:[%s318 + $0x30] sm:$0xff]
          %v985 = vld [vmem:[%s318 + $0x38] sm:$0xff]
          %v986 = vld [vmem:[%s318 + $0x40] sm:$0xff]
          %v987 = vld [vmem:[%s318 + $0x48] sm:$0xff]
          %v988 = vld [vmem:[%s318 + $0x50] sm:$0xff]
          %v989 = vld [vmem:[%s318 + $0x58] sm:$0xff]
          %v990 = vld [vmem:[%s318 + $0x60] sm:$0xff]
          %v991 = vld [vmem:[%s318 + $0x68] sm:$0xff]
          %v992 = vld [vmem:[%s318 + $0x70] sm:$0xff]
          %v993 = vld [vmem:[%s318 + $0x78] sm:$0xff]
          %v994 = vld [vmem:[%s318 + $0x80] sm:$0xff]
          %v995 = vld [vmem:[%s318 + $0x88] sm:$0xff]
          %v996 = vld [vmem:[%s318 + $0x90] sm:$0xff]
          %v997 = vld [vmem:[%s318 + $0x98] sm:$0xff]
          %v998 = vld [vmem:[%s318 + $0xa0] sm:$0xff]
          %v999 = vld [vmem:[%s318 + $0xa8] sm:$0xff]
          %v1000 = vld [vmem:[%s318 + $0xb0] sm:$0xff]
          %v1001 = vld [vmem:[%s318 + $0xb8] sm:$0xff]
          %v1002 = vld [vmem:[%s318 + $0xc0] sm:$0xff]
          %v1003 = vld [vmem:[%s318 + $0xc8] sm:$0xff]
          %v1004 = vld [vmem:[%s318 + $0xd0] sm:$0xff]
          %v1005 = vld [vmem:[%s318 + $0xd8] sm:$0xff]
          %v1006 = vld [vmem:[%s318 + $0xe0] sm:$0xff]
          %v1007 = vld [vmem:[%s318 + $0xe8] sm:$0xff]
          %v1008 = vld [vmem:[%s318 + $0xf0] sm:$0xff]
          %v1009 = vld [vmem:[%s318 + $0xf8] sm:$0xff]
          %v1010 = vld [vmem:[%s318 + $0x100] sm:$0xff]
          %v1011 = vld [vmem:[%s318 + $0x108] sm:$0xff]
          %v1012 = vld [vmem:[%s318 + $0x110] sm:$0xff]
          %v1013 = vld [vmem:[%s318 + $0x118] sm:$0xff]
          %v1014 = vld [vmem:[%s318 + $0x120] sm:$0xff]
          %v1015 = vld [vmem:[%s318 + $0x128] sm:$0xff]
          %v1016 = vld [vmem:[%s318 + $0x130] sm:$0xff]
          %v1017 = vld [vmem:[%s318 + $0x138] sm:$0xff]
          %v1018 = vld [vmem:[%s318 + $0x140] sm:$0xff]
          %v1019 = vld [vmem:[%s318 + $0x148] sm:$0xff]
          %v1020 = vld [vmem:[%s318 + $0x150] sm:$0xff]
          %v1021 = vld [vmem:[%s318 + $0x158] sm:$0xff]
          %v1022 = vld [vmem:[%s318 + $0x160] sm:$0xff]
          %v1023 = vld [vmem:[%s318 + $0x168] sm:$0xff]
          %v1024 = vld [vmem:[%s318 + $0x170] sm:$0xff]
          %v1025 = vld [vmem:[%s318 + $0x178] sm:$0xff]
          %v1026 = vld [vmem:[%s318 + $0x180] sm:$0xff]
          %v1027 = vld [vmem:[%s318 + $0x188] sm:$0xff]
          %v1028 = vld [vmem:[%s318 + $0x190] sm:$0xff]
          %v1029 = vld [vmem:[%s318 + $0x198] sm:$0xff]
          %v1030 = vld [vmem:[%s318 + $0x1a0] sm:$0xff]
          %v1031 = vld [vmem:[%s318 + $0x1a8] sm:$0xff]
          %v1032 = vld [vmem:[%s318 + $0x1b0] sm:$0xff]
          %v1033 = vld [vmem:[%s318 + $0x1b8] sm:$0xff]
          %v1034 = vld [vmem:[%s318 + $0x1c0] sm:$0xff]
          %v1035 = vld [vmem:[%s318 + $0x1c8] sm:$0xff]
          %v1036 = vld [vmem:[%s318 + $0x1d0] sm:$0xff]
          %v1037 = vld [vmem:[%s318 + $0x1d8] sm:$0xff]
          %v1038 = vld [vmem:[%s318 + $0x1e0] sm:$0xff]
          %v1039 = vld [vmem:[%s318 + $0x1e8] sm:$0xff]
          %v1040 = vld [vmem:[%s318 + $0x1f0] sm:$0xff]
          %v1041 = vld [vmem:[%s318 + $0x1f8] sm:$0xff]
          %v1042 = vld [vmem:[#allocation3] sm:$0x1]
          %v1043 = vld [vmem:[#allocation3 + $0x2] sm:$0x1]
          %v1044 = vld [vmem:[#allocation3 + $0x4] sm:$0x1]
          %v1045 = vld [vmem:[#allocation3 + $0x6] sm:$0x1]
          %v1046 = vld [vmem:[#allocation3 + $0x8] sm:$0x1]
          %v1047 = vld [vmem:[#allocation3 + $0xa] sm:$0x1]
          %v1048 = vld [vmem:[#allocation3 + $0xc] sm:$0x1]
          %v1049 = vld [vmem:[#allocation3 + $0xe] sm:$0x1]
          %v1051 = vlaneseq
          %v1052 = vshrl.u32 %v1051, 7
          %v1053 = vsub.s32 0, %v1052
          %v1054 = vrot.slane %v451, %v1053
          %v1055 = vlaneseq
          %v1056 = vshrl.u32 %v1055, 7
          %v1057 = vsub.s32 1, %v1056
          %v1058 = vrot.slane %v451, %v1057
          %v1059 = vlaneseq
          %v1060 = vshrl.u32 %v1059, 7
          %v1061 = vsub.s32 2, %v1060
          %v1062 = vrot.slane %v451, %v1061
          %v1063 = vlaneseq
          %v1064 = vshrl.u32 %v1063, 7
          %v1065 = vsub.s32 3, %v1064
          %v1066 = vrot.slane %v451, %v1065
          %v1079 = vrot.slane %v1043, 7
          %vm1080 = vcmask 1041409
          %v1081 = vsel %vm1080, %v1079, %v1042
          %v1082 = vrot.slane %v1044, 6
          %vm1083 = vcmask 1042434
          %v1084 = vsel %vm1083, %v1082, %v1081
          %v1085 = vrot.slane %v1045, 5
          %vm1086 = vcmask 1043459
          %v1087 = vsel %vm1086, %v1085, %v1084
          %v1088 = vrot.slane %v1046, 4
          %vm1089 = vcmask 1044484
          %v1090 = vsel %vm1089, %v1088, %v1087
          %v1091 = vrot.slane %v1047, 3
          %vm1092 = vcmask 1045509
          %v1093 = vsel %vm1092, %v1091, %v1090
          %v1094 = vrot.slane %v1048, 2
          %vm1095 = vcmask 1046534
          %v1096 = vsel %vm1095, %v1094, %v1093
          %v1097 = vrot.slane %v1049, 1
          %vm1098 = vcmask 1047559
          %v1099 = vsel %vm1098, %v1097, %v1096
          %1101 = vmatprep.subr.mxu0 %v979
          %1102 = vmatpush1.msra.mxu0 %v978
          %1103 = vmatprep.subr.mxu0 %v983
          %1104 = vmatpush1.msra.mxu0 %v982
          %1105 = vmatprep.subr.mxu0 %v987
          %1106 = vmatpush1.msra.mxu0 %v986
          %1107 = vmatprep.subr.mxu0 %v991
          %1108 = vmatpush1.msra.mxu0 %v990
          %1109 = vmatprep.subr.mxu0 %v995
          %1110 = vmatpush1.msra.mxu0 %v994
          %1111 = vmatprep.subr.mxu0 %v999
          %1112 = vmatpush1.msra.mxu0 %v998
          %1113 = vmatprep.subr.mxu0 %v1003
          %1114 = vmatpush1.msra.mxu0 %v1002
          %1115 = vmatprep.subr.mxu0 %v1007
          %1116 = vmatpush1.msra.mxu0 %v1006
          %1117 = vmatprep.subr.mxu0 %v1011
          %1118 = vmatpush1.msra.mxu0 %v1010
          %1119 = vmatprep.subr.mxu0 %v1015
          %1120 = vmatpush1.msra.mxu0 %v1014
          %1121 = vmatprep.subr.mxu0 %v1019
          %1122 = vmatpush1.msra.mxu0 %v1018
          %1123 = vmatprep.subr.mxu0 %v1023
          %1124 = vmatpush1.msra.mxu0 %v1022
          %1125 = vmatprep.subr.mxu0 %v1027
          %1126 = vmatpush1.msra.mxu0 %v1026
          %1127 = vmatprep.subr.mxu0 %v1031
          %1128 = vmatpush1.msra.mxu0 %v1030
          %1129 = vmatprep.subr.mxu0 %v1035
          %1130 = vmatpush1.msra.mxu0 %v1034
          %1131 = vmatprep.subr.mxu0 %v1039
          %1132 = vmatpush1.msra.mxu0 %v1038
          %1133 = vmatprep.subr.mxu0 0.0
          %1134 = vmatpush1.msra.mxu0 0.0
          %1135 = vmatprep.subr.mxu0 0.0
          %1136 = vmatpush1.msra.mxu0 0.0
          %1137 = vmatprep.subr.mxu0 0.0
          %1138 = vmatpush1.msra.mxu0 0.0
          %1139 = vmatprep.subr.mxu0 0.0
          %1140 = vmatpush1.msra.mxu0 0.0
          %1141 = vmatprep.subr.mxu0 0.0
          %1142 = vmatpush1.msra.mxu0 0.0
          %1143 = vmatprep.subr.mxu0 0.0
          %1144 = vmatpush1.msra.mxu0 0.0
          %1145 = vmatprep.subr.mxu0 0.0
          %1146 = vmatpush1.msra.mxu0 0.0
          %1147 = vmatprep.subr.mxu0 0.0
          %1148 = vmatpush1.msra.mxu0 0.0
          %1149 = vmatprep.subr.mxu0 0.0
          %1150 = vmatpush1.msra.mxu0 0.0
          %1151 = vmatprep.subr.mxu0 0.0
          %1152 = vmatpush1.msra.mxu0 0.0
          %1153 = vmatprep.subr.mxu0 0.0
          %1154 = vmatpush1.msra.mxu0 0.0
          %1155 = vmatprep.subr.mxu0 0.0
          %1156 = vmatpush1.msra.mxu0 0.0
          %1157 = vmatprep.subr.mxu0 0.0
          %1158 = vmatpush1.msra.mxu0 0.0
          %1159 = vmatprep.subr.mxu0 0.0
          %1160 = vmatpush1.msra.mxu0 0.0
          %1161 = vmatprep.subr.mxu0 0.0
          %1162 = vmatpush1.msra.mxu0 0.0
          %1163 = vmatprep.subr.mxu0 0.0
          %1164 = vmatpush1.msra.mxu0 0.0
          %1165 = vmatprep.mubr.f32.mxu0 0.0
          %1166 = vmatmul.mubr.f32.gmra.mrb[0].mxu0 %v1099
          %v1167 = vpop.f32.mrb[0].mxu0
          %v1168 = vadd.f32 %v1054, %v1167
          %v1169 = vpop.f32.mrb[0].mxu0
          %v1170 = vadd.f32 %v1058, %v1169
          %1171 = vdwg.mxu0
          %1172 = vmatprep.subr.mxu0 %v981
          %1173 = vmatpush1.msra.mxu0 %v980
          %1174 = vmatprep.subr.mxu0 %v985
          %1175 = vmatpush1.msra.mxu0 %v984
          %1176 = vmatprep.subr.mxu0 %v989
          %1177 = vmatpush1.msra.mxu0 %v988
          %1178 = vmatprep.subr.mxu0 %v993
          %1179 = vmatpush1.msra.mxu0 %v992
          %1180 = vmatprep.subr.mxu0 %v997
          %1181 = vmatpush1.msra.mxu0 %v996
          %1182 = vmatprep.subr.mxu0 %v1001
          %1183 = vmatpush1.msra.mxu0 %v1000
          %1184 = vmatprep.subr.mxu0 %v1005
          %1185 = vmatpush1.msra.mxu0 %v1004
          %1186 = vmatprep.subr.mxu0 %v1009
          %1187 = vmatpush1.msra.mxu0 %v1008
          %1188 = vmatprep.subr.mxu0 %v1013
          %1189 = vmatpush1.msra.mxu0 %v1012
          %1190 = vmatprep.subr.mxu0 %v1017
          %1191 = vmatpush1.msra.mxu0 %v1016
          %1192 = vmatprep.subr.mxu0 %v1021
          %1193 = vmatpush1.msra.mxu0 %v1020
          %1194 = vmatprep.subr.mxu0 %v1025
          %1195 = vmatpush1.msra.mxu0 %v1024
          %1196 = vmatprep.subr.mxu0 %v1029
          %1197 = vmatpush1.msra.mxu0 %v1028
          %1198 = vmatprep.subr.mxu0 %v1033
          %1199 = vmatpush1.msra.mxu0 %v1032
          %1200 = vmatprep.subr.mxu0 %v1037
          %1201 = vmatpush1.msra.mxu0 %v1036
          %1202 = vmatprep.subr.mxu0 %v1041
          %1203 = vmatpush1.msra.mxu0 %v1040
          %1204 = vmatprep.subr.mxu0 0.0
          %1205 = vmatpush1.msra.mxu0 0.0
          %1206 = vmatprep.subr.mxu0 0.0
          %1207 = vmatpush1.msra.mxu0 0.0
          %1208 = vmatprep.subr.mxu0 0.0
          %1209 = vmatpush1.msra.mxu0 0.0
          %1210 = vmatprep.subr.mxu0 0.0
          %1211 = vmatpush1.msra.mxu0 0.0
          %1212 = vmatprep.subr.mxu0 0.0
          %1213 = vmatpush1.msra.mxu0 0.0
          %1214 = vmatprep.subr.mxu0 0.0
          %1215 = vmatpush1.msra.mxu0 0.0
          %1216 = vmatprep.subr.mxu0 0.0
          %1217 = vmatpush1.msra.mxu0 0.0
          %1218 = vmatprep.subr.mxu0 0.0
          %1219 = vmatpush1.msra.mxu0 0.0
          %1220 = vmatprep.subr.mxu0 0.0
          %1221 = vmatpush1.msra.mxu0 0.0
          %1222 = vmatprep.subr.mxu0 0.0
          %1223 = vmatpush1.msra.mxu0 0.0
          %1224 = vmatprep.subr.mxu0 0.0
          %1225 = vmatpush1.msra.mxu0 0.0
          %1226 = vmatprep.subr.mxu0 0.0
          %1227 = vmatpush1.msra.mxu0 0.0
          %1228 = vmatprep.subr.mxu0 0.0
          %1229 = vmatpush1.msra.mxu0 0.0
          %1230 = vmatprep.subr.mxu0 0.0
          %1231 = vmatpush1.msra.mxu0 0.0
          %1232 = vmatprep.subr.mxu0 0.0
          %1233 = vmatpush1.msra.mxu0 0.0
          %1234 = vmatprep.subr.mxu0 0.0
          %1235 = vmatpush1.msra.mxu0 0.0
          %1236 = vmatprep.mubr.f32.mxu0 0.0
          %1237 = vmatmul.mubr.f32.gmra.mrb[0].mxu0 %v1099
          %v1238 = vpop.f32.mrb[0].mxu0
          %v1239 = vadd.f32 %v1062, %v1238
          %v1240 = vpop.f32.mrb[0].mxu0
          %v1241 = vadd.f32 %v1066, %v1240
          %1242 = vdwg.mxu0
          %v1247 = vcombine.low %v1168, %v1170
          %v1248 = vcombine.high %v1168, %v1170
          %v1249 = vcombine.low %v1239, %v1241
          %v1250 = vcombine.high %v1239, %v1241
          %v1252 = vunpack.c.l.s4 1966171168
          %v1253 = vunpack.c.0.s8 %v1252
          %v1254 = vlaneseq
          %v1255 = vshrl.u32 %v1254, 7
          %v1256 = vsub.s32 %v1253, %v1255
          %v1257 = vrot.slane %v1247, %v1256
          %v1259 = vunpack.c.l.s4 1966171168
          %v1260 = vunpack.c.0.s8 %v1259
          %v1261 = vlaneseq
          %v1262 = vshrl.u32 %v1261, 7
          %v1263 = vsub.s32 %v1260, %v1262
          %v1264 = vrot.slane %v1248, %v1263
          %v1266 = vunpack.c.l.s4 1966171168
          %v1267 = vunpack.c.0.s8 %v1266
          %v1268 = vlaneseq
          %v1269 = vshrl.u32 %v1268, 7
          %v1270 = vsub.s32 %v1267, %v1269
          %v1271 = vrot.slane %v1249, %v1270
          %v1273 = vunpack.c.l.s4 1966171168
          %v1274 = vunpack.c.0.s8 %v1273
          %v1275 = vlaneseq
          %v1276 = vshrl.u32 %v1275, 7
          %v1277 = vsub.s32 %v1274, %v1276
          %v1278 = vrot.slane %v1250, %v1277
          %v1279 = vcombine.low %v1257, %v1271
          %v1280 = vcombine.high %v1257, %v1271
          %v1281 = vcombine.low %v1264, %v1278
          %v1282 = vcombine.high %v1264, %v1278
          %v1284 = vunpack.c.l.s4 1966171168
          %v1285 = vunpack.c.0.s8 %v1284
          %v1286 = vlaneseq
          %v1287 = vshrl.u32 %v1286, 7
          %v1288 = vsub.s32 %v1285, %v1287
          %v1289 = vrot.slane %v1279, %v1288
          %v1291 = vunpack.c.l.s4 1966171168
          %v1292 = vunpack.c.0.s8 %v1291
          %v1293 = vlaneseq
          %v1294 = vshrl.u32 %v1293, 7
          %v1295 = vsub.s32 %v1292, %v1294
          %v1296 = vrot.slane %v1281, %v1295
          %v1298 = vunpack.c.l.s4 1966171168
          %v1299 = vunpack.c.0.s8 %v1298
          %v1300 = vlaneseq
          %v1301 = vshrl.u32 %v1300, 7
          %v1302 = vsub.s32 %v1299, %v1301
          %v1303 = vrot.slane %v1280, %v1302
          %v1305 = vunpack.c.l.s4 1966171168
          %v1306 = vunpack.c.0.s8 %v1305
          %v1307 = vlaneseq
          %v1308 = vshrl.u32 %v1307, 7
          %v1309 = vsub.s32 %v1306, %v1308
          %v1310 = vrot.slane %v1282, %v1309
          %v1311 = vcombine.high %v1289, %v1289
          %v1312 = vcombine.high %v1296, %v1296
          %v1313 = vcombine.high %v1303, %v1303
          %v1314 = vcombine.high %v1310, %v1310
          %v1323 = vlaneseq
          %vm1324 = vcmp.ge.s32.totalorder %v1323, 0
          %vm1325 = vcmp.lt.s32.totalorder %v1323, 512
          %vm1326 = vmand %vm1324, %vm1325
          %1327 = vst.msk [vmem:[#allocation2] ss:$2 sm:$0xf] %vm1326, %v1289
          %s1328 = scalar_lea.vmem [#allocation2], 8
          %1329 = vst.msk [vmem:[%s1328] ss:$2 sm:$0xf] %vm1326, %v1303
          %s1330 = scalar_lea.vmem [#allocation2], 16
          %1331 = vst.msk [vmem:[%s1330] ss:$2 sm:$0xf] %vm1326, %v1311
          %s1332 = scalar_lea.vmem [#allocation2], 24
          %1333 = vst.msk [vmem:[%s1332] ss:$2 sm:$0xf] %vm1326, %v1313
          %s1334 = scalar_lea.vmem [#allocation2], 32
          %1335 = vst.msk [vmem:[%s1334] ss:$2 sm:$0xf] %vm1326, %v1296
          %s1336 = scalar_lea.vmem [#allocation2], 40
          %1337 = vst.msk [vmem:[%s1336] ss:$2 sm:$0xf] %vm1326, %v1310
          %s1338 = scalar_lea.vmem [#allocation2], 48
          %1339 = vst.msk [vmem:[%s1338] ss:$2 sm:$0xf] %vm1326, %v1312
          %s1340 = scalar_lea.vmem [#allocation2], 56
          %1341 = vst.msk [vmem:[%s1340] ss:$2 sm:$0xf] %vm1326, %v1314
          %v1342 = vld [vmem:[#allocation3 + $0x1] sm:$0x1]
          %v1343 = vld [vmem:[#allocation3 + $0x3] sm:$0x1]
          %v1344 = vld [vmem:[#allocation3 + $0x5] sm:$0x1]
          %v1345 = vld [vmem:[#allocation3 + $0x7] sm:$0x1]
          %v1346 = vld [vmem:[#allocation3 + $0x9] sm:$0x1]
          %v1347 = vld [vmem:[#allocation3 + $0xb] sm:$0x1]
          %v1348 = vld [vmem:[#allocation3 + $0xd] sm:$0x1]
          %v1349 = vld [vmem:[#allocation3 + $0xf] sm:$0x1]
          %v1358 = vrot.slane %v1343, 7
          %v1359 = vsel %vm1080, %v1358, %v1342
          %v1360 = vrot.slane %v1344, 6
          %v1361 = vsel %vm1083, %v1360, %v1359
          %v1362 = vrot.slane %v1345, 5
          %v1363 = vsel %vm1086, %v1362, %v1361
          %v1364 = vrot.slane %v1346, 4
          %v1365 = vsel %vm1089, %v1364, %v1363
          %v1366 = vrot.slane %v1347, 3
          %v1367 = vsel %vm1092, %v1366, %v1365
          %v1368 = vrot.slane %v1348, 2
          %v1369 = vsel %vm1095, %v1368, %v1367
          %v1370 = vrot.slane %v1349, 1
          %v1371 = vsel %vm1098, %v1370, %v1369
          %1373 = vmatprep.subr.mxu0 %v979
          %1374 = vmatpush1.msra.mxu0 %v978
          %1375 = vmatprep.subr.mxu0 %v983
          %1376 = vmatpush1.msra.mxu0 %v982
          %1377 = vmatprep.subr.mxu0 %v987
          %1378 = vmatpush1.msra.mxu0 %v986
          %1379 = vmatprep.subr.mxu0 %v991
          %1380 = vmatpush1.msra.mxu0 %v990
          %1381 = vmatprep.subr.mxu0 %v995
          %1382 = vmatpush1.msra.mxu0 %v994
          %1383 = vmatprep.subr.mxu0 %v999
          %1384 = vmatpush1.msra.mxu0 %v998
          %1385 = vmatprep.subr.mxu0 %v1003
          %1386 = vmatpush1.msra.mxu0 %v1002
          %1387 = vmatprep.subr.mxu0 %v1007
          %1388 = vmatpush1.msra.mxu0 %v1006
          %1389 = vmatprep.subr.mxu0 %v1011
          %1390 = vmatpush1.msra.mxu0 %v1010
          %1391 = vmatprep.subr.mxu0 %v1015
          %1392 = vmatpush1.msra.mxu0 %v1014
          %1393 = vmatprep.subr.mxu0 %v1019
          %1394 = vmatpush1.msra.mxu0 %v1018
          %1395 = vmatprep.subr.mxu0 %v1023
          %1396 = vmatpush1.msra.mxu0 %v1022
          %1397 = vmatprep.subr.mxu0 %v1027
          %1398 = vmatpush1.msra.mxu0 %v1026
          %1399 = vmatprep.subr.mxu0 %v1031
          %1400 = vmatpush1.msra.mxu0 %v1030
          %1401 = vmatprep.subr.mxu0 %v1035
          %1402 = vmatpush1.msra.mxu0 %v1034
          %1403 = vmatprep.subr.mxu0 %v1039
          %1404 = vmatpush1.msra.mxu0 %v1038
          %1405 = vmatprep.subr.mxu0 0.0
          %1406 = vmatpush1.msra.mxu0 0.0
          %1407 = vmatprep.subr.mxu0 0.0
          %1408 = vmatpush1.msra.mxu0 0.0
          %1409 = vmatprep.subr.mxu0 0.0
          %1410 = vmatpush1.msra.mxu0 0.0
          %1411 = vmatprep.subr.mxu0 0.0
          %1412 = vmatpush1.msra.mxu0 0.0
          %1413 = vmatprep.subr.mxu0 0.0
          %1414 = vmatpush1.msra.mxu0 0.0
          %1415 = vmatprep.subr.mxu0 0.0
          %1416 = vmatpush1.msra.mxu0 0.0
          %1417 = vmatprep.subr.mxu0 0.0
          %1418 = vmatpush1.msra.mxu0 0.0
          %1419 = vmatprep.subr.mxu0 0.0
          %1420 = vmatpush1.msra.mxu0 0.0
          %1421 = vmatprep.subr.mxu0 0.0
          %1422 = vmatpush1.msra.mxu0 0.0
          %1423 = vmatprep.subr.mxu0 0.0
          %1424 = vmatpush1.msra.mxu0 0.0
          %1425 = vmatprep.subr.mxu0 0.0
          %1426 = vmatpush1.msra.mxu0 0.0
          %1427 = vmatprep.subr.mxu0 0.0
          %1428 = vmatpush1.msra.mxu0 0.0
          %1429 = vmatprep.subr.mxu0 0.0
          %1430 = vmatpush1.msra.mxu0 0.0
          %1431 = vmatprep.subr.mxu0 0.0
          %1432 = vmatpush1.msra.mxu0 0.0
          %1433 = vmatprep.subr.mxu0 0.0
          %1434 = vmatpush1.msra.mxu0 0.0
          %1435 = vmatprep.subr.mxu0 0.0
          %1436 = vmatpush1.msra.mxu0 0.0
          %1437 = vmatprep.mubr.f32.mxu0 0.0
          %1438 = vmatmul.mubr.f32.gmra.mrb[0].mxu0 %v1371
          %v1439 = vpop.f32.mrb[0].mxu0
          %v1440 = vadd.f32 %v1054, %v1439
          %v1441 = vpop.f32.mrb[0].mxu0
          %v1442 = vadd.f32 %v1058, %v1441
          %1443 = vdwg.mxu0
          %1444 = vmatprep.subr.mxu0 %v981
          %1445 = vmatpush1.msra.mxu0 %v980
          %1446 = vmatprep.subr.mxu0 %v985
          %1447 = vmatpush1.msra.mxu0 %v984
          %1448 = vmatprep.subr.mxu0 %v989
          %1449 = vmatpush1.msra.mxu0 %v988
          %1450 = vmatprep.subr.mxu0 %v993
          %1451 = vmatpush1.msra.mxu0 %v992
          %1452 = vmatprep.subr.mxu0 %v997
          %1453 = vmatpush1.msra.mxu0 %v996
          %1454 = vmatprep.subr.mxu0 %v1001
          %1455 = vmatpush1.msra.mxu0 %v1000
          %1456 = vmatprep.subr.mxu0 %v1005
          %1457 = vmatpush1.msra.mxu0 %v1004
          %1458 = vmatprep.subr.mxu0 %v1009
          %1459 = vmatpush1.msra.mxu0 %v1008
          %1460 = vmatprep.subr.mxu0 %v1013
          %1461 = vmatpush1.msra.mxu0 %v1012
          %1462 = vmatprep.subr.mxu0 %v1017
          %1463 = vmatpush1.msra.mxu0 %v1016
          %1464 = vmatprep.subr.mxu0 %v1021
          %1465 = vmatpush1.msra.mxu0 %v1020
          %1466 = vmatprep.subr.mxu0 %v1025
          %1467 = vmatpush1.msra.mxu0 %v1024
          %1468 = vmatprep.subr.mxu0 %v1029
          %1469 = vmatpush1.msra.mxu0 %v1028
          %1470 = vmatprep.subr.mxu0 %v1033
          %1471 = vmatpush1.msra.mxu0 %v1032
          %1472 = vmatprep.subr.mxu0 %v1037
          %1473 = vmatpush1.msra.mxu0 %v1036
          %1474 = vmatprep.subr.mxu0 %v1041
          %1475 = vmatpush1.msra.mxu0 %v1040
          %1476 = vmatprep.subr.mxu0 0.0
          %1477 = vmatpush1.msra.mxu0 0.0
          %1478 = vmatprep.subr.mxu0 0.0
          %1479 = vmatpush1.msra.mxu0 0.0
          %1480 = vmatprep.subr.mxu0 0.0
          %1481 = vmatpush1.msra.mxu0 0.0
          %1482 = vmatprep.subr.mxu0 0.0
          %1483 = vmatpush1.msra.mxu0 0.0
          %1484 = vmatprep.subr.mxu0 0.0
          %1485 = vmatpush1.msra.mxu0 0.0
          %1486 = vmatprep.subr.mxu0 0.0
          %1487 = vmatpush1.msra.mxu0 0.0
          %1488 = vmatprep.subr.mxu0 0.0
          %1489 = vmatpush1.msra.mxu0 0.0
          %1490 = vmatprep.subr.mxu0 0.0
          %1491 = vmatpush1.msra.mxu0 0.0
          %1492 = vmatprep.subr.mxu0 0.0
          %1493 = vmatpush1.msra.mxu0 0.0
          %1494 = vmatprep.subr.mxu0 0.0
          %1495 = vmatpush1.msra.mxu0 0.0
          %1496 = vmatprep.subr.mxu0 0.0
          %1497 = vmatpush1.msra.mxu0 0.0
          %1498 = vmatprep.subr.mxu0 0.0
          %1499 = vmatpush1.msra.mxu0 0.0
          %1500 = vmatprep.subr.mxu0 0.0
          %1501 = vmatpush1.msra.mxu0 0.0
          %1502 = vmatprep.subr.mxu0 0.0
          %1503 = vmatpush1.msra.mxu0 0.0
          %1504 = vmatprep.subr.mxu0 0.0
          %1505 = vmatpush1.msra.mxu0 0.0
          %1506 = vmatprep.subr.mxu0 0.0
          %1507 = vmatpush1.msra.mxu0 0.0
          %1508 = vmatprep.mubr.f32.mxu0 0.0
          %1509 = vmatmul.mubr.f32.gmra.mrb[0].mxu0 %v1371
          %v1510 = vpop.f32.mrb[0].mxu0
          %v1511 = vadd.f32 %v1062, %v1510
          %v1512 = vpop.f32.mrb[0].mxu0
          %v1513 = vadd.f32 %v1066, %v1512
          %1514 = vdwg.mxu0
          %v1519 = vcombine.low %v1440, %v1442
          %v1520 = vcombine.high %v1440, %v1442
          %v1521 = vcombine.low %v1511, %v1513
          %v1522 = vcombine.high %v1511, %v1513
          %v1524 = vunpack.c.l.s4 1966171168
          %v1525 = vunpack.c.0.s8 %v1524
          %v1526 = vlaneseq
          %v1527 = vshrl.u32 %v1526, 7
          %v1528 = vsub.s32 %v1525, %v1527
          %v1529 = vrot.slane %v1519, %v1528
          %v1531 = vunpack.c.l.s4 1966171168
          %v1532 = vunpack.c.0.s8 %v1531
          %v1533 = vlaneseq
          %v1534 = vshrl.u32 %v1533, 7
          %v1535 = vsub.s32 %v1532, %v1534
          %v1536 = vrot.slane %v1520, %v1535
          %v1538 = vunpack.c.l.s4 1966171168
          %v1539 = vunpack.c.0.s8 %v1538
          %v1540 = vlaneseq
          %v1541 = vshrl.u32 %v1540, 7
          %v1542 = vsub.s32 %v1539, %v1541
          %v1543 = vrot.slane %v1521, %v1542
          %v1545 = vunpack.c.l.s4 1966171168
          %v1546 = vunpack.c.0.s8 %v1545
          %v1547 = vlaneseq
          %v1548 = vshrl.u32 %v1547, 7
          %v1549 = vsub.s32 %v1546, %v1548
          %v1550 = vrot.slane %v1522, %v1549
          %v1551 = vcombine.low %v1529, %v1543
          %v1552 = vcombine.high %v1529, %v1543
          %v1553 = vcombine.low %v1536, %v1550
          %v1554 = vcombine.high %v1536, %v1550
          %v1556 = vunpack.c.l.s4 1966171168
          %v1557 = vunpack.c.0.s8 %v1556
          %v1558 = vlaneseq
          %v1559 = vshrl.u32 %v1558, 7
          %v1560 = vsub.s32 %v1557, %v1559
          %v1561 = vrot.slane %v1551, %v1560
          %v1563 = vunpack.c.l.s4 1966171168
          %v1564 = vunpack.c.0.s8 %v1563
          %v1565 = vlaneseq
          %v1566 = vshrl.u32 %v1565, 7
          %v1567 = vsub.s32 %v1564, %v1566
          %v1568 = vrot.slane %v1553, %v1567
          %v1570 = vunpack.c.l.s4 1966171168
          %v1571 = vunpack.c.0.s8 %v1570
          %v1572 = vlaneseq
          %v1573 = vshrl.u32 %v1572, 7
          %v1574 = vsub.s32 %v1571, %v1573
          %v1575 = vrot.slane %v1552, %v1574
          %v1577 = vunpack.c.l.s4 1966171168
          %v1578 = vunpack.c.0.s8 %v1577
          %v1579 = vlaneseq
          %v1580 = vshrl.u32 %v1579, 7
          %v1581 = vsub.s32 %v1578, %v1580
          %v1582 = vrot.slane %v1554, %v1581
          %v1583 = vcombine.high %v1561, %v1561
          %v1584 = vcombine.high %v1568, %v1568
          %v1585 = vcombine.high %v1575, %v1575
          %v1586 = vcombine.high %v1582, %v1582
          %s1595 = scalar_lea.vmem [#allocation2], 1
          %1596 = vst.msk [vmem:[%s1595] ss:$2 sm:$0xf] %vm1326, %v1561
          %s1597 = scalar_lea.vmem [#allocation2], 9
          %1598 = vst.msk [vmem:[%s1597] ss:$2 sm:$0xf] %vm1326, %v1575
          %s1599 = scalar_lea.vmem [#allocation2], 17
          %1600 = vst.msk [vmem:[%s1599] ss:$2 sm:$0xf] %vm1326, %v1583
          %s1601 = scalar_lea.vmem [#allocation2], 25
          %1602 = vst.msk [vmem:[%s1601] ss:$2 sm:$0xf] %vm1326, %v1585
          %s1603 = scalar_lea.vmem [#allocation2], 33
          %1604 = vst.msk [vmem:[%s1603] ss:$2 sm:$0xf] %vm1326, %v1568
          %s1605 = scalar_lea.vmem [#allocation2], 41
          %1606 = vst.msk [vmem:[%s1605] ss:$2 sm:$0xf] %vm1326, %v1582
          %s1607 = scalar_lea.vmem [#allocation2], 49
          %1608 = vst.msk [vmem:[%s1607] ss:$2 sm:$0xf] %vm1326, %v1584
          %s1609 = scalar_lea.vmem [#allocation2], 57
          %1610 = vst.msk [vmem:[%s1609] ss:$2 sm:$0xf] %vm1326, %v1586
        $region60: #{lstm_forward.3} parent=43 // pred_fallthru
          _
        %v1611 = vld [vmem:[%s378] sm:$0x3]
        %v1612 = vld [vmem:[%s382] sm:$0x3]
        %v1613 = vld [vmem:[#allocation2] sm:$0xff]
        %1614 = vmatprep.subr.mxu0 %v388
        %1615 = vmatpush1.msra.mxu0 %v387
        %1616 = vmatprep.subr.mxu0 %v392
        %1617 = vmatpush1.msra.mxu0 %v391
        %1618 = vmatprep.subr.mxu0 %v396
        %1619 = vmatpush1.msra.mxu0 %v395
        %1620 = vmatprep.subr.mxu0 %v400
        %1621 = vmatpush1.msra.mxu0 %v399
        %1622 = vmatprep.subr.mxu0 %v404
        %1623 = vmatpush1.msra.mxu0 %v403
        %1624 = vmatprep.subr.mxu0 %v408
        %1625 = vmatpush1.msra.mxu0 %v407
        %1626 = vmatprep.subr.mxu0 %v412
        %1627 = vmatpush1.msra.mxu0 %v411
        %1628 = vmatprep.subr.mxu0 %v416
        %1629 = vmatpush1.msra.mxu0 %v415
        %1630 = vmatprep.subr.mxu0 %v420
        %1631 = vmatpush1.msra.mxu0 %v419
        %1632 = vmatprep.subr.mxu0 %v424
        %1633 = vmatpush1.msra.mxu0 %v423
        %1634 = vmatprep.subr.mxu0 %v428
        %1635 = vmatpush1.msra.mxu0 %v427
        %1636 = vmatprep.subr.mxu0 %v432
        %1637 = vmatpush1.msra.mxu0 %v431
        %1638 = vmatprep.subr.mxu0 %v436
        %1639 = vmatpush1.msra.mxu0 %v435
        %1640 = vmatprep.subr.mxu0 %v440
        %1641 = vmatpush1.msra.mxu0 %v439
        %1642 = vmatprep.subr.mxu0 %v444
        %1643 = vmatpush1.msra.mxu0 %v443
        %1644 = vmatprep.subr.mxu0 %v448
        %1645 = vmatpush1.msra.mxu0 %v447
        %1646 = vmatprep.subr.mxu0 0.0
        %1647 = vmatpush1.msra.mxu0 0.0
        %1648 = vmatprep.subr.mxu0 0.0
        %1649 = vmatpush1.msra.mxu0 0.0
        %1650 = vmatprep.subr.mxu0 0.0
        %1651 = vmatpush1.msra.mxu0 0.0
        %1652 = vmatprep.subr.mxu0 0.0
        %1653 = vmatpush1.msra.mxu0 0.0
        %1654 = vmatprep.subr.mxu0 0.0
        %1655 = vmatpush1.msra.mxu0 0.0
        %1656 = vmatprep.subr.mxu0 0.0
        %1657 = vmatpush1.msra.mxu0 0.0
        %1658 = vmatprep.subr.mxu0 0.0
        %1659 = vmatpush1.msra.mxu0 0.0
        %1660 = vmatprep.subr.mxu0 0.0
        %1661 = vmatpush1.msra.mxu0 0.0
        %1662 = vmatprep.subr.mxu0 0.0
        %1663 = vmatpush1.msra.mxu0 0.0
        %1664 = vmatprep.subr.mxu0 0.0
        %1665 = vmatpush1.msra.mxu0 0.0
        %1666 = vmatprep.subr.mxu0 0.0
        %1667 = vmatpush1.msra.mxu0 0.0
        %1668 = vmatprep.subr.mxu0 0.0
        %1669 = vmatpush1.msra.mxu0 0.0
        %1670 = vmatprep.subr.mxu0 0.0
        %1671 = vmatpush1.msra.mxu0 0.0
        %1672 = vmatprep.subr.mxu0 0.0
        %1673 = vmatpush1.msra.mxu0 0.0
        %1674 = vmatprep.subr.mxu0 0.0
        %1675 = vmatpush1.msra.mxu0 0.0
        %1676 = vmatprep.subr.mxu0 0.0
        %1677 = vmatpush1.msra.mxu0 0.0
        %1678 = vmatprep.mubr.f32.mxu0 0.0
        %1679 = vmatmul.mubr.f32.gmra.mrb[0].mxu0 %v1611
        %v1680 = vpop.f32.mrb[0].mxu0
        %v1681 = vadd.f32 0.0, %v1680
        %v1682 = vpop.f32.mrb[0].mxu0
        %v1683 = vadd.f32 0.0, %v1682
        %1684 = vdwg.mxu0
        %1685 = vmatprep.subr.mxu0 %v390
        %1686 = vmatpush1.msra.mxu0 %v389
        %1687 = vmatprep.subr.mxu0 %v394
        %1688 = vmatpush1.msra.mxu0 %v393
        %1689 = vmatprep.subr.mxu0 %v398
        %1690 = vmatpush1.msra.mxu0 %v397
        %1691 = vmatprep.subr.mxu0 %v402
        %1692 = vmatpush1.msra.mxu0 %v401
        %1693 = vmatprep.subr.mxu0 %v406
        %1694 = vmatpush1.msra.mxu0 %v405
        %1695 = vmatprep.subr.mxu0 %v410
        %1696 = vmatpush1.msra.mxu0 %v409
        %1697 = vmatprep.subr.mxu0 %v414
        %1698 = vmatpush1.msra.mxu0 %v413
        %1699 = vmatprep.subr.mxu0 %v418
        %1700 = vmatpush1.msra.mxu0 %v417
        %1701 = vmatprep.subr.mxu0 %v422
        %1702 = vmatpush1.msra.mxu0 %v421
        %1703 = vmatprep.subr.mxu0 %v426
        %1704 = vmatpush1.msra.mxu0 %v425
        %1705 = vmatprep.subr.mxu0 %v430
        %1706 = vmatpush1.msra.mxu0 %v429
        %1707 = vmatprep.subr.mxu0 %v434
        %1708 = vmatpush1.msra.mxu0 %v433
        %1709 = vmatprep.subr.mxu0 %v438
        %1710 = vmatpush1.msra.mxu0 %v437
        %1711 = vmatprep.subr.mxu0 %v442
        %1712 = vmatpush1.msra.mxu0 %v441
        %1713 = vmatprep.subr.mxu0 %v446
        %1714 = vmatpush1.msra.mxu0 %v445
        %1715 = vmatprep.subr.mxu0 %v450
        %1716 = vmatpush1.msra.mxu0 %v449
        %1717 = vmatprep.subr.mxu0 0.0
        %1718 = vmatpush1.msra.mxu0 0.0
        %1719 = vmatprep.subr.mxu0 0.0
        %1720 = vmatpush1.msra.mxu0 0.0
        %1721 = vmatprep.subr.mxu0 0.0
        %1722 = vmatpush1.msra.mxu0 0.0
        %1723 = vmatprep.subr.mxu0 0.0
        %1724 = vmatpush1.msra.mxu0 0.0
        %1725 = vmatprep.subr.mxu0 0.0
        %1726 = vmatpush1.msra.mxu0 0.0
        %1727 = vmatprep.subr.mxu0 0.0
        %1728 = vmatpush1.msra.mxu0 0.0
        %1729 = vmatprep.subr.mxu0 0.0
        %1730 = vmatpush1.msra.mxu0 0.0
        %1731 = vmatprep.subr.mxu0 0.0
        %1732 = vmatpush1.msra.mxu0 0.0
        %1733 = vmatprep.subr.mxu0 0.0
        %1734 = vmatpush1.msra.mxu0 0.0
        %1735 = vmatprep.subr.mxu0 0.0
        %1736 = vmatpush1.msra.mxu0 0.0
        %1737 = vmatprep.subr.mxu0 0.0
        %1738 = vmatpush1.msra.mxu0 0.0
        %1739 = vmatprep.subr.mxu0 0.0
        %1740 = vmatpush1.msra.mxu0 0.0
        %1741 = vmatprep.subr.mxu0 0.0
        %1742 = vmatpush1.msra.mxu0 0.0
        %1743 = vmatprep.subr.mxu0 0.0
        %1744 = vmatpush1.msra.mxu0 0.0
        %1745 = vmatprep.subr.mxu0 0.0
        %1746 = vmatpush1.msra.mxu0 0.0
        %1747 = vmatprep.subr.mxu0 0.0
        %1748 = vmatpush1.msra.mxu0 0.0
        %1749 = vmatprep.mubr.f32.mxu0 0.0
        %1750 = vmatmul.mubr.f32.gmra.mrb[0].mxu0 %v1611
        %v1751 = vpop.f32.mrb[0].mxu0
        %v1752 = vadd.f32 0.0, %v1751
        %v1753 = vpop.f32.mrb[0].mxu0
        %v1754 = vadd.f32 0.0, %v1753
        %1755 = vdwg.mxu0
        %v1760 = vcombine.low %v1681, %v1683
        %v1761 = vcombine.low %v1752, %v1754
        %v1763 = vunpack.c.l.s4 1983009808
        %v1764 = vunpack.c.0.s8 %v1763
        %v1765 = vlaneseq
        %v1766 = vshrl.u32 %v1765, 7
        %v1767 = vsub.s32 %v1764, %v1766
        %v1768 = vrot.slane %v1760, %v1767
        %v1770 = vunpack.c.l.s4 1983009808
        %v1771 = vunpack.c.0.s8 %v1770
        %v1772 = vlaneseq
        %v1773 = vshrl.u32 %v1772, 7
        %v1774 = vsub.s32 %v1771, %v1773
        %v1775 = vrot.slane %v1761, %v1774
        %v1776 = vcombine.low %v1768, %v1775
        %v1778 = vadd.f32 %v1613, %v1776
        %v1779 = vtanh.pop %v1778
        %v1780 = vadd.f32 %v1779, 1.0
        %v1781 = vmul.f32 %v1780, 0.5
        %v1783 = vrot.slane %v1779, 2
        %v1785 = vadd.f32 %v1783, 1.0
        %v1786 = vmul.f32 %v1785, 0.5
        %v1787 = vrot.slane %v1779, 6
        %v1789 = vadd.f32 %v1787, 1.0
        %v1790 = vmul.f32 %v1789, 0.5
        %v1791 = vmul.f32 %v1786, %v1612
        %v1792 = vrot.slane %v1779, 4
        %v1794 = vmul.f32 %v1781, %v1792
        %v1795 = vadd.f32 %v1791, %v1794
        %v1796 = vtanh.pop %v1795
        %v1797 = vmul.f32 %v1790, %v1796
        %1798 = vst [vmem:[#allocation3] sm:$0x3] %v1797
        %s1799 = scalar_lea.vmem [#allocation2], 8
        %v1800 = vld [vmem:[%s1799] sm:$0xff]
        %1801 = vmatprep.subr.mxu0 %v388
        %1802 = vmatpush1.msra.mxu0 %v387
        %1803 = vmatprep.subr.mxu0 %v392
        %1804 = vmatpush1.msra.mxu0 %v391
        %1805 = vmatprep.subr.mxu0 %v396
        %1806 = vmatpush1.msra.mxu0 %v395
        %1807 = vmatprep.subr.mxu0 %v400
        %1808 = vmatpush1.msra.mxu0 %v399
        %1809 = vmatprep.subr.mxu0 %v404
        %1810 = vmatpush1.msra.mxu0 %v403
        %1811 = vmatprep.subr.mxu0 %v408
        %1812 = vmatpush1.msra.mxu0 %v407
        %1813 = vmatprep.subr.mxu0 %v412
        %1814 = vmatpush1.msra.mxu0 %v411
        %1815 = vmatprep.subr.mxu0 %v416
        %1816 = vmatpush1.msra.mxu0 %v415
        %1817 = vmatprep.subr.mxu0 %v420
        %1818 = vmatpush1.msra.mxu0 %v419
        %1819 = vmatprep.subr.mxu0 %v424
        %1820 = vmatpush1.msra.mxu0 %v423
        %1821 = vmatprep.subr.mxu0 %v428
        %1822 = vmatpush1.msra.mxu0 %v427
        %1823 = vmatprep.subr.mxu0 %v432
        %1824 = vmatpush1.msra.mxu0 %v431
        %1825 = vmatprep.subr.mxu0 %v436
        %1826 = vmatpush1.msra.mxu0 %v435
        %1827 = vmatprep.subr.mxu0 %v440
        %1828 = vmatpush1.msra.mxu0 %v439
        %1829 = vmatprep.subr.mxu0 %v444
        %1830 = vmatpush1.msra.mxu0 %v443
        %1831 = vmatprep.subr.mxu0 %v448
        %1832 = vmatpush1.msra.mxu0 %v447
        %1833 = vmatprep.subr.mxu0 0.0
        %1834 = vmatpush1.msra.mxu0 0.0
        %1835 = vmatprep.subr.mxu0 0.0
        %1836 = vmatpush1.msra.mxu0 0.0
        %1837 = vmatprep.subr.mxu0 0.0
        %1838 = vmatpush1.msra.mxu0 0.0
        %1839 = vmatprep.subr.mxu0 0.0
        %1840 = vmatpush1.msra.mxu0 0.0
        %1841 = vmatprep.subr.mxu0 0.0
        %1842 = vmatpush1.msra.mxu0 0.0
        %1843 = vmatprep.subr.mxu0 0.0
        %1844 = vmatpush1.msra.mxu0 0.0
        %1845 = vmatprep.subr.mxu0 0.0
        %1846 = vmatpush1.msra.mxu0 0.0
        %1847 = vmatprep.subr.mxu0 0.0
        %1848 = vmatpush1.msra.mxu0 0.0
        %1849 = vmatprep.subr.mxu0 0.0
        %1850 = vmatpush1.msra.mxu0 0.0
        %1851 = vmatprep.subr.mxu0 0.0
        %1852 = vmatpush1.msra.mxu0 0.0
        %1853 = vmatprep.subr.mxu0 0.0
        %1854 = vmatpush1.msra.mxu0 0.0
        %1855 = vmatprep.subr.mxu0 0.0
        %1856 = vmatpush1.msra.mxu0 0.0
        %1857 = vmatprep.subr.mxu0 0.0
        %1858 = vmatpush1.msra.mxu0 0.0
        %1859 = vmatprep.subr.mxu0 0.0
        %1860 = vmatpush1.msra.mxu0 0.0
        %1861 = vmatprep.subr.mxu0 0.0
        %1862 = vmatpush1.msra.mxu0 0.0
        %1863 = vmatprep.subr.mxu0 0.0
        %1864 = vmatpush1.msra.mxu0 0.0
        %1865 = vmatprep.mubr.f32.mxu0 0.0
        %1866 = vmatmul.mubr.f32.gmra.mrb[0].mxu0 %v1797
        %v1867 = vpop.f32.mrb[0].mxu0
        %v1868 = vadd.f32 0.0, %v1867
        %v1869 = vpop.f32.mrb[0].mxu0
        %v1870 = vadd.f32 0.0, %v1869
        %1871 = vdwg.mxu0
        %1872 = vmatprep.subr.mxu0 %v390
        %1873 = vmatpush1.msra.mxu0 %v389
        %1874 = vmatprep.subr.mxu0 %v394
        %1875 = vmatpush1.msra.mxu0 %v393
        %1876 = vmatprep.subr.mxu0 %v398
        %1877 = vmatpush1.msra.mxu0 %v397
        %1878 = vmatprep.subr.mxu0 %v402
        %1879 = vmatpush1.msra.mxu0 %v401
        %1880 = vmatprep.subr.mxu0 %v406
        %1881 = vmatpush1.msra.mxu0 %v405
        %1882 = vmatprep.subr.mxu0 %v410
        %1883 = vmatpush1.msra.mxu0 %v409
        %1884 = vmatprep.subr.mxu0 %v414
        %1885 = vmatpush1.msra.mxu0 %v413
        %1886 = vmatprep.subr.mxu0 %v418
        %1887 = vmatpush1.msra.mxu0 %v417
        %1888 = vmatprep.subr.mxu0 %v422
        %1889 = vmatpush1.msra.mxu0 %v421
        %1890 = vmatprep.subr.mxu0 %v426
        %1891 = vmatpush1.msra.mxu0 %v425
        %1892 = vmatprep.subr.mxu0 %v430
        %1893 = vmatpush1.msra.mxu0 %v429
        %1894 = vmatprep.subr.mxu0 %v434
        %1895 = vmatpush1.msra.mxu0 %v433
        %1896 = vmatprep.subr.mxu0 %v438
        %1897 = vmatpush1.msra.mxu0 %v437
        %1898 = vmatprep.subr.mxu0 %v442
        %1899 = vmatpush1.msra.mxu0 %v441
        %1900 = vmatprep.subr.mxu0 %v446
        %1901 = vmatpush1.msra.mxu0 %v445
        %1902 = vmatprep.subr.mxu0 %v450
        %1903 = vmatpush1.msra.mxu0 %v449
        %1904 = vmatprep.subr.mxu0 0.0
        %1905 = vmatpush1.msra.mxu0 0.0
        %1906 = vmatprep.subr.mxu0 0.0
        %1907 = vmatpush1.msra.mxu0 0.0
        %1908 = vmatprep.subr.mxu0 0.0
        %1909 = vmatpush1.msra.mxu0 0.0
        %1910 = vmatprep.subr.mxu0 0.0
        %1911 = vmatpush1.msra.mxu0 0.0
        %1912 = vmatprep.subr.mxu0 0.0
        %1913 = vmatpush1.msra.mxu0 0.0
        %1914 = vmatprep.subr.mxu0 0.0
        %1915 = vmatpush1.msra.mxu0 0.0
        %1916 = vmatprep.subr.mxu0 0.0
        %1917 = vmatpush1.msra.mxu0 0.0
        %1918 = vmatprep.subr.mxu0 0.0
        %1919 = vmatpush1.msra.mxu0 0.0
        %1920 = vmatprep.subr.mxu0 0.0
        %1921 = vmatpush1.msra.mxu0 0.0
        %1922 = vmatprep.subr.mxu0 0.0
        %1923 = vmatpush1.msra.mxu0 0.0
        %1924 = vmatprep.subr.mxu0 0.0
        %1925 = vmatpush1.msra.mxu0 0.0
        %1926 = vmatprep.subr.mxu0 0.0
        %1927 = vmatpush1.msra.mxu0 0.0
        %1928 = vmatprep.subr.mxu0 0.0
        %1929 = vmatpush1.msra.mxu0 0.0
        %1930 = vmatprep.subr.mxu0 0.0
        %1931 = vmatpush1.msra.mxu0 0.0
        %1932 = vmatprep.subr.mxu0 0.0
        %1933 = vmatpush1.msra.mxu0 0.0
        %1934 = vmatprep.subr.mxu0 0.0
        %1935 = vmatpush1.msra.mxu0 0.0
        %1936 = vmatprep.mubr.f32.mxu0 0.0
        %1937 = vmatmul.mubr.f32.gmra.mrb[0].mxu0 %v1797
        %v1938 = vpop.f32.mrb[0].mxu0
        %v1939 = vadd.f32 0.0, %v1938
        %v1940 = vpop.f32.mrb[0].mxu0
        %v1941 = vadd.f32 0.0, %v1940
        %1942 = vdwg.mxu0
        %v1947 = vcombine.low %v1868, %v1870
        %v1948 = vcombine.low %v1939, %v1941
        %v1950 = vunpack.c.l.s4 1983009808
        %v1951 = vunpack.c.0.s8 %v1950
        %v1952 = vlaneseq
        %v1953 = vshrl.u32 %v1952, 7
        %v1954 = vsub.s32 %v1951, %v1953
        %v1955 = vrot.slane %v1947, %v1954
        %v1957 = vunpack.c.l.s4 1983009808
        %v1958 = vunpack.c.0.s8 %v1957
        %v1959 = vlaneseq
        %v1960 = vshrl.u32 %v1959, 7
        %v1961 = vsub.s32 %v1958, %v1960
        %v1962 = vrot.slane %v1948, %v1961
        %v1963 = vcombine.low %v1955, %v1962
        %v1965 = vadd.f32 %v1800, %v1963
        %v1966 = vtanh.pop %v1965
        %v1967 = vadd.f32 %v1966, 1.0
        %v1968 = vmul.f32 %v1967, 0.5
        %v1970 = vrot.slane %v1966, 2
        %v1972 = vadd.f32 %v1970, 1.0
        %v1973 = vmul.f32 %v1972, 0.5
        %v1974 = vrot.slane %v1966, 6
        %v1976 = vadd.f32 %v1974, 1.0
        %v1977 = vmul.f32 %v1976, 0.5
        %v1978 = vmul.f32 %v1973, %v1795
        %v1979 = vrot.slane %v1966, 4
        %v1981 = vmul.f32 %v1968, %v1979
        %v1982 = vadd.f32 %v1978, %v1981
        %v1983 = vtanh.pop %v1982
        %v1984 = vmul.f32 %v1977, %v1983
        %s1985 = scalar_lea.vmem [#allocation3], 2
        %1986 = vst [vmem:[%s1985] sm:$0x3] %v1984
        %s1987 = scalar_lea.vmem [#allocation2], 16
        %v1988 = vld [vmem:[%s1987] sm:$0xff]
        %1989 = vmatprep.subr.mxu0 %v388
        %1990 = vmatpush1.msra.mxu0 %v387
        %1991 = vmatprep.subr.mxu0 %v392
        %1992 = vmatpush1.msra.mxu0 %v391
        %1993 = vmatprep.subr.mxu0 %v396
        %1994 = vmatpush1.msra.mxu0 %v395
        %1995 = vmatprep.subr.mxu0 %v400
        %1996 = vmatpush1.msra.mxu0 %v399
        %1997 = vmatprep.subr.mxu0 %v404
        %1998 = vmatpush1.msra.mxu0 %v403
        %1999 = vmatprep.subr.mxu0 %v408
        %2000 = vmatpush1.msra.mxu0 %v407
        %2001 = vmatprep.subr.mxu0 %v412
        %2002 = vmatpush1.msra.mxu0 %v411
        %2003 = vmatprep.subr.mxu0 %v416
        %2004 = vmatpush1.msra.mxu0 %v415
        %2005 = vmatprep.subr.mxu0 %v420
        %2006 = vmatpush1.msra.mxu0 %v419
        %2007 = vmatprep.subr.mxu0 %v424
        %2008 = vmatpush1.msra.mxu0 %v423
        %2009 = vmatprep.subr.mxu0 %v428
        %2010 = vmatpush1.msra.mxu0 %v427
        %2011 = vmatprep.subr.mxu0 %v432
        %2012 = vmatpush1.msra.mxu0 %v431
        %2013 = vmatprep.subr.mxu0 %v436
        %2014 = vmatpush1.msra.mxu0 %v435
        %2015 = vmatprep.subr.mxu0 %v440
        %2016 = vmatpush1.msra.mxu0 %v439
        %2017 = vmatprep.subr.mxu0 %v444
        %2018 = vmatpush1.msra.mxu0 %v443
        %2019 = vmatprep.subr.mxu0 %v448
        %2020 = vmatpush1.msra.mxu0 %v447
        %2021 = vmatprep.subr.mxu0 0.0
        %2022 = vmatpush1.msra.mxu0 0.0
        %2023 = vmatprep.subr.mxu0 0.0
        %2024 = vmatpush1.msra.mxu0 0.0
        %2025 = vmatprep.subr.mxu0 0.0
        %2026 = vmatpush1.msra.mxu0 0.0
        %2027 = vmatprep.subr.mxu0 0.0
        %2028 = vmatpush1.msra.mxu0 0.0
        %2029 = vmatprep.subr.mxu0 0.0
        %2030 = vmatpush1.msra.mxu0 0.0
        %2031 = vmatprep.subr.mxu0 0.0
        %2032 = vmatpush1.msra.mxu0 0.0
        %2033 = vmatprep.subr.mxu0 0.0
        %2034 = vmatpush1.msra.mxu0 0.0
        %2035 = vmatprep.subr.mxu0 0.0
        %2036 = vmatpush1.msra.mxu0 0.0
        %2037 = vmatprep.subr.mxu0 0.0
        %2038 = vmatpush1.msra.mxu0 0.0
        %2039 = vmatprep.subr.mxu0 0.0
        %2040 = vmatpush1.msra.mxu0 0.0
        %2041 = vmatprep.subr.mxu0 0.0
        %2042 = vmatpush1.msra.mxu0 0.0
        %2043 = vmatprep.subr.mxu0 0.0
        %2044 = vmatpush1.msra.mxu0 0.0
        %2045 = vmatprep.subr.mxu0 0.0
        %2046 = vmatpush1.msra.mxu0 0.0
        %2047 = vmatprep.subr.mxu0 0.0
        %2048 = vmatpush1.msra.mxu0 0.0
        %2049 = vmatprep.subr.mxu0 0.0
        %2050 = vmatpush1.msra.mxu0 0.0
        %2051 = vmatprep.subr.mxu0 0.0
        %2052 = vmatpush1.msra.mxu0 0.0
        %2053 = vmatprep.mubr.f32.mxu0 0.0
        %2054 = vmatmul.mubr.f32.gmra.mrb[0].mxu0 %v1984
        %v2055 = vpop.f32.mrb[0].mxu0
        %v2056 = vadd.f32 0.0, %v2055
        %v2057 = vpop.f32.mrb[0].mxu0
        %v2058 = vadd.f32 0.0, %v2057
        %2059 = vdwg.mxu0
        %2060 = vmatprep.subr.mxu0 %v390
        %2061 = vmatpush1.msra.mxu0 %v389
        %2062 = vmatprep.subr.mxu0 %v394
        %2063 = vmatpush1.msra.mxu0 %v393
        %2064 = vmatprep.subr.mxu0 %v398
        %2065 = vmatpush1.msra.mxu0 %v397
        %2066 = vmatprep.subr.mxu0 %v402
        %2067 = vmatpush1.msra.mxu0 %v401
        %2068 = vmatprep.subr.mxu0 %v406
        %2069 = vmatpush1.msra.mxu0 %v405
        %2070 = vmatprep.subr.mxu0 %v410
        %2071 = vmatpush1.msra.mxu0 %v409
        %2072 = vmatprep.subr.mxu0 %v414
        %2073 = vmatpush1.msra.mxu0 %v413
        %2074 = vmatprep.subr.mxu0 %v418
        %2075 = vmatpush1.msra.mxu0 %v417
        %2076 = vmatprep.subr.mxu0 %v422
        %2077 = vmatpush1.msra.mxu0 %v421
        %2078 = vmatprep.subr.mxu0 %v426
        %2079 = vmatpush1.msra.mxu0 %v425
        %2080 = vmatprep.subr.mxu0 %v430
        %2081 = vmatpush1.msra.mxu0 %v429
        %2082 = vmatprep.subr.mxu0 %v434
        %2083 = vmatpush1.msra.mxu0 %v433
        %2084 = vmatprep.subr.mxu0 %v438
        %2085 = vmatpush1.msra.mxu0 %v437
        %2086 = vmatprep.subr.mxu0 %v442
        %2087 = vmatpush1.msra.mxu0 %v441
        %2088 = vmatprep.subr.mxu0 %v446
        %2089 = vmatpush1.msra.mxu0 %v445
        %2090 = vmatprep.subr.mxu0 %v450
        %2091 = vmatpush1.msra.mxu0 %v449
        %2092 = vmatprep.subr.mxu0 0.0
        %2093 = vmatpush1.msra.mxu0 0.0
        %2094 = vmatprep.subr.mxu0 0.0
        %2095 = vmatpush1.msra.mxu0 0.0
        %2096 = vmatprep.subr.mxu0 0.0
        %2097 = vmatpush1.msra.mxu0 0.0
        %2098 = vmatprep.subr.mxu0 0.0
        %2099 = vmatpush1.msra.mxu0 0.0
        %2100 = vmatprep.subr.mxu0 0.0
        %2101 = vmatpush1.msra.mxu0 0.0
        %2102 = vmatprep.subr.mxu0 0.0
        %2103 = vmatpush1.msra.mxu0 0.0
        %2104 = vmatprep.subr.mxu0 0.0
        %2105 = vmatpush1.msra.mxu0 0.0
        %2106 = vmatprep.subr.mxu0 0.0
        %2107 = vmatpush1.msra.mxu0 0.0
        %2108 = vmatprep.subr.mxu0 0.0
        %2109 = vmatpush1.msra.mxu0 0.0
        %2110 = vmatprep.subr.mxu0 0.0
        %2111 = vmatpush1.msra.mxu0 0.0
        %2112 = vmatprep.subr.mxu0 0.0
        %2113 = vmatpush1.msra.mxu0 0.0
        %2114 = vmatprep.subr.mxu0 0.0
        %2115 = vmatpush1.msra.mxu0 0.0
        %2116 = vmatprep.subr.mxu0 0.0
        %2117 = vmatpush1.msra.mxu0 0.0
        %2118 = vmatprep.subr.mxu0 0.0
        %2119 = vmatpush1.msra.mxu0 0.0
        %2120 = vmatprep.subr.mxu0 0.0
        %2121 = vmatpush1.msra.mxu0 0.0
        %2122 = vmatprep.subr.mxu0 0.0
        %2123 = vmatpush1.msra.mxu0 0.0
        %2124 = vmatprep.mubr.f32.mxu0 0.0
        %2125 = vmatmul.mubr.f32.gmra.mrb[0].mxu0 %v1984
        %v2126 = vpop.f32.mrb[0].mxu0
        %v2127 = vadd.f32 0.0, %v2126
        %v2128 = vpop.f32.mrb[0].mxu0
        %v2129 = vadd.f32 0.0, %v2128
        %2130 = vdwg.mxu0
        %v2135 = vcombine.low %v2056, %v2058
        %v2136 = vcombine.low %v2127, %v2129
        %v2138 = vunpack.c.l.s4 1983009808
        %v2139 = vunpack.c.0.s8 %v2138
        %v2140 = vlaneseq
        %v2141 = vshrl.u32 %v2140, 7
        %v2142 = vsub.s32 %v2139, %v2141
        %v2143 = vrot.slane %v2135, %v2142
        %v2145 = vunpack.c.l.s4 1983009808
        %v2146 = vunpack.c.0.s8 %v2145
        %v2147 = vlaneseq
        %v2148 = vshrl.u32 %v2147, 7
        %v2149 = vsub.s32 %v2146, %v2148
        %v2150 = vrot.slane %v2136, %v2149
        %v2151 = vcombine.low %v2143, %v2150
        %v2153 = vadd.f32 %v1988, %v2151
        %v2154 = vtanh.pop %v2153
        %v2155 = vadd.f32 %v2154, 1.0
        %v2156 = vmul.f32 %v2155, 0.5
        %v2158 = vrot.slane %v2154, 2
        %v2160 = vadd.f32 %v2158, 1.0
        %v2161 = vmul.f32 %v2160, 0.5
        %v2162 = vrot.slane %v2154, 6
        %v2164 = vadd.f32 %v2162, 1.0
        %v2165 = vmul.f32 %v2164, 0.5
        %v2166 = vmul.f32 %v2161, %v1982
        %v2167 = vrot.slane %v2154, 4
        %v2169 = vmul.f32 %v2156, %v2167
        %v2170 = vadd.f32 %v2166, %v2169
        %v2171 = vtanh.pop %v2170
        %v2172 = vmul.f32 %v2165, %v2171
        %s2173 = scalar_lea.vmem [#allocation3], 4
        %2174 = vst [vmem:[%s2173] sm:$0x3] %v2172
        %s2175 = scalar_lea.vmem [#allocation2], 24
        %v2176 = vld [vmem:[%s2175] sm:$0xff]
        %2177 = vmatprep.subr.mxu0 %v388
        %2178 = vmatpush1.msra.mxu0 %v387
        %2179 = vmatprep.subr.mxu0 %v392
        %2180 = vmatpush1.msra.mxu0 %v391
        %2181 = vmatprep.subr.mxu0 %v396
        %2182 = vmatpush1.msra.mxu0 %v395
        %2183 = vmatprep.subr.mxu0 %v400
        %2184 = vmatpush1.msra.mxu0 %v399
        %2185 = vmatprep.subr.mxu0 %v404
        %2186 = vmatpush1.msra.mxu0 %v403
        %2187 = vmatprep.subr.mxu0 %v408
        %2188 = vmatpush1.msra.mxu0 %v407
        %2189 = vmatprep.subr.mxu0 %v412
        %2190 = vmatpush1.msra.mxu0 %v411
        %2191 = vmatprep.subr.mxu0 %v416
        %2192 = vmatpush1.msra.mxu0 %v415
        %2193 = vmatprep.subr.mxu0 %v420
        %2194 = vmatpush1.msra.mxu0 %v419
        %2195 = vmatprep.subr.mxu0 %v424
        %2196 = vmatpush1.msra.mxu0 %v423
        %2197 = vmatprep.subr.mxu0 %v428
        %2198 = vmatpush1.msra.mxu0 %v427
        %2199 = vmatprep.subr.mxu0 %v432
        %2200 = vmatpush1.msra.mxu0 %v431
        %2201 = vmatprep.subr.mxu0 %v436
        %2202 = vmatpush1.msra.mxu0 %v435
        %2203 = vmatprep.subr.mxu0 %v440
        %2204 = vmatpush1.msra.mxu0 %v439
        %2205 = vmatprep.subr.mxu0 %v444
        %2206 = vmatpush1.msra.mxu0 %v443
        %2207 = vmatprep.subr.mxu0 %v448
        %2208 = vmatpush1.msra.mxu0 %v447
        %2209 = vmatprep.subr.mxu0 0.0
        %2210 = vmatpush1.msra.mxu0 0.0
        %2211 = vmatprep.subr.mxu0 0.0
        %2212 = vmatpush1.msra.mxu0 0.0
        %2213 = vmatprep.subr.mxu0 0.0
        %2214 = vmatpush1.msra.mxu0 0.0
        %2215 = vmatprep.subr.mxu0 0.0
        %2216 = vmatpush1.msra.mxu0 0.0
        %2217 = vmatprep.subr.mxu0 0.0
        %2218 = vmatpush1.msra.mxu0 0.0
        %2219 = vmatprep.subr.mxu0 0.0
        %2220 = vmatpush1.msra.mxu0 0.0
        %2221 = vmatprep.subr.mxu0 0.0
        %2222 = vmatpush1.msra.mxu0 0.0
        %2223 = vmatprep.subr.mxu0 0.0
        %2224 = vmatpush1.msra.mxu0 0.0
        %2225 = vmatprep.subr.mxu0 0.0
        %2226 = vmatpush1.msra.mxu0 0.0
        %2227 = vmatprep.subr.mxu0 0.0
        %2228 = vmatpush1.msra.mxu0 0.0
        %2229 = vmatprep.subr.mxu0 0.0
        %2230 = vmatpush1.msra.mxu0 0.0
        %2231 = vmatprep.subr.mxu0 0.0
        %2232 = vmatpush1.msra.mxu0 0.0
        %2233 = vmatprep.subr.mxu0 0.0
        %2234 = vmatpush1.msra.mxu0 0.0
        %2235 = vmatprep.subr.mxu0 0.0
        %2236 = vmatpush1.msra.mxu0 0.0
        %2237 = vmatprep.subr.mxu0 0.0
        %2238 = vmatpush1.msra.mxu0 0.0
        %2239 = vmatprep.subr.mxu0 0.0
        %2240 = vmatpush1.msra.mxu0 0.0
        %2241 = vmatprep.mubr.f32.mxu0 0.0
        %2242 = vmatmul.mubr.f32.gmra.mrb[0].mxu0 %v2172
        %v2243 = vpop.f32.mrb[0].mxu0
        %v2244 = vadd.f32 0.0, %v2243
        %v2245 = vpop.f32.mrb[0].mxu0
        %v2246 = vadd.f32 0.0, %v2245
        %2247 = vdwg.mxu0
        %2248 = vmatprep.subr.mxu0 %v390
        %2249 = vmatpush1.msra.mxu0 %v389
        %2250 = vmatprep.subr.mxu0 %v394
        %2251 = vmatpush1.msra.mxu0 %v393
        %2252 = vmatprep.subr.mxu0 %v398
        %2253 = vmatpush1.msra.mxu0 %v397
        %2254 = vmatprep.subr.mxu0 %v402
        %2255 = vmatpush1.msra.mxu0 %v401
        %2256 = vmatprep.subr.mxu0 %v406
        %2257 = vmatpush1.msra.mxu0 %v405
        %2258 = vmatprep.subr.mxu0 %v410
        %2259 = vmatpush1.msra.mxu0 %v409
        %2260 = vmatprep.subr.mxu0 %v414
        %2261 = vmatpush1.msra.mxu0 %v413
        %2262 = vmatprep.subr.mxu0 %v418
        %2263 = vmatpush1.msra.mxu0 %v417
        %2264 = vmatprep.subr.mxu0 %v422
        %2265 = vmatpush1.msra.mxu0 %v421
        %2266 = vmatprep.subr.mxu0 %v426
        %2267 = vmatpush1.msra.mxu0 %v425
        %2268 = vmatprep.subr.mxu0 %v430
        %2269 = vmatpush1.msra.mxu0 %v429
        %2270 = vmatprep.subr.mxu0 %v434
        %2271 = vmatpush1.msra.mxu0 %v433
        %2272 = vmatprep.subr.mxu0 %v438
        %2273 = vmatpush1.msra.mxu0 %v437
        %2274 = vmatprep.subr.mxu0 %v442
        %2275 = vmatpush1.msra.mxu0 %v441
        %2276 = vmatprep.subr.mxu0 %v446
        %2277 = vmatpush1.msra.mxu0 %v445
        %2278 = vmatprep.subr.mxu0 %v450
        %2279 = vmatpush1.msra.mxu0 %v449
        %2280 = vmatprep.subr.mxu0 0.0
        %2281 = vmatpush1.msra.mxu0 0.0
        %2282 = vmatprep.subr.mxu0 0.0
        %2283 = vmatpush1.msra.mxu0 0.0
        %2284 = vmatprep.subr.mxu0 0.0
        %2285 = vmatpush1.msra.mxu0 0.0
        %2286 = vmatprep.subr.mxu0 0.0
        %2287 = vmatpush1.msra.mxu0 0.0
        %2288 = vmatprep.subr.mxu0 0.0
        %2289 = vmatpush1.msra.mxu0 0.0
        %2290 = vmatprep.subr.mxu0 0.0
        %2291 = vmatpush1.msra.mxu0 0.0
        %2292 = vmatprep.subr.mxu0 0.0
        %2293 = vmatpush1.msra.mxu0 0.0
        %2294 = vmatprep.subr.mxu0 0.0
        %2295 = vmatpush1.msra.mxu0 0.0
        %2296 = vmatprep.subr.mxu0 0.0
        %2297 = vmatpush1.msra.mxu0 0.0
        %2298 = vmatprep.subr.mxu0 0.0
        %2299 = vmatpush1.msra.mxu0 0.0
        %2300 = vmatprep.subr.mxu0 0.0
        %2301 = vmatpush1.msra.mxu0 0.0
        %2302 = vmatprep.subr.mxu0 0.0
        %2303 = vmatpush1.msra.mxu0 0.0
        %2304 = vmatprep.subr.mxu0 0.0
        %2305 = vmatpush1.msra.mxu0 0.0
        %2306 = vmatprep.subr.mxu0 0.0
        %2307 = vmatpush1.msra.mxu0 0.0
        %2308 = vmatprep.subr.mxu0 0.0
        %2309 = vmatpush1.msra.mxu0 0.0
        %2310 = vmatprep.subr.mxu0 0.0
        %2311 = vmatpush1.msra.mxu0 0.0
        %2312 = vmatprep.mubr.f32.mxu0 0.0
        %2313 = vmatmul.mubr.f32.gmra.mrb[0].mxu0 %v2172
        %v2314 = vpop.f32.mrb[0].mxu0
        %v2315 = vadd.f32 0.0, %v2314
        %v2316 = vpop.f32.mrb[0].mxu0
        %v2317 = vadd.f32 0.0, %v2316
        %2318 = vdwg.mxu0
        %v2323 = vcombine.low %v2244, %v2246
        %v2324 = vcombine.low %v2315, %v2317
        %v2326 = vunpack.c.l.s4 1983009808
        %v2327 = vunpack.c.0.s8 %v2326
        %v2328 = vlaneseq
        %v2329 = vshrl.u32 %v2328, 7
        %v2330 = vsub.s32 %v2327, %v2329
        %v2331 = vrot.slane %v2323, %v2330
        %v2333 = vunpack.c.l.s4 1983009808
        %v2334 = vunpack.c.0.s8 %v2333
        %v2335 = vlaneseq
        %v2336 = vshrl.u32 %v2335, 7
        %v2337 = vsub.s32 %v2334, %v2336
        %v2338 = vrot.slane %v2324, %v2337
        %v2339 = vcombine.low %v2331, %v2338
        %v2341 = vadd.f32 %v2176, %v2339
        %v2342 = vtanh.pop %v2341
        %v2343 = vadd.f32 %v2342, 1.0
        %v2344 = vmul.f32 %v2343, 0.5
        %v2346 = vrot.slane %v2342, 2
        %v2348 = vadd.f32 %v2346, 1.0
        %v2349 = vmul.f32 %v2348, 0.5
        %v2350 = vrot.slane %v2342, 6
        %v2352 = vadd.f32 %v2350, 1.0
        %v2353 = vmul.f32 %v2352, 0.5
        %v2354 = vmul.f32 %v2349, %v2170
        %v2355 = vrot.slane %v2342, 4
        %v2357 = vmul.f32 %v2344, %v2355
        %v2358 = vadd.f32 %v2354, %v2357
        %v2359 = vtanh.pop %v2358
        %v2360 = vmul.f32 %v2353, %v2359
        %s2361 = scalar_lea.vmem [#allocation3], 6
        %2362 = vst [vmem:[%s2361] sm:$0x3] %v2360
        %s2363 = scalar_lea.vmem [#allocation2], 32
        %v2364 = vld [vmem:[%s2363] sm:$0xff]
        %2365 = vmatprep.subr.mxu0 %v388
        %2366 = vmatpush1.msra.mxu0 %v387
        %2367 = vmatprep.subr.mxu0 %v392
        %2368 = vmatpush1.msra.mxu0 %v391
        %2369 = vmatprep.subr.mxu0 %v396
        %2370 = vmatpush1.msra.mxu0 %v395
        %2371 = vmatprep.subr.mxu0 %v400
        %2372 = vmatpush1.msra.mxu0 %v399
        %2373 = vmatprep.subr.mxu0 %v404
        %2374 = vmatpush1.msra.mxu0 %v403
        %2375 = vmatprep.subr.mxu0 %v408
        %2376 = vmatpush1.msra.mxu0 %v407
        %2377 = vmatprep.subr.mxu0 %v412
        %2378 = vmatpush1.msra.mxu0 %v411
        %2379 = vmatprep.subr.mxu0 %v416
        %2380 = vmatpush1.msra.mxu0 %v415
        %2381 = vmatprep.subr.mxu0 %v420
        %2382 = vmatpush1.msra.mxu0 %v419
        %2383 = vmatprep.subr.mxu0 %v424
        %2384 = vmatpush1.msra.mxu0 %v423
        %2385 = vmatprep.subr.mxu0 %v428
        %2386 = vmatpush1.msra.mxu0 %v427
        %2387 = vmatprep.subr.mxu0 %v432
        %2388 = vmatpush1.msra.mxu0 %v431
        %2389 = vmatprep.subr.mxu0 %v436
        %2390 = vmatpush1.msra.mxu0 %v435
        %2391 = vmatprep.subr.mxu0 %v440
        %2392 = vmatpush1.msra.mxu0 %v439
        %2393 = vmatprep.subr.mxu0 %v444
        %2394 = vmatpush1.msra.mxu0 %v443
        %2395 = vmatprep.subr.mxu0 %v448
        %2396 = vmatpush1.msra.mxu0 %v447
        %2397 = vmatprep.subr.mxu0 0.0
        %2398 = vmatpush1.msra.mxu0 0.0
        %2399 = vmatprep.subr.mxu0 0.0
        %2400 = vmatpush1.msra.mxu0 0.0
        %2401 = vmatprep.subr.mxu0 0.0
        %2402 = vmatpush1.msra.mxu0 0.0
        %2403 = vmatprep.subr.mxu0 0.0
        %2404 = vmatpush1.msra.mxu0 0.0
        %2405 = vmatprep.subr.mxu0 0.0
        %2406 = vmatpush1.msra.mxu0 0.0
        %2407 = vmatprep.subr.mxu0 0.0
        %2408 = vmatpush1.msra.mxu0 0.0
        %2409 = vmatprep.subr.mxu0 0.0
        %2410 = vmatpush1.msra.mxu0 0.0
        %2411 = vmatprep.subr.mxu0 0.0
        %2412 = vmatpush1.msra.mxu0 0.0
        %2413 = vmatprep.subr.mxu0 0.0
        %2414 = vmatpush1.msra.mxu0 0.0
        %2415 = vmatprep.subr.mxu0 0.0
        %2416 = vmatpush1.msra.mxu0 0.0
        %2417 = vmatprep.subr.mxu0 0.0
        %2418 = vmatpush1.msra.mxu0 0.0
        %2419 = vmatprep.subr.mxu0 0.0
        %2420 = vmatpush1.msra.mxu0 0.0
        %2421 = vmatprep.subr.mxu0 0.0
        %2422 = vmatpush1.msra.mxu0 0.0
        %2423 = vmatprep.subr.mxu0 0.0
        %2424 = vmatpush1.msra.mxu0 0.0
        %2425 = vmatprep.subr.mxu0 0.0
        %2426 = vmatpush1.msra.mxu0 0.0
        %2427 = vmatprep.subr.mxu0 0.0
        %2428 = vmatpush1.msra.mxu0 0.0
        %2429 = vmatprep.mubr.f32.mxu0 0.0
        %2430 = vmatmul.mubr.f32.gmra.mrb[0].mxu0 %v2360
        %v2431 = vpop.f32.mrb[0].mxu0
        %v2432 = vadd.f32 0.0, %v2431
        %v2433 = vpop.f32.mrb[0].mxu0
        %v2434 = vadd.f32 0.0, %v2433
        %2435 = vdwg.mxu0
        %2436 = vmatprep.subr.mxu0 %v390
        %2437 = vmatpush1.msra.mxu0 %v389
        %2438 = vmatprep.subr.mxu0 %v394
        %2439 = vmatpush1.msra.mxu0 %v393
        %2440 = vmatprep.subr.mxu0 %v398
        %2441 = vmatpush1.msra.mxu0 %v397
        %2442 = vmatprep.subr.mxu0 %v402
        %2443 = vmatpush1.msra.mxu0 %v401
        %2444 = vmatprep.subr.mxu0 %v406
        %2445 = vmatpush1.msra.mxu0 %v405
        %2446 = vmatprep.subr.mxu0 %v410
        %2447 = vmatpush1.msra.mxu0 %v409
        %2448 = vmatprep.subr.mxu0 %v414
        %2449 = vmatpush1.msra.mxu0 %v413
        %2450 = vmatprep.subr.mxu0 %v418
        %2451 = vmatpush1.msra.mxu0 %v417
        %2452 = vmatprep.subr.mxu0 %v422
        %2453 = vmatpush1.msra.mxu0 %v421
        %2454 = vmatprep.subr.mxu0 %v426
        %2455 = vmatpush1.msra.mxu0 %v425
        %2456 = vmatprep.subr.mxu0 %v430
        %2457 = vmatpush1.msra.mxu0 %v429
        %2458 = vmatprep.subr.mxu0 %v434
        %2459 = vmatpush1.msra.mxu0 %v433
        %2460 = vmatprep.subr.mxu0 %v438
        %2461 = vmatpush1.msra.mxu0 %v437
        %2462 = vmatprep.subr.mxu0 %v442
        %2463 = vmatpush1.msra.mxu0 %v441
        %2464 = vmatprep.subr.mxu0 %v446
        %2465 = vmatpush1.msra.mxu0 %v445
        %2466 = vmatprep.subr.mxu0 %v450
        %2467 = vmatpush1.msra.mxu0 %v449
        %2468 = vmatprep.subr.mxu0 0.0
        %2469 = vmatpush1.msra.mxu0 0.0
        %2470 = vmatprep.subr.mxu0 0.0
        %2471 = vmatpush1.msra.mxu0 0.0
        %2472 = vmatprep.subr.mxu0 0.0
        %2473 = vmatpush1.msra.mxu0 0.0
        %2474 = vmatprep.subr.mxu0 0.0
        %2475 = vmatpush1.msra.mxu0 0.0
        %2476 = vmatprep.subr.mxu0 0.0
        %2477 = vmatpush1.msra.mxu0 0.0
        %2478 = vmatprep.subr.mxu0 0.0
        %2479 = vmatpush1.msra.mxu0 0.0
        %2480 = vmatprep.subr.mxu0 0.0
        %2481 = vmatpush1.msra.mxu0 0.0
        %2482 = vmatprep.subr.mxu0 0.0
        %2483 = vmatpush1.msra.mxu0 0.0
        %2484 = vmatprep.subr.mxu0 0.0
        %2485 = vmatpush1.msra.mxu0 0.0
        %2486 = vmatprep.subr.mxu0 0.0
        %2487 = vmatpush1.msra.mxu0 0.0
        %2488 = vmatprep.subr.mxu0 0.0
        %2489 = vmatpush1.msra.mxu0 0.0
        %2490 = vmatprep.subr.mxu0 0.0
        %2491 = vmatpush1.msra.mxu0 0.0
        %2492 = vmatprep.subr.mxu0 0.0
        %2493 = vmatpush1.msra.mxu0 0.0
        %2494 = vmatprep.subr.mxu0 0.0
        %2495 = vmatpush1.msra.mxu0 0.0
        %2496 = vmatprep.subr.mxu0 0.0
        %2497 = vmatpush1.msra.mxu0 0.0
        %2498 = vmatprep.subr.mxu0 0.0
        %2499 = vmatpush1.msra.mxu0 0.0
        %2500 = vmatprep.mubr.f32.mxu0 0.0
        %2501 = vmatmul.mubr.f32.gmra.mrb[0].mxu0 %v2360
        %v2502 = vpop.f32.mrb[0].mxu0
        %v2503 = vadd.f32 0.0, %v2502
        %v2504 = vpop.f32.mrb[0].mxu0
        %v2505 = vadd.f32 0.0, %v2504
        %2506 = vdwg.mxu0
        %v2511 = vcombine.low %v2432, %v2434
        %v2512 = vcombine.low %v2503, %v2505
        %v2514 = vunpack.c.l.s4 1983009808
        %v2515 = vunpack.c.0.s8 %v2514
        %v2516 = vlaneseq
        %v2517 = vshrl.u32 %v2516, 7
        %v2518 = vsub.s32 %v2515, %v2517
        %v2519 = vrot.slane %v2511, %v2518
        %v2521 = vunpack.c.l.s4 1983009808
        %v2522 = vunpack.c.0.s8 %v2521
        %v2523 = vlaneseq
        %v2524 = vshrl.u32 %v2523, 7
        %v2525 = vsub.s32 %v2522, %v2524
        %v2526 = vrot.slane %v2512, %v2525
        %v2527 = vcombine.low %v2519, %v2526
        %v2529 = vadd.f32 %v2364, %v2527
        %v2530 = vtanh.pop %v2529
        %v2531 = vadd.f32 %v2530, 1.0
        %v2532 = vmul.f32 %v2531, 0.5
        %v2534 = vrot.slane %v2530, 2
        %v2536 = vadd.f32 %v2534, 1.0
        %v2537 = vmul.f32 %v2536, 0.5
        %v2538 = vrot.slane %v2530, 6
        %v2540 = vadd.f32 %v2538, 1.0
        %v2541 = vmul.f32 %v2540, 0.5
        %v2542 = vmul.f32 %v2537, %v2358
        %v2543 = vrot.slane %v2530, 4
        %v2545 = vmul.f32 %v2532, %v2543
        %v2546 = vadd.f32 %v2542, %v2545
        %v2547 = vtanh.pop %v2546
        %v2548 = vmul.f32 %v2541, %v2547
        %s2549 = scalar_lea.vmem [#allocation3], 8
        %2550 = vst [vmem:[%s2549] sm:$0x3] %v2548
        %s2551 = scalar_lea.vmem [#allocation2], 40
        %v2552 = vld [vmem:[%s2551] sm:$0xff]
        %2553 = vmatprep.subr.mxu0 %v388
        %2554 = vmatpush1.msra.mxu0 %v387
        %2555 = vmatprep.subr.mxu0 %v392
        %2556 = vmatpush1.msra.mxu0 %v391
        %2557 = vmatprep.subr.mxu0 %v396
        %2558 = vmatpush1.msra.mxu0 %v395
        %2559 = vmatprep.subr.mxu0 %v400
        %2560 = vmatpush1.msra.mxu0 %v399
        %2561 = vmatprep.subr.mxu0 %v404
        %2562 = vmatpush1.msra.mxu0 %v403
        %2563 = vmatprep.subr.mxu0 %v408
        %2564 = vmatpush1.msra.mxu0 %v407
        %2565 = vmatprep.subr.mxu0 %v412
        %2566 = vmatpush1.msra.mxu0 %v411
        %2567 = vmatprep.subr.mxu0 %v416
        %2568 = vmatpush1.msra.mxu0 %v415
        %2569 = vmatprep.subr.mxu0 %v420
        %2570 = vmatpush1.msra.mxu0 %v419
        %2571 = vmatprep.subr.mxu0 %v424
        %2572 = vmatpush1.msra.mxu0 %v423
        %2573 = vmatprep.subr.mxu0 %v428
        %2574 = vmatpush1.msra.mxu0 %v427
        %2575 = vmatprep.subr.mxu0 %v432
        %2576 = vmatpush1.msra.mxu0 %v431
        %2577 = vmatprep.subr.mxu0 %v436
        %2578 = vmatpush1.msra.mxu0 %v435
        %2579 = vmatprep.subr.mxu0 %v440
        %2580 = vmatpush1.msra.mxu0 %v439
        %2581 = vmatprep.subr.mxu0 %v444
        %2582 = vmatpush1.msra.mxu0 %v443
        %2583 = vmatprep.subr.mxu0 %v448
        %2584 = vmatpush1.msra.mxu0 %v447
        %2585 = vmatprep.subr.mxu0 0.0
        %2586 = vmatpush1.msra.mxu0 0.0
        %2587 = vmatprep.subr.mxu0 0.0
        %2588 = vmatpush1.msra.mxu0 0.0
        %2589 = vmatprep.subr.mxu0 0.0
        %2590 = vmatpush1.msra.mxu0 0.0
        %2591 = vmatprep.subr.mxu0 0.0
        %2592 = vmatpush1.msra.mxu0 0.0
        %2593 = vmatprep.subr.mxu0 0.0
        %2594 = vmatpush1.msra.mxu0 0.0
        %2595 = vmatprep.subr.mxu0 0.0
        %2596 = vmatpush1.msra.mxu0 0.0
        %2597 = vmatprep.subr.mxu0 0.0
        %2598 = vmatpush1.msra.mxu0 0.0
        %2599 = vmatprep.subr.mxu0 0.0
        %2600 = vmatpush1.msra.mxu0 0.0
        %2601 = vmatprep.subr.mxu0 0.0
        %2602 = vmatpush1.msra.mxu0 0.0
        %2603 = vmatprep.subr.mxu0 0.0
        %2604 = vmatpush1.msra.mxu0 0.0
        %2605 = vmatprep.subr.mxu0 0.0
        %2606 = vmatpush1.msra.mxu0 0.0
        %2607 = vmatprep.subr.mxu0 0.0
        %2608 = vmatpush1.msra.mxu0 0.0
        %2609 = vmatprep.subr.mxu0 0.0
        %2610 = vmatpush1.msra.mxu0 0.0
        %2611 = vmatprep.subr.mxu0 0.0
        %2612 = vmatpush1.msra.mxu0 0.0
        %2613 = vmatprep.subr.mxu0 0.0
        %2614 = vmatpush1.msra.mxu0 0.0
        %2615 = vmatprep.subr.mxu0 0.0
        %2616 = vmatpush1.msra.mxu0 0.0
        %2617 = vmatprep.mubr.f32.mxu0 0.0
        %2618 = vmatmul.mubr.f32.gmra.mrb[0].mxu0 %v2548
        %v2619 = vpop.f32.mrb[0].mxu0
        %v2620 = vadd.f32 0.0, %v2619
        %v2621 = vpop.f32.mrb[0].mxu0
        %v2622 = vadd.f32 0.0, %v2621
        %2623 = vdwg.mxu0
        %2624 = vmatprep.subr.mxu0 %v390
        %2625 = vmatpush1.msra.mxu0 %v389
        %2626 = vmatprep.subr.mxu0 %v394
        %2627 = vmatpush1.msra.mxu0 %v393
        %2628 = vmatprep.subr.mxu0 %v398
        %2629 = vmatpush1.msra.mxu0 %v397
        %2630 = vmatprep.subr.mxu0 %v402
        %2631 = vmatpush1.msra.mxu0 %v401
        %2632 = vmatprep.subr.mxu0 %v406
        %2633 = vmatpush1.msra.mxu0 %v405
        %2634 = vmatprep.subr.mxu0 %v410
        %2635 = vmatpush1.msra.mxu0 %v409
        %2636 = vmatprep.subr.mxu0 %v414
        %2637 = vmatpush1.msra.mxu0 %v413
        %2638 = vmatprep.subr.mxu0 %v418
        %2639 = vmatpush1.msra.mxu0 %v417
        %2640 = vmatprep.subr.mxu0 %v422
        %2641 = vmatpush1.msra.mxu0 %v421
        %2642 = vmatprep.subr.mxu0 %v426
        %2643 = vmatpush1.msra.mxu0 %v425
        %2644 = vmatprep.subr.mxu0 %v430
        %2645 = vmatpush1.msra.mxu0 %v429
        %2646 = vmatprep.subr.mxu0 %v434
        %2647 = vmatpush1.msra.mxu0 %v433
        %2648 = vmatprep.subr.mxu0 %v438
        %2649 = vmatpush1.msra.mxu0 %v437
        %2650 = vmatprep.subr.mxu0 %v442
        %2651 = vmatpush1.msra.mxu0 %v441
        %2652 = vmatprep.subr.mxu0 %v446
        %2653 = vmatpush1.msra.mxu0 %v445
        %2654 = vmatprep.subr.mxu0 %v450
        %2655 = vmatpush1.msra.mxu0 %v449
        %2656 = vmatprep.subr.mxu0 0.0
        %2657 = vmatpush1.msra.mxu0 0.0
        %2658 = vmatprep.subr.mxu0 0.0
        %2659 = vmatpush1.msra.mxu0 0.0
        %2660 = vmatprep.subr.mxu0 0.0
        %2661 = vmatpush1.msra.mxu0 0.0
        %2662 = vmatprep.subr.mxu0 0.0
        %2663 = vmatpush1.msra.mxu0 0.0
        %2664 = vmatprep.subr.mxu0 0.0
        %2665 = vmatpush1.msra.mxu0 0.0
        %2666 = vmatprep.subr.mxu0 0.0
        %2667 = vmatpush1.msra.mxu0 0.0
        %2668 = vmatprep.subr.mxu0 0.0
        %2669 = vmatpush1.msra.mxu0 0.0
        %2670 = vmatprep.subr.mxu0 0.0
        %2671 = vmatpush1.msra.mxu0 0.0
        %2672 = vmatprep.subr.mxu0 0.0
        %2673 = vmatpush1.msra.mxu0 0.0
        %2674 = vmatprep.subr.mxu0 0.0
        %2675 = vmatpush1.msra.mxu0 0.0
        %2676 = vmatprep.subr.mxu0 0.0
        %2677 = vmatpush1.msra.mxu0 0.0
        %2678 = vmatprep.subr.mxu0 0.0
        %2679 = vmatpush1.msra.mxu0 0.0
        %2680 = vmatprep.subr.mxu0 0.0
        %2681 = vmatpush1.msra.mxu0 0.0
        %2682 = vmatprep.subr.mxu0 0.0
        %2683 = vmatpush1.msra.mxu0 0.0
        %2684 = vmatprep.subr.mxu0 0.0
        %2685 = vmatpush1.msra.mxu0 0.0
        %2686 = vmatprep.subr.mxu0 0.0
        %2687 = vmatpush1.msra.mxu0 0.0
        %2688 = vmatprep.mubr.f32.mxu0 0.0
        %2689 = vmatmul.mubr.f32.gmra.mrb[0].mxu0 %v2548
        %v2690 = vpop.f32.mrb[0].mxu0
        %v2691 = vadd.f32 0.0, %v2690
        %v2692 = vpop.f32.mrb[0].mxu0
        %v2693 = vadd.f32 0.0, %v2692
        %2694 = vdwg.mxu0
        %v2699 = vcombine.low %v2620, %v2622
        %v2700 = vcombine.low %v2691, %v2693
        %v2702 = vunpack.c.l.s4 1983009808
        %v2703 = vunpack.c.0.s8 %v2702
        %v2704 = vlaneseq
        %v2705 = vshrl.u32 %v2704, 7
        %v2706 = vsub.s32 %v2703, %v2705
        %v2707 = vrot.slane %v2699, %v2706
        %v2709 = vunpack.c.l.s4 1983009808
        %v2710 = vunpack.c.0.s8 %v2709
        %v2711 = vlaneseq
        %v2712 = vshrl.u32 %v2711, 7
        %v2713 = vsub.s32 %v2710, %v2712
        %v2714 = vrot.slane %v2700, %v2713
        %v2715 = vcombine.low %v2707, %v2714
        %v2717 = vadd.f32 %v2552, %v2715
        %v2718 = vtanh.pop %v2717
        %v2719 = vadd.f32 %v2718, 1.0
        %v2720 = vmul.f32 %v2719, 0.5
        %v2722 = vrot.slane %v2718, 2
        %v2724 = vadd.f32 %v2722, 1.0
        %v2725 = vmul.f32 %v2724, 0.5
        %v2726 = vrot.slane %v2718, 6
        %v2728 = vadd.f32 %v2726, 1.0
        %v2729 = vmul.f32 %v2728, 0.5
        %v2730 = vmul.f32 %v2725, %v2546
        %v2731 = vrot.slane %v2718, 4
        %v2733 = vmul.f32 %v2720, %v2731
        %v2734 = vadd.f32 %v2730, %v2733
        %v2735 = vtanh.pop %v2734
        %v2736 = vmul.f32 %v2729, %v2735
        %s2737 = scalar_lea.vmem [#allocation3], 10
        %2738 = vst [vmem:[%s2737] sm:$0x3] %v2736
        %s2739 = scalar_lea.vmem [#allocation2], 48
        %v2740 = vld [vmem:[%s2739] sm:$0xff]
        %2741 = vmatprep.subr.mxu0 %v388
        %2742 = vmatpush1.msra.mxu0 %v387
        %2743 = vmatprep.subr.mxu0 %v392
        %2744 = vmatpush1.msra.mxu0 %v391
        %2745 = vmatprep.subr.mxu0 %v396
        %2746 = vmatpush1.msra.mxu0 %v395
        %2747 = vmatprep.subr.mxu0 %v400
        %2748 = vmatpush1.msra.mxu0 %v399
        %2749 = vmatprep.subr.mxu0 %v404
        %2750 = vmatpush1.msra.mxu0 %v403
        %2751 = vmatprep.subr.mxu0 %v408
        %2752 = vmatpush1.msra.mxu0 %v407
        %2753 = vmatprep.subr.mxu0 %v412
        %2754 = vmatpush1.msra.mxu0 %v411
        %2755 = vmatprep.subr.mxu0 %v416
        %2756 = vmatpush1.msra.mxu0 %v415
        %2757 = vmatprep.subr.mxu0 %v420
        %2758 = vmatpush1.msra.mxu0 %v419
        %2759 = vmatprep.subr.mxu0 %v424
        %2760 = vmatpush1.msra.mxu0 %v423
        %2761 = vmatprep.subr.mxu0 %v428
        %2762 = vmatpush1.msra.mxu0 %v427
        %2763 = vmatprep.subr.mxu0 %v432
        %2764 = vmatpush1.msra.mxu0 %v431
        %2765 = vmatprep.subr.mxu0 %v436
        %2766 = vmatpush1.msra.mxu0 %v435
        %2767 = vmatprep.subr.mxu0 %v440
        %2768 = vmatpush1.msra.mxu0 %v439
        %2769 = vmatprep.subr.mxu0 %v444
        %2770 = vmatpush1.msra.mxu0 %v443
        %2771 = vmatprep.subr.mxu0 %v448
        %2772 = vmatpush1.msra.mxu0 %v447
        %2773 = vmatprep.subr.mxu0 0.0
        %2774 = vmatpush1.msra.mxu0 0.0
        %2775 = vmatprep.subr.mxu0 0.0
        %2776 = vmatpush1.msra.mxu0 0.0
        %2777 = vmatprep.subr.mxu0 0.0
        %2778 = vmatpush1.msra.mxu0 0.0
        %2779 = vmatprep.subr.mxu0 0.0
        %2780 = vmatpush1.msra.mxu0 0.0
        %2781 = vmatprep.subr.mxu0 0.0
        %2782 = vmatpush1.msra.mxu0 0.0
        %2783 = vmatprep.subr.mxu0 0.0
        %2784 = vmatpush1.msra.mxu0 0.0
        %2785 = vmatprep.subr.mxu0 0.0
        %2786 = vmatpush1.msra.mxu0 0.0
        %2787 = vmatprep.subr.mxu0 0.0
        %2788 = vmatpush1.msra.mxu0 0.0
        %2789 = vmatprep.subr.mxu0 0.0
        %2790 = vmatpush1.msra.mxu0 0.0
        %2791 = vmatprep.subr.mxu0 0.0
        %2792 = vmatpush1.msra.mxu0 0.0
        %2793 = vmatprep.subr.mxu0 0.0
        %2794 = vmatpush1.msra.mxu0 0.0
        %2795 = vmatprep.subr.mxu0 0.0
        %2796 = vmatpush1.msra.mxu0 0.0
        %2797 = vmatprep.subr.mxu0 0.0
        %2798 = vmatpush1.msra.mxu0 0.0
        %2799 = vmatprep.subr.mxu0 0.0
        %2800 = vmatpush1.msra.mxu0 0.0
        %2801 = vmatprep.subr.mxu0 0.0
        %2802 = vmatpush1.msra.mxu0 0.0
        %2803 = vmatprep.subr.mxu0 0.0
        %2804 = vmatpush1.msra.mxu0 0.0
        %2805 = vmatprep.mubr.f32.mxu0 0.0
        %2806 = vmatmul.mubr.f32.gmra.mrb[0].mxu0 %v2736
        %v2807 = vpop.f32.mrb[0].mxu0
        %v2808 = vadd.f32 0.0, %v2807
        %v2809 = vpop.f32.mrb[0].mxu0
        %v2810 = vadd.f32 0.0, %v2809
        %2811 = vdwg.mxu0
        %2812 = vmatprep.subr.mxu0 %v390
        %2813 = vmatpush1.msra.mxu0 %v389
        %2814 = vmatprep.subr.mxu0 %v394
        %2815 = vmatpush1.msra.mxu0 %v393
        %2816 = vmatprep.subr.mxu0 %v398
        %2817 = vmatpush1.msra.mxu0 %v397
        %2818 = vmatprep.subr.mxu0 %v402
        %2819 = vmatpush1.msra.mxu0 %v401
        %2820 = vmatprep.subr.mxu0 %v406
        %2821 = vmatpush1.msra.mxu0 %v405
        %2822 = vmatprep.subr.mxu0 %v410
        %2823 = vmatpush1.msra.mxu0 %v409
        %2824 = vmatprep.subr.mxu0 %v414
        %2825 = vmatpush1.msra.mxu0 %v413
        %2826 = vmatprep.subr.mxu0 %v418
        %2827 = vmatpush1.msra.mxu0 %v417
        %2828 = vmatprep.subr.mxu0 %v422
        %2829 = vmatpush1.msra.mxu0 %v421
        %2830 = vmatprep.subr.mxu0 %v426
        %2831 = vmatpush1.msra.mxu0 %v425
        %2832 = vmatprep.subr.mxu0 %v430
        %2833 = vmatpush1.msra.mxu0 %v429
        %2834 = vmatprep.subr.mxu0 %v434
        %2835 = vmatpush1.msra.mxu0 %v433
        %2836 = vmatprep.subr.mxu0 %v438
        %2837 = vmatpush1.msra.mxu0 %v437
        %2838 = vmatprep.subr.mxu0 %v442
        %2839 = vmatpush1.msra.mxu0 %v441
        %2840 = vmatprep.subr.mxu0 %v446
        %2841 = vmatpush1.msra.mxu0 %v445
        %2842 = vmatprep.subr.mxu0 %v450
        %2843 = vmatpush1.msra.mxu0 %v449
        %2844 = vmatprep.subr.mxu0 0.0
        %2845 = vmatpush1.msra.mxu0 0.0
        %2846 = vmatprep.subr.mxu0 0.0
        %2847 = vmatpush1.msra.mxu0 0.0
        %2848 = vmatprep.subr.mxu0 0.0
        %2849 = vmatpush1.msra.mxu0 0.0
        %2850 = vmatprep.subr.mxu0 0.0
        %2851 = vmatpush1.msra.mxu0 0.0
        %2852 = vmatprep.subr.mxu0 0.0
        %2853 = vmatpush1.msra.mxu0 0.0
        %2854 = vmatprep.subr.mxu0 0.0
        %2855 = vmatpush1.msra.mxu0 0.0
        %2856 = vmatprep.subr.mxu0 0.0
        %2857 = vmatpush1.msra.mxu0 0.0
        %2858 = vmatprep.subr.mxu0 0.0
        %2859 = vmatpush1.msra.mxu0 0.0
        %2860 = vmatprep.subr.mxu0 0.0
        %2861 = vmatpush1.msra.mxu0 0.0
        %2862 = vmatprep.subr.mxu0 0.0
        %2863 = vmatpush1.msra.mxu0 0.0
        %2864 = vmatprep.subr.mxu0 0.0
        %2865 = vmatpush1.msra.mxu0 0.0
        %2866 = vmatprep.subr.mxu0 0.0
        %2867 = vmatpush1.msra.mxu0 0.0
        %2868 = vmatprep.subr.mxu0 0.0
        %2869 = vmatpush1.msra.mxu0 0.0
        %2870 = vmatprep.subr.mxu0 0.0
        %2871 = vmatpush1.msra.mxu0 0.0
        %2872 = vmatprep.subr.mxu0 0.0
        %2873 = vmatpush1.msra.mxu0 0.0
        %2874 = vmatprep.subr.mxu0 0.0
        %2875 = vmatpush1.msra.mxu0 0.0
        %2876 = vmatprep.mubr.f32.mxu0 0.0
        %2877 = vmatmul.mubr.f32.gmra.mrb[0].mxu0 %v2736
        %v2878 = vpop.f32.mrb[0].mxu0
        %v2879 = vadd.f32 0.0, %v2878
        %v2880 = vpop.f32.mrb[0].mxu0
        %v2881 = vadd.f32 0.0, %v2880
        %2882 = vdwg.mxu0
        %v2887 = vcombine.low %v2808, %v2810
        %v2888 = vcombine.low %v2879, %v2881
        %v2890 = vunpack.c.l.s4 1983009808
        %v2891 = vunpack.c.0.s8 %v2890
        %v2892 = vlaneseq
        %v2893 = vshrl.u32 %v2892, 7
        %v2894 = vsub.s32 %v2891, %v2893
        %v2895 = vrot.slane %v2887, %v2894
        %v2897 = vunpack.c.l.s4 1983009808
        %v2898 = vunpack.c.0.s8 %v2897
        %v2899 = vlaneseq
        %v2900 = vshrl.u32 %v2899, 7
        %v2901 = vsub.s32 %v2898, %v2900
        %v2902 = vrot.slane %v2888, %v2901
        %v2903 = vcombine.low %v2895, %v2902
        %v2905 = vadd.f32 %v2740, %v2903
        %v2906 = vtanh.pop %v2905
        %v2907 = vadd.f32 %v2906, 1.0
        %v2908 = vmul.f32 %v2907, 0.5
        %v2910 = vrot.slane %v2906, 2
        %v2912 = vadd.f32 %v2910, 1.0
        %v2913 = vmul.f32 %v2912, 0.5
        %v2914 = vrot.slane %v2906, 6
        %v2916 = vadd.f32 %v2914, 1.0
        %v2917 = vmul.f32 %v2916, 0.5
        %v2918 = vmul.f32 %v2913, %v2734
        %v2919 = vrot.slane %v2906, 4
        %v2921 = vmul.f32 %v2908, %v2919
        %v2922 = vadd.f32 %v2918, %v2921
        %v2923 = vtanh.pop %v2922
        %v2924 = vmul.f32 %v2917, %v2923
        %s2925 = scalar_lea.vmem [#allocation3], 12
        %2926 = vst [vmem:[%s2925] sm:$0x3] %v2924
        %s2927 = scalar_lea.vmem [#allocation2], 56
        %v2928 = vld [vmem:[%s2927] sm:$0xff]
        %2929 = vmatprep.subr.mxu0 %v388
        %2930 = vmatpush1.msra.mxu0 %v387
        %2931 = vmatprep.subr.mxu0 %v392
        %2932 = vmatpush1.msra.mxu0 %v391
        %2933 = vmatprep.subr.mxu0 %v396
        %2934 = vmatpush1.msra.mxu0 %v395
        %2935 = vmatprep.subr.mxu0 %v400
        %2936 = vmatpush1.msra.mxu0 %v399
        %2937 = vmatprep.subr.mxu0 %v404
        %2938 = vmatpush1.msra.mxu0 %v403
        %2939 = vmatprep.subr.mxu0 %v408
        %2940 = vmatpush1.msra.mxu0 %v407
        %2941 = vmatprep.subr.mxu0 %v412
        %2942 = vmatpush1.msra.mxu0 %v411
        %2943 = vmatprep.subr.mxu0 %v416
        %2944 = vmatpush1.msra.mxu0 %v415
        %2945 = vmatprep.subr.mxu0 %v420
        %2946 = vmatpush1.msra.mxu0 %v419
        %2947 = vmatprep.subr.mxu0 %v424
        %2948 = vmatpush1.msra.mxu0 %v423
        %2949 = vmatprep.subr.mxu0 %v428
        %2950 = vmatpush1.msra.mxu0 %v427
        %2951 = vmatprep.subr.mxu0 %v432
        %2952 = vmatpush1.msra.mxu0 %v431
        %2953 = vmatprep.subr.mxu0 %v436
        %2954 = vmatpush1.msra.mxu0 %v435
        %2955 = vmatprep.subr.mxu0 %v440
        %2956 = vmatpush1.msra.mxu0 %v439
        %2957 = vmatprep.subr.mxu0 %v444
        %2958 = vmatpush1.msra.mxu0 %v443
        %2959 = vmatprep.subr.mxu0 %v448
        %2960 = vmatpush1.msra.mxu0 %v447
        %2961 = vmatprep.subr.mxu0 0.0
        %2962 = vmatpush1.msra.mxu0 0.0
        %2963 = vmatprep.subr.mxu0 0.0
        %2964 = vmatpush1.msra.mxu0 0.0
        %2965 = vmatprep.subr.mxu0 0.0
        %2966 = vmatpush1.msra.mxu0 0.0
        %2967 = vmatprep.subr.mxu0 0.0
        %2968 = vmatpush1.msra.mxu0 0.0
        %2969 = vmatprep.subr.mxu0 0.0
        %2970 = vmatpush1.msra.mxu0 0.0
        %2971 = vmatprep.subr.mxu0 0.0
        %2972 = vmatpush1.msra.mxu0 0.0
        %2973 = vmatprep.subr.mxu0 0.0
        %2974 = vmatpush1.msra.mxu0 0.0
        %2975 = vmatprep.subr.mxu0 0.0
        %2976 = vmatpush1.msra.mxu0 0.0
        %2977 = vmatprep.subr.mxu0 0.0
        %2978 = vmatpush1.msra.mxu0 0.0
        %2979 = vmatprep.subr.mxu0 0.0
        %2980 = vmatpush1.msra.mxu0 0.0
        %2981 = vmatprep.subr.mxu0 0.0
        %2982 = vmatpush1.msra.mxu0 0.0
        %2983 = vmatprep.subr.mxu0 0.0
        %2984 = vmatpush1.msra.mxu0 0.0
        %2985 = vmatprep.subr.mxu0 0.0
        %2986 = vmatpush1.msra.mxu0 0.0
        %2987 = vmatprep.subr.mxu0 0.0
        %2988 = vmatpush1.msra.mxu0 0.0
        %2989 = vmatprep.subr.mxu0 0.0
        %2990 = vmatpush1.msra.mxu0 0.0
        %2991 = vmatprep.subr.mxu0 0.0
        %2992 = vmatpush1.msra.mxu0 0.0
        %2993 = vmatprep.mubr.f32.mxu0 0.0
        %2994 = vmatmul.mubr.f32.gmra.mrb[0].mxu0 %v2924
        %v2995 = vpop.f32.mrb[0].mxu0
        %v2996 = vadd.f32 0.0, %v2995
        %v2997 = vpop.f32.mrb[0].mxu0
        %v2998 = vadd.f32 0.0, %v2997
        %2999 = vdwg.mxu0
        %3000 = vmatprep.subr.mxu0 %v390
        %3001 = vmatpush1.msra.mxu0 %v389
        %3002 = vmatprep.subr.mxu0 %v394
        %3003 = vmatpush1.msra.mxu0 %v393
        %3004 = vmatprep.subr.mxu0 %v398
        %3005 = vmatpush1.msra.mxu0 %v397
        %3006 = vmatprep.subr.mxu0 %v402
        %3007 = vmatpush1.msra.mxu0 %v401
        %3008 = vmatprep.subr.mxu0 %v406
        %3009 = vmatpush1.msra.mxu0 %v405
        %3010 = vmatprep.subr.mxu0 %v410
        %3011 = vmatpush1.msra.mxu0 %v409
        %3012 = vmatprep.subr.mxu0 %v414
        %3013 = vmatpush1.msra.mxu0 %v413
        %3014 = vmatprep.subr.mxu0 %v418
        %3015 = vmatpush1.msra.mxu0 %v417
        %3016 = vmatprep.subr.mxu0 %v422
        %3017 = vmatpush1.msra.mxu0 %v421
        %3018 = vmatprep.subr.mxu0 %v426
        %3019 = vmatpush1.msra.mxu0 %v425
        %3020 = vmatprep.subr.mxu0 %v430
        %3021 = vmatpush1.msra.mxu0 %v429
        %3022 = vmatprep.subr.mxu0 %v434
        %3023 = vmatpush1.msra.mxu0 %v433
        %3024 = vmatprep.subr.mxu0 %v438
        %3025 = vmatpush1.msra.mxu0 %v437
        %3026 = vmatprep.subr.mxu0 %v442
        %3027 = vmatpush1.msra.mxu0 %v441
        %3028 = vmatprep.subr.mxu0 %v446
        %3029 = vmatpush1.msra.mxu0 %v445
        %3030 = vmatprep.subr.mxu0 %v450
        %3031 = vmatpush1.msra.mxu0 %v449
        %3032 = vmatprep.subr.mxu0 0.0
        %3033 = vmatpush1.msra.mxu0 0.0
        %3034 = vmatprep.subr.mxu0 0.0
        %3035 = vmatpush1.msra.mxu0 0.0
        %3036 = vmatprep.subr.mxu0 0.0
        %3037 = vmatpush1.msra.mxu0 0.0
        %3038 = vmatprep.subr.mxu0 0.0
        %3039 = vmatpush1.msra.mxu0 0.0
        %3040 = vmatprep.subr.mxu0 0.0
        %3041 = vmatpush1.msra.mxu0 0.0
        %3042 = vmatprep.subr.mxu0 0.0
        %3043 = vmatpush1.msra.mxu0 0.0
        %3044 = vmatprep.subr.mxu0 0.0
        %3045 = vmatpush1.msra.mxu0 0.0
        %3046 = vmatprep.subr.mxu0 0.0
        %3047 = vmatpush1.msra.mxu0 0.0
        %3048 = vmatprep.subr.mxu0 0.0
        %3049 = vmatpush1.msra.mxu0 0.0
        %3050 = vmatprep.subr.mxu0 0.0
        %3051 = vmatpush1.msra.mxu0 0.0
        %3052 = vmatprep.subr.mxu0 0.0
        %3053 = vmatpush1.msra.mxu0 0.0
        %3054 = vmatprep.subr.mxu0 0.0
        %3055 = vmatpush1.msra.mxu0 0.0
        %3056 = vmatprep.subr.mxu0 0.0
        %3057 = vmatpush1.msra.mxu0 0.0
        %3058 = vmatprep.subr.mxu0 0.0
        %3059 = vmatpush1.msra.mxu0 0.0
        %3060 = vmatprep.subr.mxu0 0.0
        %3061 = vmatpush1.msra.mxu0 0.0
        %3062 = vmatprep.subr.mxu0 0.0
        %3063 = vmatpush1.msra.mxu0 0.0
        %3064 = vmatprep.mubr.f32.mxu0 0.0
        %3065 = vmatmul.mubr.f32.gmra.mrb[0].mxu0 %v2924
        %v3066 = vpop.f32.mrb[0].mxu0
        %v3067 = vadd.f32 0.0, %v3066
        %v3068 = vpop.f32.mrb[0].mxu0
        %v3069 = vadd.f32 0.0, %v3068
        %3070 = vdwg.mxu0
        %v3075 = vcombine.low %v2996, %v2998
        %v3076 = vcombine.low %v3067, %v3069
        %v3078 = vunpack.c.l.s4 1983009808
        %v3079 = vunpack.c.0.s8 %v3078
        %v3080 = vlaneseq
        %v3081 = vshrl.u32 %v3080, 7
        %v3082 = vsub.s32 %v3079, %v3081
        %v3083 = vrot.slane %v3075, %v3082
        %v3085 = vunpack.c.l.s4 1983009808
        %v3086 = vunpack.c.0.s8 %v3085
        %v3087 = vlaneseq
        %v3088 = vshrl.u32 %v3087, 7
        %v3089 = vsub.s32 %v3086, %v3088
        %v3090 = vrot.slane %v3076, %v3089
        %v3091 = vcombine.low %v3083, %v3090
        %v3093 = vadd.f32 %v2928, %v3091
        %v3094 = vtanh.pop %v3093
        %v3095 = vadd.f32 %v3094, 1.0
        %v3096 = vmul.f32 %v3095, 0.5
        %v3098 = vrot.slane %v3094, 2
        %v3100 = vadd.f32 %v3098, 1.0
        %v3101 = vmul.f32 %v3100, 0.5
        %v3102 = vrot.slane %v3094, 6
        %v3104 = vadd.f32 %v3102, 1.0
        %v3105 = vmul.f32 %v3104, 0.5
        %v3106 = vmul.f32 %v3101, %v2922
        %v3107 = vrot.slane %v3094, 4
        %v3109 = vmul.f32 %v3096, %v3107
        %v3110 = vadd.f32 %v3106, %v3109
        %v3111 = vtanh.pop %v3110
        %v3112 = vmul.f32 %v3105, %v3111
        %s3113 = scalar_lea.vmem [#allocation3], 14
        %3114 = vst [vmem:[%s3113] sm:$0x3] %v3112
        %3115 = vst [vmem:[%s374] sm:$0x3] %v3112
        %p3116 = scmp.eq.s32.totalorder %s29, 1
        // Predicated region
        $region61: #{lstm_forward.3} parent=43 // pred_check
          %p3117 = pneg %p3116
        $region62: #{lstm_forward.3} parent=43 // pred_check_branch
          %3119 = sbr.rel (%p3117) target = $region64
        $region63: #{lstm_forward.3} parent=43 // pred_region
          %v3120 = vld [vmem:[#allocation3] sm:$0x1]
          %v3121 = vld [vmem:[#allocation3 + $0x2] sm:$0x1]
          %v3122 = vld [vmem:[#allocation3 + $0x4] sm:$0x1]
          %v3123 = vld [vmem:[#allocation3 + $0x6] sm:$0x1]
          %v3124 = vld [vmem:[#allocation3 + $0x8] sm:$0x1]
          %v3125 = vld [vmem:[#allocation3 + $0xa] sm:$0x1]
          %v3126 = vld [vmem:[#allocation3 + $0xc] sm:$0x1]
          %v3127 = vld [vmem:[#allocation3 + $0xe] sm:$0x1]
          %v3136 = vrot.slane %v3121, 7
          %vm3137 = vcmask 1041409
          %v3138 = vsel %vm3137, %v3136, %v3120
          %v3139 = vrot.slane %v3122, 6
          %vm3140 = vcmask 1042434
          %v3141 = vsel %vm3140, %v3139, %v3138
          %v3142 = vrot.slane %v3123, 5
          %vm3143 = vcmask 1043459
          %v3144 = vsel %vm3143, %v3142, %v3141
          %v3145 = vrot.slane %v3124, 4
          %vm3146 = vcmask 1044484
          %v3147 = vsel %vm3146, %v3145, %v3144
          %v3148 = vrot.slane %v3125, 3
          %vm3149 = vcmask 1045509
          %v3150 = vsel %vm3149, %v3148, %v3147
          %v3151 = vrot.slane %v3126, 2
          %vm3152 = vcmask 1046534
          %v3153 = vsel %vm3152, %v3151, %v3150
          %v3154 = vrot.slane %v3127, 1
          %vm3155 = vcmask 1047559
          %v3156 = vsel %vm3155, %v3154, %v3153
          %3158 = vst [vmem:[#allocation9] sm:$0xff] %v3156
          %v3159 = vld [vmem:[#allocation3 + $0x1] sm:$0x1]
          %v3160 = vld [vmem:[#allocation3 + $0x3] sm:$0x1]
          %v3161 = vld [vmem:[#allocation3 + $0x5] sm:$0x1]
          %v3162 = vld [vmem:[#allocation3 + $0x7] sm:$0x1]
          %v3163 = vld [vmem:[#allocation3 + $0x9] sm:$0x1]
          %v3164 = vld [vmem:[#allocation3 + $0xb] sm:$0x1]
          %v3165 = vld [vmem:[#allocation3 + $0xd] sm:$0x1]
          %v3166 = vld [vmem:[#allocation3 + $0xf] sm:$0x1]
          %v3175 = vrot.slane %v3160, 7
          %v3176 = vsel %vm3137, %v3175, %v3159
          %v3177 = vrot.slane %v3161, 6
          %v3178 = vsel %vm3140, %v3177, %v3176
          %v3179 = vrot.slane %v3162, 5
          %v3180 = vsel %vm3143, %v3179, %v3178
          %v3181 = vrot.slane %v3163, 4
          %v3182 = vsel %vm3146, %v3181, %v3180
          %v3183 = vrot.slane %v3164, 3
          %v3184 = vsel %vm3149, %v3183, %v3182
          %v3185 = vrot.slane %v3165, 2
          %v3186 = vsel %vm3152, %v3185, %v3184
          %v3187 = vrot.slane %v3166, 1
          %v3188 = vsel %vm3155, %v3187, %v3186
          %s3190 = scalar_lea.vmem [#allocation9], 8
          %3191 = vst [vmem:[%s3190] sm:$0xff] %v3188
        $region64: #{lstm_forward.3} parent=43 // pred_fallthru
          _
        %s3192 = sand.u32 %s209, 1
        %s3193 = scalar_lea.sflag [#allocation11], %s3192
        %s3194 = sand.u32 %s209, 1
        %s3195 = smul.addr %s3194, 2
        %s3196 = scalar_lea.vmem [#allocation10], %s3195
        // Predicated region
        $region65: #{lstm_forward.3} parent=43 // pred_check
          %p3197 = pneg %p193
        $region66: #{lstm_forward.3} parent=43 // pred_check_branch
          %3199 = sbr.rel (%p3197) target = $region68
        $region67: #{lstm_forward.3} parent=43 // pred_region
          %s3201 = ssub.s32 256, 256
          %3202 = vsyncadd [#allocation6], %s3201
          %s3203 = sshll.u32 [#allocation9], 4
          %s3204 = int_to_ptr.vmem [resolvable:$true] %s3203
          %3209 = dma.vmem_to_hbm [thread:$0]  %s3204, 256, %s6, [#allocation6], 128, 128, 8
        $region68: #{lstm_forward.3} parent=43 // pred_fallthru
          _
        // Predicated region
        $region69: #{lstm_forward.3} parent=43 // pred_check
          %p3210 = pneg %p219
        $region70: #{lstm_forward.3} parent=43 // pred_check_branch
          %3212 = sbr.rel (%p3210) target = $region72
        $region71: #{lstm_forward.3} parent=43 // pred_region
          %s3214 = ssub.s32 32, 32
          %3215 = vsyncadd %s3193, %s3214
          %s3216 = smul.addr %s29, 32
          %s3217 = scalar_lea.hbm %s7, %s3216
          %s3219 = sshll.u32 %s3196, 4
          %s3220 = int_to_ptr.vmem [resolvable:$true] %s3219
          %3222 = dma.vmem_to_hbm [thread:$0]  %s3220, 32, %s3217, %s3193
        $region72: #{lstm_forward.3} parent=43 // pred_fallthru
          _
        // Predicated region
        $region73: #{lstm_forward.3} parent=43 // pred_check
          %p3223 = pneg %p193
        $region74: #{lstm_forward.3} parent=43 // pred_check_branch
          %3225 = sbr.rel (%p3223) target = $region76
        $region75: #{lstm_forward.3} parent=43 // pred_region
          %3226 = dma.done [#allocation6], 256
        $region76: #{lstm_forward.3} parent=43 // pred_fallthru
          _
      $region44: #{lstm_forward.3} parent=5 // pred_fallthru
        _
      %p3227 = scmp.le.s32.totalorder 2, %s24
      // Predicated region
      $region77: #{lstm_forward.3} parent=5 // pred_check
        %p3228 = pneg %p3227
      $region78: #{lstm_forward.3} parent=5 // pred_check_branch
        %3230 = sbr.rel (%p3228) target = $region80
      $region79: #{lstm_forward.3} parent=5 // pred_region
        %s3231 = ssub.s32 %s24, 2
        // Predicated region
        $region81: #{lstm_forward.3} parent=79 // pred_check
          %p3232 = pneg %p225
        $region82: #{lstm_forward.3} parent=79 // pred_check_branch
          %3234 = sbr.rel (%p3232) target = $region84
        $region83: #{lstm_forward.3} parent=79 // pred_region
          %s3235 = sand.u32 %s210, 1
          %s3236 = scalar_lea.sflag [#allocation11], %s3235
          %s3237 = sand.u32 %s210, 1
          %s3238 = smul.addr %s3237, 2
          %s3239 = scalar_lea.vmem [#allocation10], %s3238
          %3240 = dma.done %s3236, 32
        $region84: #{lstm_forward.3} parent=79 // pred_fallthru
          _
      $region80: #{lstm_forward.3} parent=5 // pred_fallthru
        _
    $region6: #{lstm_forward.3} parent=1 // loop_footer
      %s28 = sadd.s32 1, %s24
    $region7: #{lstm_forward.3} parent=1 // loop_footer_branch
      %23 = sbr.rel target = $region3
    $region8: #{lstm_forward.3} parent=1 // loop_exit
      _
    %3241 = vsyncpa [#allocation5], 1
    %s3242 = scalar_lea.sflag [#allocation5], 1
    %3243 = vsyncpa %s3242, 1
    %3244 = vsyncpa [#allocation8], 1
    %s3245 = scalar_lea.sflag [#allocation8], 1
    %3246 = vsyncpa %s3245, 1
    %3247 = vsyncpa [#allocation6], 1
    %s3248 = scalar_lea.sflag [#allocation6], 1
    %3249 = vsyncpa %s3248, 1
    %3250 = vsyncpa [#allocation11], 1
    %s3251 = scalar_lea.sflag [#allocation11], 1
    %3252 = vsyncpa %s3251, 1

</llo_original>
